<compile_context>
chip_gen: v7x
topology: tpu7x:2x2x1
jax: 0.10.0
libtpu: 0.0.40
codegen_flags: <defaults>
</compile_context>

<pallas_src>
import jax
import jax.numpy as jnp
from jax import lax
from jax.experimental import pallas as pl
from jax.experimental.pallas import tpu as pltpu

HIDDEN = 128
BG = 8  # batch-group size (one f32 sublane group)


def _make_kernel(TT, H, C_pad):
    """Per-(batch-group, time-block) kernel: TT timesteps, BG rows."""

    def kernel(x_ref,                                   # (TT, BG, C_pad) bf16
               wih1_ref, b1_ref, whh1_ref, w2_ref, b2_ref,
               wd1_ref, bd1_ref, wd2_ref, bd2_ref, wo_ref, bo_ref,
               out_ref,                                 # (TT, BG, 128) f32
               h1_ref, c1_ref, h2_ref, c2_ref,          # (BG, H) carried state
               g1_ref,                                  # (TT, BG, 4H) gates
               h2acc_ref):                              # (TT, BG, H) h2 slab
        t = pl.program_id(1)

        @pl.when(t == 0)
        def _():
            h1_ref[...] = jnp.zeros_like(h1_ref)
            c1_ref[...] = jnp.zeros_like(c1_ref)
            h2_ref[...] = jnp.zeros_like(h2_ref)
            c2_ref[...] = jnp.zeros_like(c2_ref)

        # Layer-1 input projection for the whole time block, off the serial
        # per-timestep chain: one (TT*BG, C_pad) x (C_pad, 4H) bf16 GEMM.
        xb = x_ref[...].reshape(TT * BG, C_pad)
        g1 = jnp.dot(xb, wih1_ref[...], preferred_element_type=jnp.float32)
        g1_ref[...] = (g1 + b1_ref[...]).reshape(TT, BG, 4 * H)

        # Loop-invariant loads / bias broadcast hoisted out of the unrolled
        # inner loop (JAX does not CSE broadcast_in_dim).
        whh1 = whh1_ref[...]                            # (H, 4H)   bf16
        w2 = w2_ref[...]                                # (2H, 4H)  bf16 [wih2;whh2]
        b2 = jnp.broadcast_to(b2_ref[...], (BG, 4 * H))  # f32

        def gates_to_hc(g, c):
            # PyTorch LSTM gate order: (i, f, g, o).  f32 elementwise math.
            i = jax.nn.sigmoid(g[:, 0 * H:1 * H])
            f = jax.nn.sigmoid(g[:, 1 * H:2 * H])
            gg = jnp.tanh(g[:, 2 * H:3 * H])
            o = jax.nn.sigmoid(g[:, 3 * H:4 * H])
            c_new = f * c + i * gg
            return o * jnp.tanh(c_new), c_new

        def body(tt, carry):
            h1, c1, h2, c2 = carry
            # Layer 1: precomputed input gates + recurrent bf16 dot (f32 acc).
            g1t = g1_ref[tt] + jnp.dot(h1.astype(jnp.bfloat16), whh1,
                                       preferred_element_type=jnp.float32)
            h1, c1 = gates_to_hc(g1t, c1)
            # Layer 2: single K=256 fused matmul (eval mode: no dropout).
            hcat = jnp.concatenate([h1, h2], axis=-1).astype(jnp.bfloat16)
            g2t = jnp.dot(hcat, w2, preferred_element_type=jnp.float32) + b2
            h2, c2 = gates_to_hc(g2t, c2)
            h2acc_ref[tt] = h2
            return h1, c1, h2, c2

        carry0 = (h1_ref[...], c1_ref[...], h2_ref[...], c2_ref[...])
        unroll = True if TT <= 16 else 8
        h1, c1, h2, c2 = lax.fori_loop(0, TT, body, carry0, unroll=unroll)
        h1_ref[...] = h1
        c1_ref[...] = c1
        h2_ref[...] = h2
        c2_ref[...] = c2

        # MLP head batched over the whole time block, lane-dense 128-wide
        # stages, one slab store per block (off the recurrent critical path).
        h2blk = h2acc_ref[...].reshape(TT * BG, H).astype(jnp.bfloat16)
        f1 = jnp.maximum(
            jnp.dot(h2blk, wd1_ref[...], preferred_element_type=jnp.float32)
            + bd1_ref[...], 0.0)
        f2 = jnp.maximum(
            jnp.dot(f1.astype(jnp.bfloat16), wd2_ref[...],
                    preferred_element_type=jnp.float32)
            + bd2_ref[...], 0.0)
        pos = (jnp.dot(f2.astype(jnp.bfloat16), wo_ref[...],
                       preferred_element_type=jnp.float32)
               + bo_ref[...])
        out_ref[...] = pos.reshape(TT, BG, 128)

    return kernel


def replay_decoder_forward(beatmap_features, latent_code, params,
                           *, time_block=128):
    """beatmap_features: (B, T, F) f32, latent_code: (B, L) f32 -> (B, T, 2)."""
    (wih1, whh1, b1, wih2, whh2, b2,
     wd1, bd1, wd2, bd2, wo, bo) = params

    B, T, F = beatmap_features.shape
    L = latent_code.shape[-1]
    H = HIDDEN
    C = F + L

    B_pad = ((B + BG - 1) // BG) * BG
    TT = min(time_block, T)
    T_pad = ((T + TT - 1) // TT) * TT
    C_pad = ((C + 127) // 128) * 128

    # Build x directly in time-major layout, pad, and stream as bf16.
    x = jnp.concatenate(
        [jnp.transpose(beatmap_features, (1, 0, 2)).astype(jnp.float32),
         jnp.broadcast_to(latent_code[None, :, :], (T, B, L)).astype(jnp.float32)],
        axis=-1)
    x = jnp.pad(x, ((0, T_pad - T), (0, B_pad - B), (0, C_pad - C)))
    x = x.astype(jnp.bfloat16)

    # bf16 matmul operands (f32 accumulation in-kernel); biases stay f32.
    wih1p = jnp.pad(wih1, ((0, C_pad - C), (0, 0))).astype(jnp.bfloat16)
    whh1b = whh1.astype(jnp.bfloat16)
    w2cat = jnp.concatenate([wih2, whh2], axis=0).astype(jnp.bfloat16)  # (2H,4H)
    wd1b = wd1.astype(jnp.bfloat16)
    # Lane-dense MLP tail: zero-pad 64-wide / 2-wide stages out to 128 lanes.
    wd2p = jnp.pad(wd2, ((0, 0), (0, 128 - wd2.shape[1]))).astype(jnp.bfloat16)
    bd2p = jnp.pad(bd2, ((0, 0), (0, 128 - bd2.shape[1])))
    wop = jnp.pad(wo, ((0, 128 - wo.shape[0]),
                       (0, 128 - wo.shape[1]))).astype(jnp.bfloat16)
    bop = jnp.pad(bo, ((0, 0), (0, 128 - bo.shape[1])))

    kernel = _make_kernel(TT, H, C_pad)

    def full(a):
        nd = a.ndim
        return pl.BlockSpec(a.shape, lambda bg, t, _nd=nd: (0,) * _nd)

    out = pl.pallas_call(
        kernel,
        out_shape=jax.ShapeDtypeStruct((T_pad, B_pad, 128), jnp.float32),
        grid_spec=pltpu.PrefetchScalarGridSpec(
            num_scalar_prefetch=0,
            grid=(B_pad // BG, T_pad // TT),
            in_specs=[
                pl.BlockSpec((TT, BG, C_pad), lambda bg, t: (t, bg, 0)),
                full(wih1p), full(b1), full(whh1b), full(w2cat), full(b2),
                full(wd1b), full(bd1), full(wd2p), full(bd2p),
                full(wop), full(bop),
            ],
            out_specs=pl.BlockSpec((TT, BG, 128), lambda bg, t: (t, bg, 0)),
            scratch_shapes=[
                pltpu.VMEM((BG, H), jnp.float32),           # h1
                pltpu.VMEM((BG, H), jnp.float32),           # c1
                pltpu.VMEM((BG, H), jnp.float32),           # h2
                pltpu.VMEM((BG, H), jnp.float32),           # c2
                pltpu.VMEM((TT, BG, 4 * H), jnp.float32),   # per-block layer-1 gates
                pltpu.VMEM((TT, BG, H), jnp.float32),       # per-block h2 slab
            ],
        ),
        compiler_params=pltpu.CompilerParams(
            dimension_semantics=("parallel", "arbitrary")),  # batch || time(rec)
    )(x, wih1p, b1, whh1b, w2cat, b2, wd1b, bd1, wd2p, bd2p, wop, bop)

    out = out[:T, :B, :2]                       # drop time/batch/lane padding
    return jnp.transpose(out, (1, 0, 2))        # (B, T, 2)


def init_params(key, input_size, latent_dim=32):
    """Deterministic parameter init matching the PyTorch module's shapes.

    Weights are stored pre-transposed (in_dim, out_dim) so the kernel does
    x @ W directly.  LSTM biases b_ih + b_hh are fused into a single bias.
    """
    C = input_size + latent_dim
    H = HIDDEN

    def u(key, shape, scale):
        return jax.random.uniform(key, shape, jnp.float32, -scale, scale)

    ks = jax.random.split(key, 16)
    s_lstm = 1.0 / jnp.sqrt(H)
    wih1 = u(ks[0], (C, 4 * H), s_lstm)
    whh1 = u(ks[1], (H, 4 * H), s_lstm)
    b1 = u(ks[2], (1, 4 * H), s_lstm) + u(ks[3], (1, 4 * H), s_lstm)
    wih2 = u(ks[4], (H, 4 * H), s_lstm)
    whh2 = u(ks[5], (H, 4 * H), s_lstm)
    b2 = u(ks[6], (1, 4 * H), s_lstm) + u(ks[7], (1, 4 * H), s_lstm)

    wd1 = u(ks[8], (H, 128), 1.0 / jnp.sqrt(H))
    bd1 = u(ks[9], (1, 128), 1.0 / jnp.sqrt(H))
    wd2 = u(ks[10], (128, 64), 1.0 / jnp.sqrt(128))
    bd2 = u(ks[11], (1, 64), 1.0 / jnp.sqrt(128))
    wo = u(ks[12], (64, 2), 1.0 / jnp.sqrt(64))
    bo = u(ks[13], (1, 2), 1.0 / jnp.sqrt(64))

    return (wih1, whh1, b1, wih2, whh2, b2, wd1, bd1, wd2, bd2, wo, bo)


def reference_forward(beatmap_features, latent_code, params):
    """Pure-JAX f32 reference (PyTorch semantics) for a sanity check."""
    (wih1, whh1, b1, wih2, whh2, b2, wd1, bd1, wd2, bd2, wo, bo) = params
    B, T, F = beatmap_features.shape
    L = latent_code.shape[-1]
    x = jnp.concatenate(
        [beatmap_features, jnp.broadcast_to(latent_code[:, None, :], (B, T, L))],
        axis=-1).astype(jnp.float32)

    def cell(x_t, h, c, wih, whh, b):
        g = x_t @ wih + h @ whh + b
        i, f, gg, o = (jax.nn.sigmoid(g[:, :128]), jax.nn.sigmoid(g[:, 128:256]),
                       jnp.tanh(g[:, 256:384]), jax.nn.sigmoid(g[:, 384:]))
        c = f * c + i * gg
        return o * jnp.tanh(c), c

    def step(carry, x_t):
        h1, c1, h2, c2 = carry
        h1, c1 = cell(x_t, h1, c1, wih1, whh1, b1)
        h2, c2 = cell(h1, h2, c2, wih2, whh2, b2)
        f1 = jnp.maximum(h2 @ wd1 + bd1, 0.0)
        f2 = jnp.maximum(f1 @ wd2 + bd2, 0.0)
        return (h1, c1, h2, c2), f2 @ wo + bo

    z = jnp.zeros((B, HIDDEN), jnp.float32)
    _, ys = jax.lax.scan(step, (z, z, z, z), jnp.transpose(x, (1, 0, 2)))
    return jnp.transpose(ys, (1, 0, 2))


if __name__ == "__main__":
    B, T, F, L = 2, 8, 16, 32
    key = jax.random.PRNGKey(0)
    k_feat, k_lat, k_par = jax.random.split(key, 3)

    beatmap_features = jax.random.normal(k_feat, (B, T, F), jnp.float32)
    latent_code = jax.random.normal(k_lat, (B, L), jnp.float32)
    params = init_params(k_par, input_size=F, latent_dim=L)

    out = replay_decoder_forward(beatmap_features, latent_code, params)
    out = jax.block_until_ready(out)
    assert out.shape == (B, T, 2), out.shape

    ref = jax.block_until_ready(
        reference_forward(beatmap_features, latent_code, params))
    # bf16 matmul operands (f32 accumulation) -> relaxed tolerance vs. f32 ref.
    max_err = float(jnp.max(jnp.abs(out - ref)))
    assert jnp.allclose(out, ref, atol=5e-2, rtol=5e-2), max_err

    print("KERNEL_OK")
</pallas_src>

<mosaic_0001>
module attributes {stable_mosaic.version = 11 : i64} {
  func.func @kernel(%arg0: i32, %arg1: i32, %arg2: memref<8x8x128xbf16, #tpu.memory_space<vmem>>, %arg3: memref<128x512xbf16, #tpu.memory_space<vmem>>, %arg4: memref<1x512xf32, #tpu.memory_space<vmem>>, %arg5: memref<128x512xbf16, #tpu.memory_space<vmem>>, %arg6: memref<256x512xbf16, #tpu.memory_space<vmem>>, %arg7: memref<1x512xf32, #tpu.memory_space<vmem>>, %arg8: memref<128x128xbf16, #tpu.memory_space<vmem>>, %arg9: memref<1x128xf32, #tpu.memory_space<vmem>>, %arg10: memref<128x128xbf16, #tpu.memory_space<vmem>>, %arg11: memref<1x128xf32, #tpu.memory_space<vmem>>, %arg12: memref<128x128xbf16, #tpu.memory_space<vmem>>, %arg13: memref<1x128xf32, #tpu.memory_space<vmem>>, %arg14: memref<8x8x128xf32, #tpu.memory_space<vmem>>, %arg15: memref<8x128xf32, #tpu.memory_space<vmem>>, %arg16: memref<8x128xf32, #tpu.memory_space<vmem>>, %arg17: memref<8x128xf32, #tpu.memory_space<vmem>>, %arg18: memref<8x128xf32, #tpu.memory_space<vmem>>, %arg19: memref<8x8x512xf32, #tpu.memory_space<vmem>>, %arg20: memref<8x8x128xf32, #tpu.memory_space<vmem>>) attributes {dimension_semantics = [#tpu.dimension_semantics<parallel>, #tpu.dimension_semantics<arbitrary>], iteration_bounds = array<i64: 1, 1>, scalar_prefetch = 0 : i64, scratch_operands = 6 : i64, tpu.core_type = #tpu.core_type<tc>, window_params = [{transform_indices = @transform_0, window_bounds = array<i64: 8, 8, 128>}, {pipeline_mode = #tpu.pipeline_mode<synchronous>, transform_indices = @transform_1, window_bounds = array<i64: 128, 512>}, {pipeline_mode = #tpu.pipeline_mode<synchronous>, transform_indices = @transform_2, window_bounds = array<i64: 1, 512>}, {pipeline_mode = #tpu.pipeline_mode<synchronous>, transform_indices = @transform_3, window_bounds = array<i64: 128, 512>}, {pipeline_mode = #tpu.pipeline_mode<synchronous>, transform_indices = @transform_4, window_bounds = array<i64: 256, 512>}, {pipeline_mode = #tpu.pipeline_mode<synchronous>, transform_indices = @transform_5, window_bounds = array<i64: 1, 512>}, {pipeline_mode = #tpu.pipeline_mode<synchronous>, transform_indices = @transform_6, window_bounds = array<i64: 128, 128>}, {pipeline_mode = #tpu.pipeline_mode<synchronous>, transform_indices = @transform_7, window_bounds = array<i64: 1, 128>}, {pipeline_mode = #tpu.pipeline_mode<synchronous>, transform_indices = @transform_8, window_bounds = array<i64: 128, 128>}, {pipeline_mode = #tpu.pipeline_mode<synchronous>, transform_indices = @transform_9, window_bounds = array<i64: 1, 128>}, {pipeline_mode = #tpu.pipeline_mode<synchronous>, transform_indices = @transform_10, window_bounds = array<i64: 128, 128>}, {pipeline_mode = #tpu.pipeline_mode<synchronous>, transform_indices = @transform_11, window_bounds = array<i64: 1, 128>}, {transform_indices = @transform_12, window_bounds = array<i64: 8, 8, 128>}]} {
    %c0_i32 = arith.constant 0 : i32
    %0 = arith.cmpi eq, %arg1, %c0_i32 : i32
    %1 = arith.extui %0 : i1 to i32
    %c0_i32_0 = arith.constant 0 : i32
    %2 = arith.cmpi ne, %1, %c0_i32_0 : i32
    scf.if %2 {
      %cst_152 = arith.constant 0.000000e+00 : f32
      %563 = vector.broadcast %cst_152 : f32 to vector<8x128xf32>
      %c0_153 = arith.constant 0 : index
      %c0_154 = arith.constant 0 : index
      %564 = vector.load %arg15[%c0_153, %c0_154] : memref<8x128xf32, #tpu.memory_space<vmem>>, vector<8x128xf32>
      tpu.vector_store %arg15[%c0_153, %c0_154], %563 {strides = array<i32>} : memref<8x128xf32, #tpu.memory_space<vmem>>, vector<8x128xf32>,
      %cst_155 = arith.constant 0.000000e+00 : f32
      %565 = vector.broadcast %cst_155 : f32 to vector<8x128xf32>
      %c0_156 = arith.constant 0 : index
      %c0_157 = arith.constant 0 : index
      %566 = vector.load %arg16[%c0_156, %c0_157] : memref<8x128xf32, #tpu.memory_space<vmem>>, vector<8x128xf32>
      tpu.vector_store %arg16[%c0_156, %c0_157], %565 {strides = array<i32>} : memref<8x128xf32, #tpu.memory_space<vmem>>, vector<8x128xf32>,
      %cst_158 = arith.constant 0.000000e+00 : f32
      %567 = vector.broadcast %cst_158 : f32 to vector<8x128xf32>
      %c0_159 = arith.constant 0 : index
      %c0_160 = arith.constant 0 : index
      %568 = vector.load %arg17[%c0_159, %c0_160] : memref<8x128xf32, #tpu.memory_space<vmem>>, vector<8x128xf32>
      tpu.vector_store %arg17[%c0_159, %c0_160], %567 {strides = array<i32>} : memref<8x128xf32, #tpu.memory_space<vmem>>, vector<8x128xf32>,
      %cst_161 = arith.constant 0.000000e+00 : f32
      %569 = vector.broadcast %cst_161 : f32 to vector<8x128xf32>
      %c0_162 = arith.constant 0 : index
      %c0_163 = arith.constant 0 : index
      %570 = vector.load %arg18[%c0_162, %c0_163] : memref<8x128xf32, #tpu.memory_space<vmem>>, vector<8x128xf32>
      tpu.vector_store %arg18[%c0_162, %c0_163], %569 {strides = array<i32>} : memref<8x128xf32, #tpu.memory_space<vmem>>, vector<8x128xf32>,
    } else {
    }
    %c0 = arith.constant 0 : index
    %c0_1 = arith.constant 0 : index
    %c0_2 = arith.constant 0 : index
    %3 = vector.load %arg2[%c0, %c0_1, %c0_2] : memref<8x8x128xbf16, #tpu.memory_space<vmem>>, vector<8x8x128xbf16>
    %4 = vector.shape_cast %3 : vector<8x8x128xbf16> to vector<64x128xbf16>
    %c0_3 = arith.constant 0 : index
    %c0_4 = arith.constant 0 : index
    %5 = vector.load %arg3[%c0_3, %c0_4] : memref<128x512xbf16, #tpu.memory_space<vmem>>, vector<128x512xbf16>
    %cst = arith.constant dense<0.000000e+00> : vector<64x512xf32>
    %6 = tpu.matmul %4, %5, %cst {dimension_numbers = #tpu.dot_dimension_numbers<[1], [0], [0], [1], [0, 0, 1, 1], [], []>} : vector<64x128xbf16>, vector<128x512xbf16>, vector<64x512xf32> -> vector<64x512xf32>
    %c0_5 = arith.constant 0 : index
    %c0_6 = arith.constant 0 : index
    %7 = vector.load %arg4[%c0_5, %c0_6] : memref<1x512xf32, #tpu.memory_space<vmem>>, vector<1x512xf32>
    %8 = vector.broadcast %7 : vector<1x512xf32> to vector<64x512xf32>
    %9 = arith.addf %6, %8 : vector<64x512xf32>
    %10 = vector.shape_cast %9 : vector<64x512xf32> to vector<8x8x512xf32>
    %c0_7 = arith.constant 0 : index
    %c0_8 = arith.constant 0 : index
    %c0_9 = arith.constant 0 : index
    %11 = vector.load %arg19[%c0_7, %c0_8, %c0_9] : memref<8x8x512xf32, #tpu.memory_space<vmem>>, vector<8x8x512xf32>
    tpu.vector_store %arg19[%c0_7, %c0_8, %c0_9], %10 {strides = array<i32>} : memref<8x8x512xf32, #tpu.memory_space<vmem>>, vector<8x8x512xf32>,
    %c0_10 = arith.constant 0 : index
    %c0_11 = arith.constant 0 : index
    %12 = vector.load %arg5[%c0_10, %c0_11] : memref<128x512xbf16, #tpu.memory_space<vmem>>, vector<128x512xbf16>
    %c0_12 = arith.constant 0 : index
    %c0_13 = arith.constant 0 : index
    %13 = vector.load %arg6[%c0_12, %c0_13] : memref<256x512xbf16, #tpu.memory_space<vmem>>, vector<256x512xbf16>
    %c0_14 = arith.constant 0 : index
    %c0_15 = arith.constant 0 : index
    %14 = vector.load %arg7[%c0_14, %c0_15] : memref<1x512xf32, #tpu.memory_space<vmem>>, vector<1x512xf32>
    %15 = vector.shape_cast %14 : vector<1x512xf32> to vector<1x512xf32>
    %16 = vector.broadcast %15 : vector<1x512xf32> to vector<8x512xf32>
    %c0_16 = arith.constant 0 : index
    %c0_17 = arith.constant 0 : index
    %17 = vector.load %arg15[%c0_16, %c0_17] : memref<8x128xf32, #tpu.memory_space<vmem>>, vector<8x128xf32>
    %c0_18 = arith.constant 0 : index
    %c0_19 = arith.constant 0 : index
    %18 = vector.load %arg16[%c0_18, %c0_19] : memref<8x128xf32, #tpu.memory_space<vmem>>, vector<8x128xf32>
    %c0_20 = arith.constant 0 : index
    %c0_21 = arith.constant 0 : index
    %19 = vector.load %arg17[%c0_20, %c0_21] : memref<8x128xf32, #tpu.memory_space<vmem>>, vector<8x128xf32>
    %c0_22 = arith.constant 0 : index
    %c0_23 = arith.constant 0 : index
    %20 = vector.load %arg18[%c0_22, %c0_23] : memref<8x128xf32, #tpu.memory_space<vmem>>, vector<8x128xf32>
    %c0_i32_24 = arith.constant 0 : i32
    %21 = arith.index_cast %c0_i32_24 : i32 to index
    %c0_25 = arith.constant 0 : index
    %c0_26 = arith.constant 0 : index
    %22 = vector.load %arg19[%21, %c0_25, %c0_26] : memref<8x8x512xf32, #tpu.memory_space<vmem>>, vector<1x8x512xf32>
    %23 = vector.shape_cast %22 : vector<1x8x512xf32> to vector<8x512xf32>
    %24 = arith.truncf %17 : vector<8x128xf32> to vector<8x128xbf16>
    %cst_27 = arith.constant dense<0.000000e+00> : vector<8x512xf32>
    %25 = tpu.matmul %24, %12, %cst_27 {dimension_numbers = #tpu.dot_dimension_numbers<[1], [0], [0], [1], [0, 0, 1, 1], [], []>} : vector<8x128xbf16>, vector<128x512xbf16>, vector<8x512xf32> -> vector<8x512xf32>
    %26 = arith.addf %23, %25 : vector<8x512xf32>
    %27 = vector.extract_strided_slice %26 {offsets = [0, 0], sizes = [8, 128], strides = [1, 1]} : vector<8x512xf32> to vector<8x128xf32>
    %28 = arith.negf %27 : vector<8x128xf32>
    %29 = math.exp %28 : vector<8x128xf32>
    %cst_28 = arith.constant 1.000000e+00 : f32
    %30 = vector.broadcast %cst_28 : f32 to vector<8x128xf32>
    %31 = arith.addf %30, %29 : vector<8x128xf32>
    %32 = arith.divf %30, %31 : vector<8x128xf32>
    %33 = vector.extract_strided_slice %26 {offsets = [0, 128], sizes = [8, 128], strides = [1, 1]} : vector<8x512xf32> to vector<8x128xf32>
    %34 = arith.negf %33 : vector<8x128xf32>
    %35 = math.exp %34 : vector<8x128xf32>
    %cst_29 = arith.constant 1.000000e+00 : f32
    %36 = vector.broadcast %cst_29 : f32 to vector<8x128xf32>
    %37 = arith.addf %36, %35 : vector<8x128xf32>
    %38 = arith.divf %36, %37 : vector<8x128xf32>
    %39 = vector.extract_strided_slice %26 {offsets = [0, 256], sizes = [8, 128], strides = [1, 1]} : vector<8x512xf32> to vector<8x128xf32>
    %40 = math.tanh %39 : vector<8x128xf32>
    %41 = vector.extract_strided_slice %26 {offsets = [0, 384], sizes = [8, 128], strides = [1, 1]} : vector<8x512xf32> to vector<8x128xf32>
    %42 = arith.negf %41 : vector<8x128xf32>
    %43 = math.exp %42 : vector<8x128xf32>
    %cst_30 = arith.constant 1.000000e+00 : f32
    %44 = vector.broadcast %cst_30 : f32 to vector<8x128xf32>
    %45 = arith.addf %44, %43 : vector<8x128xf32>
    %46 = arith.divf %44, %45 : vector<8x128xf32>
    %47 = arith.mulf %38, %18 : vector<8x128xf32>
    %48 = arith.mulf %32, %40 : vector<8x128xf32>
    %49 = arith.addf %47, %48 : vector<8x128xf32>
    %50 = math.tanh %49 : vector<8x128xf32>
    %51 = arith.mulf %46, %50 : vector<8x128xf32>
    %52 = tpu.concatenate %51, %19 in 1 : vector<8x128xf32>, vector<8x128xf32> -> vector<8x256xf32>
    %53 = arith.truncf %52 : vector<8x256xf32> to vector<8x256xbf16>
    %cst_31 = arith.constant dense<0.000000e+00> : vector<8x512xf32>
    %54 = tpu.matmul %53, %13, %cst_31 {dimension_numbers = #tpu.dot_dimension_numbers<[1], [0], [0], [1], [0, 0, 1, 1], [], []>} : vector<8x256xbf16>, vector<256x512xbf16>, vector<8x512xf32> -> vector<8x512xf32>
    %55 = arith.addf %54, %16 : vector<8x512xf32>
    %56 = vector.extract_strided_slice %55 {offsets = [0, 0], sizes = [8, 128], strides = [1, 1]} : vector<8x512xf32> to vector<8x128xf32>
    %57 = arith.negf %56 : vector<8x128xf32>
    %58 = math.exp %57 : vector<8x128xf32>
    %cst_32 = arith.constant 1.000000e+00 : f32
    %59 = vector.broadcast %cst_32 : f32 to vector<8x128xf32>
    %60 = arith.addf %59, %58 : vector<8x128xf32>
    %61 = arith.divf %59, %60 : vector<8x128xf32>
    %62 = vector.extract_strided_slice %55 {offsets = [0, 128], sizes = [8, 128], strides = [1, 1]} : vector<8x512xf32> to vector<8x128xf32>
    %63 = arith.negf %62 : vector<8x128xf32>
    %64 = math.exp %63 : vector<8x128xf32>
    %cst_33 = arith.constant 1.000000e+00 : f32
    %65 = vector.broadcast %cst_33 : f32 to vector<8x128xf32>
    %66 = arith.addf %65, %64 : vector<8x128xf32>
    %67 = arith.divf %65, %66 : vector<8x128xf32>
    %68 = vector.extract_strided_slice %55 {offsets = [0, 256], sizes = [8, 128], strides = [1, 1]} : vector<8x512xf32> to vector<8x128xf32>
    %69 = math.tanh %68 : vector<8x128xf32>
    %70 = vector.extract_strided_slice %55 {offsets = [0, 384], sizes = [8, 128], strides = [1, 1]} : vector<8x512xf32> to vector<8x128xf32>
    %71 = arith.negf %70 : vector<8x128xf32>
    %72 = math.exp %71 : vector<8x128xf32>
    %cst_34 = arith.constant 1.000000e+00 : f32
    %73 = vector.broadcast %cst_34 : f32 to vector<8x128xf32>
    %74 = arith.addf %73, %72 : vector<8x128xf32>
    %75 = arith.divf %73, %74 : vector<8x128xf32>
    %76 = arith.mulf %67, %20 : vector<8x128xf32>
    %77 = arith.mulf %61, %69 : vector<8x128xf32>
    %78 = arith.addf %76, %77 : vector<8x128xf32>
    %79 = math.tanh %78 : vector<8x128xf32>
    %80 = arith.mulf %75, %79 : vector<8x128xf32>
    %81 = arith.index_cast %c0_i32_24 : i32 to index
    %c0_35 = arith.constant 0 : index
    %c0_36 = arith.constant 0 : index
    %82 = vector.load %arg20[%81, %c0_35, %c0_36] : memref<8x8x128xf32, #tpu.memory_space<vmem>>, vector<1x8x128xf32>
    %83 = vector.shape_cast %82 : vector<1x8x128xf32> to vector<8x128xf32>
    %84 = vector.shape_cast %80 : vector<8x128xf32> to vector<1x8x128xf32>
    tpu.vector_store %arg20[%81, %c0_35, %c0_36], %84 {strides = array<i32>} : memref<8x8x128xf32, #tpu.memory_space<vmem>>, vector<1x8x128xf32>,
    %c1_i32 = arith.constant 1 : i32
    %85 = arith.index_cast %c1_i32 : i32 to index
    %c0_37 = arith.constant 0 : index
    %c0_38 = arith.constant 0 : index
    %86 = vector.load %arg19[%85, %c0_37, %c0_38] : memref<8x8x512xf32, #tpu.memory_space<vmem>>, vector<1x8x512xf32>
    %87 = vector.shape_cast %86 : vector<1x8x512xf32> to vector<8x512xf32>
    %88 = arith.truncf %51 : vector<8x128xf32> to vector<8x128xbf16>
    %cst_39 = arith.constant dense<0.000000e+00> : vector<8x512xf32>
    %89 = tpu.matmul %88, %12, %cst_39 {dimension_numbers = #tpu.dot_dimension_numbers<[1], [0], [0], [1], [0, 0, 1, 1], [], []>} : vector<8x128xbf16>, vector<128x512xbf16>, vector<8x512xf32> -> vector<8x512xf32>
    %90 = arith.addf %87, %89 : vector<8x512xf32>
    %91 = vector.extract_strided_slice %90 {offsets = [0, 0], sizes = [8, 128], strides = [1, 1]} : vector<8x512xf32> to vector<8x128xf32>
    %92 = arith.negf %91 : vector<8x128xf32>
    %93 = math.exp %92 : vector<8x128xf32>
    %cst_40 = arith.constant 1.000000e+00 : f32
    %94 = vector.broadcast %cst_40 : f32 to vector<8x128xf32>
    %95 = arith.addf %94, %93 : vector<8x128xf32>
    %96 = arith.divf %94, %95 : vector<8x128xf32>
    %97 = vector.extract_strided_slice %90 {offsets = [0, 128], sizes = [8, 128], strides = [1, 1]} : vector<8x512xf32> to vector<8x128xf32>
    %98 = arith.negf %97 : vector<8x128xf32>
    %99 = math.exp %98 : vector<8x128xf32>
    %cst_41 = arith.constant 1.000000e+00 : f32
    %100 = vector.broadcast %cst_41 : f32 to vector<8x128xf32>
    %101 = arith.addf %100, %99 : vector<8x128xf32>
    %102 = arith.divf %100, %101 : vector<8x128xf32>
    %103 = vector.extract_strided_slice %90 {offsets = [0, 256], sizes = [8, 128], strides = [1, 1]} : vector<8x512xf32> to vector<8x128xf32>
    %104 = math.tanh %103 : vector<8x128xf32>
    %105 = vector.extract_strided_slice %90 {offsets = [0, 384], sizes = [8, 128], strides = [1, 1]} : vector<8x512xf32> to vector<8x128xf32>
    %106 = arith.negf %105 : vector<8x128xf32>
    %107 = math.exp %106 : vector<8x128xf32>
    %cst_42 = arith.constant 1.000000e+00 : f32
    %108 = vector.broadcast %cst_42 : f32 to vector<8x128xf32>
    %109 = arith.addf %108, %107 : vector<8x128xf32>
    %110 = arith.divf %108, %109 : vector<8x128xf32>
    %111 = arith.mulf %102, %49 : vector<8x128xf32>
    %112 = arith.mulf %96, %104 : vector<8x128xf32>
    %113 = arith.addf %111, %112 : vector<8x128xf32>
    %114 = math.tanh %113 : vector<8x128xf32>
    %115 = arith.mulf %110, %114 : vector<8x128xf32>
    %116 = tpu.concatenate %115, %80 in 1 : vector<8x128xf32>, vector<8x128xf32> -> vector<8x256xf32>
    %117 = arith.truncf %116 : vector<8x256xf32> to vector<8x256xbf16>
    %cst_43 = arith.constant dense<0.000000e+00> : vector<8x512xf32>
    %118 = tpu.matmul %117, %13, %cst_43 {dimension_numbers = #tpu.dot_dimension_numbers<[1], [0], [0], [1], [0, 0, 1, 1], [], []>} : vector<8x256xbf16>, vector<256x512xbf16>, vector<8x512xf32> -> vector<8x512xf32>
    %119 = arith.addf %118, %16 : vector<8x512xf32>
    %120 = vector.extract_strided_slice %119 {offsets = [0, 0], sizes = [8, 128], strides = [1, 1]} : vector<8x512xf32> to vector<8x128xf32>
    %121 = arith.negf %120 : vector<8x128xf32>
    %122 = math.exp %121 : vector<8x128xf32>
    %cst_44 = arith.constant 1.000000e+00 : f32
    %123 = vector.broadcast %cst_44 : f32 to vector<8x128xf32>
    %124 = arith.addf %123, %122 : vector<8x128xf32>
    %125 = arith.divf %123, %124 : vector<8x128xf32>
    %126 = vector.extract_strided_slice %119 {offsets = [0, 128], sizes = [8, 128], strides = [1, 1]} : vector<8x512xf32> to vector<8x128xf32>
    %127 = arith.negf %126 : vector<8x128xf32>
    %128 = math.exp %127 : vector<8x128xf32>
    %cst_45 = arith.constant 1.000000e+00 : f32
    %129 = vector.broadcast %cst_45 : f32 to vector<8x128xf32>
    %130 = arith.addf %129, %128 : vector<8x128xf32>
    %131 = arith.divf %129, %130 : vector<8x128xf32>
    %132 = vector.extract_strided_slice %119 {offsets = [0, 256], sizes = [8, 128], strides = [1, 1]} : vector<8x512xf32> to vector<8x128xf32>
    %133 = math.tanh %132 : vector<8x128xf32>
    %134 = vector.extract_strided_slice %119 {offsets = [0, 384], sizes = [8, 128], strides = [1, 1]} : vector<8x512xf32> to vector<8x128xf32>
    %135 = arith.negf %134 : vector<8x128xf32>
    %136 = math.exp %135 : vector<8x128xf32>
    %cst_46 = arith.constant 1.000000e+00 : f32
    %137 = vector.broadcast %cst_46 : f32 to vector<8x128xf32>
    %138 = arith.addf %137, %136 : vector<8x128xf32>
    %139 = arith.divf %137, %138 : vector<8x128xf32>
    %140 = arith.mulf %131, %78 : vector<8x128xf32>
    %141 = arith.mulf %125, %133 : vector<8x128xf32>
    %142 = arith.addf %140, %141 : vector<8x128xf32>
    %143 = math.tanh %142 : vector<8x128xf32>
    %144 = arith.mulf %139, %143 : vector<8x128xf32>
    %145 = arith.index_cast %c1_i32 : i32 to index
    %c0_47 = arith.constant 0 : index
    %c0_48 = arith.constant 0 : index
    %146 = vector.load %arg20[%145, %c0_47, %c0_48] : memref<8x8x128xf32, #tpu.memory_space<vmem>>, vector<1x8x128xf32>
    %147 = vector.shape_cast %146 : vector<1x8x128xf32> to vector<8x128xf32>
    %148 = vector.shape_cast %144 : vector<8x128xf32> to vector<1x8x128xf32>
    tpu.vector_store %arg20[%145, %c0_47, %c0_48], %148 {strides = array<i32>} : memref<8x8x128xf32, #tpu.memory_space<vmem>>, vector<1x8x128xf32>,
    %c2_i32 = arith.constant 2 : i32
    %149 = arith.index_cast %c2_i32 : i32 to index
    %c0_49 = arith.constant 0 : index
    %c0_50 = arith.constant 0 : index
    %150 = vector.load %arg19[%149, %c0_49, %c0_50] : memref<8x8x512xf32, #tpu.memory_space<vmem>>, vector<1x8x512xf32>
    %151 = vector.shape_cast %150 : vector<1x8x512xf32> to vector<8x512xf32>
    %152 = arith.truncf %115 : vector<8x128xf32> to vector<8x128xbf16>
    %cst_51 = arith.constant dense<0.000000e+00> : vector<8x512xf32>
    %153 = tpu.matmul %152, %12, %cst_51 {dimension_numbers = #tpu.dot_dimension_numbers<[1], [0], [0], [1], [0, 0, 1, 1], [], []>} : vector<8x128xbf16>, vector<128x512xbf16>, vector<8x512xf32> -> vector<8x512xf32>
    %154 = arith.addf %151, %153 : vector<8x512xf32>
    %155 = vector.extract_strided_slice %154 {offsets = [0, 0], sizes = [8, 128], strides = [1, 1]} : vector<8x512xf32> to vector<8x128xf32>
    %156 = arith.negf %155 : vector<8x128xf32>
    %157 = math.exp %156 : vector<8x128xf32>
    %cst_52 = arith.constant 1.000000e+00 : f32
    %158 = vector.broadcast %cst_52 : f32 to vector<8x128xf32>
    %159 = arith.addf %158, %157 : vector<8x128xf32>
    %160 = arith.divf %158, %159 : vector<8x128xf32>
    %161 = vector.extract_strided_slice %154 {offsets = [0, 128], sizes = [8, 128], strides = [1, 1]} : vector<8x512xf32> to vector<8x128xf32>
    %162 = arith.negf %161 : vector<8x128xf32>
    %163 = math.exp %162 : vector<8x128xf32>
    %cst_53 = arith.constant 1.000000e+00 : f32
    %164 = vector.broadcast %cst_53 : f32 to vector<8x128xf32>
    %165 = arith.addf %164, %163 : vector<8x128xf32>
    %166 = arith.divf %164, %165 : vector<8x128xf32>
    %167 = vector.extract_strided_slice %154 {offsets = [0, 256], sizes = [8, 128], strides = [1, 1]} : vector<8x512xf32> to vector<8x128xf32>
    %168 = math.tanh %167 : vector<8x128xf32>
    %169 = vector.extract_strided_slice %154 {offsets = [0, 384], sizes = [8, 128], strides = [1, 1]} : vector<8x512xf32> to vector<8x128xf32>
    %170 = arith.negf %169 : vector<8x128xf32>
    %171 = math.exp %170 : vector<8x128xf32>
    %cst_54 = arith.constant 1.000000e+00 : f32
    %172 = vector.broadcast %cst_54 : f32 to vector<8x128xf32>
    %173 = arith.addf %172, %171 : vector<8x128xf32>
    %174 = arith.divf %172, %173 : vector<8x128xf32>
    %175 = arith.mulf %166, %113 : vector<8x128xf32>
    %176 = arith.mulf %160, %168 : vector<8x128xf32>
    %177 = arith.addf %175, %176 : vector<8x128xf32>
    %178 = math.tanh %177 : vector<8x128xf32>
    %179 = arith.mulf %174, %178 : vector<8x128xf32>
    %180 = tpu.concatenate %179, %144 in 1 : vector<8x128xf32>, vector<8x128xf32> -> vector<8x256xf32>
    %181 = arith.truncf %180 : vector<8x256xf32> to vector<8x256xbf16>
    %cst_55 = arith.constant dense<0.000000e+00> : vector<8x512xf32>
    %182 = tpu.matmul %181, %13, %cst_55 {dimension_numbers = #tpu.dot_dimension_numbers<[1], [0], [0], [1], [0, 0, 1, 1], [], []>} : vector<8x256xbf16>, vector<256x512xbf16>, vector<8x512xf32> -> vector<8x512xf32>
    %183 = arith.addf %182, %16 : vector<8x512xf32>
    %184 = vector.extract_strided_slice %183 {offsets = [0, 0], sizes = [8, 128], strides = [1, 1]} : vector<8x512xf32> to vector<8x128xf32>
    %185 = arith.negf %184 : vector<8x128xf32>
    %186 = math.exp %185 : vector<8x128xf32>
    %cst_56 = arith.constant 1.000000e+00 : f32
    %187 = vector.broadcast %cst_56 : f32 to vector<8x128xf32>
    %188 = arith.addf %187, %186 : vector<8x128xf32>
    %189 = arith.divf %187, %188 : vector<8x128xf32>
    %190 = vector.extract_strided_slice %183 {offsets = [0, 128], sizes = [8, 128], strides = [1, 1]} : vector<8x512xf32> to vector<8x128xf32>
    %191 = arith.negf %190 : vector<8x128xf32>
    %192 = math.exp %191 : vector<8x128xf32>
    %cst_57 = arith.constant 1.000000e+00 : f32
    %193 = vector.broadcast %cst_57 : f32 to vector<8x128xf32>
    %194 = arith.addf %193, %192 : vector<8x128xf32>
    %195 = arith.divf %193, %194 : vector<8x128xf32>
    %196 = vector.extract_strided_slice %183 {offsets = [0, 256], sizes = [8, 128], strides = [1, 1]} : vector<8x512xf32> to vector<8x128xf32>
    %197 = math.tanh %196 : vector<8x128xf32>
    %198 = vector.extract_strided_slice %183 {offsets = [0, 384], sizes = [8, 128], strides = [1, 1]} : vector<8x512xf32> to vector<8x128xf32>
    %199 = arith.negf %198 : vector<8x128xf32>
    %200 = math.exp %199 : vector<8x128xf32>
    %cst_58 = arith.constant 1.000000e+00 : f32
    %201 = vector.broadcast %cst_58 : f32 to vector<8x128xf32>
    %202 = arith.addf %201, %200 : vector<8x128xf32>
    %203 = arith.divf %201, %202 : vector<8x128xf32>
    %204 = arith.mulf %195, %142 : vector<8x128xf32>
    %205 = arith.mulf %189, %197 : vector<8x128xf32>
    %206 = arith.addf %204, %205 : vector<8x128xf32>
    %207 = math.tanh %206 : vector<8x128xf32>
    %208 = arith.mulf %203, %207 : vector<8x128xf32>
    %209 = arith.index_cast %c2_i32 : i32 to index
    %c0_59 = arith.constant 0 : index
    %c0_60 = arith.constant 0 : index
    %210 = vector.load %arg20[%209, %c0_59, %c0_60] : memref<8x8x128xf32, #tpu.memory_space<vmem>>, vector<1x8x128xf32>
    %211 = vector.shape_cast %210 : vector<1x8x128xf32> to vector<8x128xf32>
    %212 = vector.shape_cast %208 : vector<8x128xf32> to vector<1x8x128xf32>
    tpu.vector_store %arg20[%209, %c0_59, %c0_60], %212 {strides = array<i32>} : memref<8x8x128xf32, #tpu.memory_space<vmem>>, vector<1x8x128xf32>,
    %c3_i32 = arith.constant 3 : i32
    %213 = arith.index_cast %c3_i32 : i32 to index
    %c0_61 = arith.constant 0 : index
    %c0_62 = arith.constant 0 : index
    %214 = vector.load %arg19[%213, %c0_61, %c0_62] : memref<8x8x512xf32, #tpu.memory_space<vmem>>, vector<1x8x512xf32>
    %215 = vector.shape_cast %214 : vector<1x8x512xf32> to vector<8x512xf32>
    %216 = arith.truncf %179 : vector<8x128xf32> to vector<8x128xbf16>
    %cst_63 = arith.constant dense<0.000000e+00> : vector<8x512xf32>
    %217 = tpu.matmul %216, %12, %cst_63 {dimension_numbers = #tpu.dot_dimension_numbers<[1], [0], [0], [1], [0, 0, 1, 1], [], []>} : vector<8x128xbf16>, vector<128x512xbf16>, vector<8x512xf32> -> vector<8x512xf32>
    %218 = arith.addf %215, %217 : vector<8x512xf32>
    %219 = vector.extract_strided_slice %218 {offsets = [0, 0], sizes = [8, 128], strides = [1, 1]} : vector<8x512xf32> to vector<8x128xf32>
    %220 = arith.negf %219 : vector<8x128xf32>
    %221 = math.exp %220 : vector<8x128xf32>
    %cst_64 = arith.constant 1.000000e+00 : f32
    %222 = vector.broadcast %cst_64 : f32 to vector<8x128xf32>
    %223 = arith.addf %222, %221 : vector<8x128xf32>
    %224 = arith.divf %222, %223 : vector<8x128xf32>
    %225 = vector.extract_strided_slice %218 {offsets = [0, 128], sizes = [8, 128], strides = [1, 1]} : vector<8x512xf32> to vector<8x128xf32>
    %226 = arith.negf %225 : vector<8x128xf32>
    %227 = math.exp %226 : vector<8x128xf32>
    %cst_65 = arith.constant 1.000000e+00 : f32
    %228 = vector.broadcast %cst_65 : f32 to vector<8x128xf32>
    %229 = arith.addf %228, %227 : vector<8x128xf32>
    %230 = arith.divf %228, %229 : vector<8x128xf32>
    %231 = vector.extract_strided_slice %218 {offsets = [0, 256], sizes = [8, 128], strides = [1, 1]} : vector<8x512xf32> to vector<8x128xf32>
    %232 = math.tanh %231 : vector<8x128xf32>
    %233 = vector.extract_strided_slice %218 {offsets = [0, 384], sizes = [8, 128], strides = [1, 1]} : vector<8x512xf32> to vector<8x128xf32>
    %234 = arith.negf %233 : vector<8x128xf32>
    %235 = math.exp %234 : vector<8x128xf32>
    %cst_66 = arith.constant 1.000000e+00 : f32
    %236 = vector.broadcast %cst_66 : f32 to vector<8x128xf32>
    %237 = arith.addf %236, %235 : vector<8x128xf32>
    %238 = arith.divf %236, %237 : vector<8x128xf32>
    %239 = arith.mulf %230, %177 : vector<8x128xf32>
    %240 = arith.mulf %224, %232 : vector<8x128xf32>
    %241 = arith.addf %239, %240 : vector<8x128xf32>
    %242 = math.tanh %241 : vector<8x128xf32>
    %243 = arith.mulf %238, %242 : vector<8x128xf32>
    %244 = tpu.concatenate %243, %208 in 1 : vector<8x128xf32>, vector<8x128xf32> -> vector<8x256xf32>
    %245 = arith.truncf %244 : vector<8x256xf32> to vector<8x256xbf16>
    %cst_67 = arith.constant dense<0.000000e+00> : vector<8x512xf32>
    %246 = tpu.matmul %245, %13, %cst_67 {dimension_numbers = #tpu.dot_dimension_numbers<[1], [0], [0], [1], [0, 0, 1, 1], [], []>} : vector<8x256xbf16>, vector<256x512xbf16>, vector<8x512xf32> -> vector<8x512xf32>
    %247 = arith.addf %246, %16 : vector<8x512xf32>
    %248 = vector.extract_strided_slice %247 {offsets = [0, 0], sizes = [8, 128], strides = [1, 1]} : vector<8x512xf32> to vector<8x128xf32>
    %249 = arith.negf %248 : vector<8x128xf32>
    %250 = math.exp %249 : vector<8x128xf32>
    %cst_68 = arith.constant 1.000000e+00 : f32
    %251 = vector.broadcast %cst_68 : f32 to vector<8x128xf32>
    %252 = arith.addf %251, %250 : vector<8x128xf32>
    %253 = arith.divf %251, %252 : vector<8x128xf32>
    %254 = vector.extract_strided_slice %247 {offsets = [0, 128], sizes = [8, 128], strides = [1, 1]} : vector<8x512xf32> to vector<8x128xf32>
    %255 = arith.negf %254 : vector<8x128xf32>
    %256 = math.exp %255 : vector<8x128xf32>
    %cst_69 = arith.constant 1.000000e+00 : f32
    %257 = vector.broadcast %cst_69 : f32 to vector<8x128xf32>
    %258 = arith.addf %257, %256 : vector<8x128xf32>
    %259 = arith.divf %257, %258 : vector<8x128xf32>
    %260 = vector.extract_strided_slice %247 {offsets = [0, 256], sizes = [8, 128], strides = [1, 1]} : vector<8x512xf32> to vector<8x128xf32>
    %261 = math.tanh %260 : vector<8x128xf32>
    %262 = vector.extract_strided_slice %247 {offsets = [0, 384], sizes = [8, 128], strides = [1, 1]} : vector<8x512xf32> to vector<8x128xf32>
    %263 = arith.negf %262 : vector<8x128xf32>
    %264 = math.exp %263 : vector<8x128xf32>
    %cst_70 = arith.constant 1.000000e+00 : f32
    %265 = vector.broadcast %cst_70 : f32 to vector<8x128xf32>
    %266 = arith.addf %265, %264 : vector<8x128xf32>
    %267 = arith.divf %265, %266 : vector<8x128xf32>
    %268 = arith.mulf %259, %206 : vector<8x128xf32>
    %269 = arith.mulf %253, %261 : vector<8x128xf32>
    %270 = arith.addf %268, %269 : vector<8x128xf32>
    %271 = math.tanh %270 : vector<8x128xf32>
    %272 = arith.mulf %267, %271 : vector<8x128xf32>
    %273 = arith.index_cast %c3_i32 : i32 to index
    %c0_71 = arith.constant 0 : index
    %c0_72 = arith.constant 0 : index
    %274 = vector.load %arg20[%273, %c0_71, %c0_72] : memref<8x8x128xf32, #tpu.memory_space<vmem>>, vector<1x8x128xf32>
    %275 = vector.shape_cast %274 : vector<1x8x128xf32> to vector<8x128xf32>
    %276 = vector.shape_cast %272 : vector<8x128xf32> to vector<1x8x128xf32>
    tpu.vector_store %arg20[%273, %c0_71, %c0_72], %276 {strides = array<i32>} : memref<8x8x128xf32, #tpu.memory_space<vmem>>, vector<1x8x128xf32>,
    %c4_i32 = arith.constant 4 : i32
    %277 = arith.index_cast %c4_i32 : i32 to index
    %c0_73 = arith.constant 0 : index
    %c0_74 = arith.constant 0 : index
    %278 = vector.load %arg19[%277, %c0_73, %c0_74] : memref<8x8x512xf32, #tpu.memory_space<vmem>>, vector<1x8x512xf32>
    %279 = vector.shape_cast %278 : vector<1x8x512xf32> to vector<8x512xf32>
    %280 = arith.truncf %243 : vector<8x128xf32> to vector<8x128xbf16>
    %cst_75 = arith.constant dense<0.000000e+00> : vector<8x512xf32>
    %281 = tpu.matmul %280, %12, %cst_75 {dimension_numbers = #tpu.dot_dimension_numbers<[1], [0], [0], [1], [0, 0, 1, 1], [], []>} : vector<8x128xbf16>, vector<128x512xbf16>, vector<8x512xf32> -> vector<8x512xf32>
    %282 = arith.addf %279, %281 : vector<8x512xf32>
    %283 = vector.extract_strided_slice %282 {offsets = [0, 0], sizes = [8, 128], strides = [1, 1]} : vector<8x512xf32> to vector<8x128xf32>
    %284 = arith.negf %283 : vector<8x128xf32>
    %285 = math.exp %284 : vector<8x128xf32>
    %cst_76 = arith.constant 1.000000e+00 : f32
    %286 = vector.broadcast %cst_76 : f32 to vector<8x128xf32>
    %287 = arith.addf %286, %285 : vector<8x128xf32>
    %288 = arith.divf %286, %287 : vector<8x128xf32>
    %289 = vector.extract_strided_slice %282 {offsets = [0, 128], sizes = [8, 128], strides = [1, 1]} : vector<8x512xf32> to vector<8x128xf32>
    %290 = arith.negf %289 : vector<8x128xf32>
    %291 = math.exp %290 : vector<8x128xf32>
    %cst_77 = arith.constant 1.000000e+00 : f32
    %292 = vector.broadcast %cst_77 : f32 to vector<8x128xf32>
    %293 = arith.addf %292, %291 : vector<8x128xf32>
    %294 = arith.divf %292, %293 : vector<8x128xf32>
    %295 = vector.extract_strided_slice %282 {offsets = [0, 256], sizes = [8, 128], strides = [1, 1]} : vector<8x512xf32> to vector<8x128xf32>
    %296 = math.tanh %295 : vector<8x128xf32>
    %297 = vector.extract_strided_slice %282 {offsets = [0, 384], sizes = [8, 128], strides = [1, 1]} : vector<8x512xf32> to vector<8x128xf32>
    %298 = arith.negf %297 : vector<8x128xf32>
    %299 = math.exp %298 : vector<8x128xf32>
    %cst_78 = arith.constant 1.000000e+00 : f32
    %300 = vector.broadcast %cst_78 : f32 to vector<8x128xf32>
    %301 = arith.addf %300, %299 : vector<8x128xf32>
    %302 = arith.divf %300, %301 : vector<8x128xf32>
    %303 = arith.mulf %294, %241 : vector<8x128xf32>
    %304 = arith.mulf %288, %296 : vector<8x128xf32>
    %305 = arith.addf %303, %304 : vector<8x128xf32>
    %306 = math.tanh %305 : vector<8x128xf32>
    %307 = arith.mulf %302, %306 : vector<8x128xf32>
    %308 = tpu.concatenate %307, %272 in 1 : vector<8x128xf32>, vector<8x128xf32> -> vector<8x256xf32>
    %309 = arith.truncf %308 : vector<8x256xf32> to vector<8x256xbf16>
    %cst_79 = arith.constant dense<0.000000e+00> : vector<8x512xf32>
    %310 = tpu.matmul %309, %13, %cst_79 {dimension_numbers = #tpu.dot_dimension_numbers<[1], [0], [0], [1], [0, 0, 1, 1], [], []>} : vector<8x256xbf16>, vector<256x512xbf16>, vector<8x512xf32> -> vector<8x512xf32>
    %311 = arith.addf %310, %16 : vector<8x512xf32>
    %312 = vector.extract_strided_slice %311 {offsets = [0, 0], sizes = [8, 128], strides = [1, 1]} : vector<8x512xf32> to vector<8x128xf32>
    %313 = arith.negf %312 : vector<8x128xf32>
    %314 = math.exp %313 : vector<8x128xf32>
    %cst_80 = arith.constant 1.000000e+00 : f32
    %315 = vector.broadcast %cst_80 : f32 to vector<8x128xf32>
    %316 = arith.addf %315, %314 : vector<8x128xf32>
    %317 = arith.divf %315, %316 : vector<8x128xf32>
    %318 = vector.extract_strided_slice %311 {offsets = [0, 128], sizes = [8, 128], strides = [1, 1]} : vector<8x512xf32> to vector<8x128xf32>
    %319 = arith.negf %318 : vector<8x128xf32>
    %320 = math.exp %319 : vector<8x128xf32>
    %cst_81 = arith.constant 1.000000e+00 : f32
    %321 = vector.broadcast %cst_81 : f32 to vector<8x128xf32>
    %322 = arith.addf %321, %320 : vector<8x128xf32>
    %323 = arith.divf %321, %322 : vector<8x128xf32>
    %324 = vector.extract_strided_slice %311 {offsets = [0, 256], sizes = [8, 128], strides = [1, 1]} : vector<8x512xf32> to vector<8x128xf32>
    %325 = math.tanh %324 : vector<8x128xf32>
    %326 = vector.extract_strided_slice %311 {offsets = [0, 384], sizes = [8, 128], strides = [1, 1]} : vector<8x512xf32> to vector<8x128xf32>
    %327 = arith.negf %326 : vector<8x128xf32>
    %328 = math.exp %327 : vector<8x128xf32>
    %cst_82 = arith.constant 1.000000e+00 : f32
    %329 = vector.broadcast %cst_82 : f32 to vector<8x128xf32>
    %330 = arith.addf %329, %328 : vector<8x128xf32>
    %331 = arith.divf %329, %330 : vector<8x128xf32>
    %332 = arith.mulf %323, %270 : vector<8x128xf32>
    %333 = arith.mulf %317, %325 : vector<8x128xf32>
    %334 = arith.addf %332, %333 : vector<8x128xf32>
    %335 = math.tanh %334 : vector<8x128xf32>
    %336 = arith.mulf %331, %335 : vector<8x128xf32>
    %337 = arith.index_cast %c4_i32 : i32 to index
    %c0_83 = arith.constant 0 : index
    %c0_84 = arith.constant 0 : index
    %338 = vector.load %arg20[%337, %c0_83, %c0_84] : memref<8x8x128xf32, #tpu.memory_space<vmem>>, vector<1x8x128xf32>
    %339 = vector.shape_cast %338 : vector<1x8x128xf32> to vector<8x128xf32>
    %340 = vector.shape_cast %336 : vector<8x128xf32> to vector<1x8x128xf32>
    tpu.vector_store %arg20[%337, %c0_83, %c0_84], %340 {strides = array<i32>} : memref<8x8x128xf32, #tpu.memory_space<vmem>>, vector<1x8x128xf32>,
    %c5_i32 = arith.constant 5 : i32
    %341 = arith.index_cast %c5_i32 : i32 to index
    %c0_85 = arith.constant 0 : index
    %c0_86 = arith.constant 0 : index
    %342 = vector.load %arg19[%341, %c0_85, %c0_86] : memref<8x8x512xf32, #tpu.memory_space<vmem>>, vector<1x8x512xf32>
    %343 = vector.shape_cast %342 : vector<1x8x512xf32> to vector<8x512xf32>
    %344 = arith.truncf %307 : vector<8x128xf32> to vector<8x128xbf16>
    %cst_87 = arith.constant dense<0.000000e+00> : vector<8x512xf32>
    %345 = tpu.matmul %344, %12, %cst_87 {dimension_numbers = #tpu.dot_dimension_numbers<[1], [0], [0], [1], [0, 0, 1, 1], [], []>} : vector<8x128xbf16>, vector<128x512xbf16>, vector<8x512xf32> -> vector<8x512xf32>
    %346 = arith.addf %343, %345 : vector<8x512xf32>
    %347 = vector.extract_strided_slice %346 {offsets = [0, 0], sizes = [8, 128], strides = [1, 1]} : vector<8x512xf32> to vector<8x128xf32>
    %348 = arith.negf %347 : vector<8x128xf32>
    %349 = math.exp %348 : vector<8x128xf32>
    %cst_88 = arith.constant 1.000000e+00 : f32
    %350 = vector.broadcast %cst_88 : f32 to vector<8x128xf32>
    %351 = arith.addf %350, %349 : vector<8x128xf32>
    %352 = arith.divf %350, %351 : vector<8x128xf32>
    %353 = vector.extract_strided_slice %346 {offsets = [0, 128], sizes = [8, 128], strides = [1, 1]} : vector<8x512xf32> to vector<8x128xf32>
    %354 = arith.negf %353 : vector<8x128xf32>
    %355 = math.exp %354 : vector<8x128xf32>
    %cst_89 = arith.constant 1.000000e+00 : f32
    %356 = vector.broadcast %cst_89 : f32 to vector<8x128xf32>
    %357 = arith.addf %356, %355 : vector<8x128xf32>
    %358 = arith.divf %356, %357 : vector<8x128xf32>
    %359 = vector.extract_strided_slice %346 {offsets = [0, 256], sizes = [8, 128], strides = [1, 1]} : vector<8x512xf32> to vector<8x128xf32>
    %360 = math.tanh %359 : vector<8x128xf32>
    %361 = vector.extract_strided_slice %346 {offsets = [0, 384], sizes = [8, 128], strides = [1, 1]} : vector<8x512xf32> to vector<8x128xf32>
    %362 = arith.negf %361 : vector<8x128xf32>
    %363 = math.exp %362 : vector<8x128xf32>
    %cst_90 = arith.constant 1.000000e+00 : f32
    %364 = vector.broadcast %cst_90 : f32 to vector<8x128xf32>
    %365 = arith.addf %364, %363 : vector<8x128xf32>
    %366 = arith.divf %364, %365 : vector<8x128xf32>
    %367 = arith.mulf %358, %305 : vector<8x128xf32>
    %368 = arith.mulf %352, %360 : vector<8x128xf32>
    %369 = arith.addf %367, %368 : vector<8x128xf32>
    %370 = math.tanh %369 : vector<8x128xf32>
    %371 = arith.mulf %366, %370 : vector<8x128xf32>
    %372 = tpu.concatenate %371, %336 in 1 : vector<8x128xf32>, vector<8x128xf32> -> vector<8x256xf32>
    %373 = arith.truncf %372 : vector<8x256xf32> to vector<8x256xbf16>
    %cst_91 = arith.constant dense<0.000000e+00> : vector<8x512xf32>
    %374 = tpu.matmul %373, %13, %cst_91 {dimension_numbers = #tpu.dot_dimension_numbers<[1], [0], [0], [1], [0, 0, 1, 1], [], []>} : vector<8x256xbf16>, vector<256x512xbf16>, vector<8x512xf32> -> vector<8x512xf32>
    %375 = arith.addf %374, %16 : vector<8x512xf32>
    %376 = vector.extract_strided_slice %375 {offsets = [0, 0], sizes = [8, 128], strides = [1, 1]} : vector<8x512xf32> to vector<8x128xf32>
    %377 = arith.negf %376 : vector<8x128xf32>
    %378 = math.exp %377 : vector<8x128xf32>
    %cst_92 = arith.constant 1.000000e+00 : f32
    %379 = vector.broadcast %cst_92 : f32 to vector<8x128xf32>
    %380 = arith.addf %379, %378 : vector<8x128xf32>
    %381 = arith.divf %379, %380 : vector<8x128xf32>
    %382 = vector.extract_strided_slice %375 {offsets = [0, 128], sizes = [8, 128], strides = [1, 1]} : vector<8x512xf32> to vector<8x128xf32>
    %383 = arith.negf %382 : vector<8x128xf32>
    %384 = math.exp %383 : vector<8x128xf32>
    %cst_93 = arith.constant 1.000000e+00 : f32
    %385 = vector.broadcast %cst_93 : f32 to vector<8x128xf32>
    %386 = arith.addf %385, %384 : vector<8x128xf32>
    %387 = arith.divf %385, %386 : vector<8x128xf32>
    %388 = vector.extract_strided_slice %375 {offsets = [0, 256], sizes = [8, 128], strides = [1, 1]} : vector<8x512xf32> to vector<8x128xf32>
    %389 = math.tanh %388 : vector<8x128xf32>
    %390 = vector.extract_strided_slice %375 {offsets = [0, 384], sizes = [8, 128], strides = [1, 1]} : vector<8x512xf32> to vector<8x128xf32>
    %391 = arith.negf %390 : vector<8x128xf32>
    %392 = math.exp %391 : vector<8x128xf32>
    %cst_94 = arith.constant 1.000000e+00 : f32
    %393 = vector.broadcast %cst_94 : f32 to vector<8x128xf32>
    %394 = arith.addf %393, %392 : vector<8x128xf32>
    %395 = arith.divf %393, %394 : vector<8x128xf32>
    %396 = arith.mulf %387, %334 : vector<8x128xf32>
    %397 = arith.mulf %381, %389 : vector<8x128xf32>
    %398 = arith.addf %396, %397 : vector<8x128xf32>
    %399 = math.tanh %398 : vector<8x128xf32>
    %400 = arith.mulf %395, %399 : vector<8x128xf32>
    %401 = arith.index_cast %c5_i32 : i32 to index
    %c0_95 = arith.constant 0 : index
    %c0_96 = arith.constant 0 : index
    %402 = vector.load %arg20[%401, %c0_95, %c0_96] : memref<8x8x128xf32, #tpu.memory_space<vmem>>, vector<1x8x128xf32>
    %403 = vector.shape_cast %402 : vector<1x8x128xf32> to vector<8x128xf32>
    %404 = vector.shape_cast %400 : vector<8x128xf32> to vector<1x8x128xf32>
    tpu.vector_store %arg20[%401, %c0_95, %c0_96], %404 {strides = array<i32>} : memref<8x8x128xf32, #tpu.memory_space<vmem>>, vector<1x8x128xf32>,
    %c6_i32 = arith.constant 6 : i32
    %405 = arith.index_cast %c6_i32 : i32 to index
    %c0_97 = arith.constant 0 : index
    %c0_98 = arith.constant 0 : index
    %406 = vector.load %arg19[%405, %c0_97, %c0_98] : memref<8x8x512xf32, #tpu.memory_space<vmem>>, vector<1x8x512xf32>
    %407 = vector.shape_cast %406 : vector<1x8x512xf32> to vector<8x512xf32>
    %408 = arith.truncf %371 : vector<8x128xf32> to vector<8x128xbf16>
    %cst_99 = arith.constant dense<0.000000e+00> : vector<8x512xf32>
    %409 = tpu.matmul %408, %12, %cst_99 {dimension_numbers = #tpu.dot_dimension_numbers<[1], [0], [0], [1], [0, 0, 1, 1], [], []>} : vector<8x128xbf16>, vector<128x512xbf16>, vector<8x512xf32> -> vector<8x512xf32>
    %410 = arith.addf %407, %409 : vector<8x512xf32>
    %411 = vector.extract_strided_slice %410 {offsets = [0, 0], sizes = [8, 128], strides = [1, 1]} : vector<8x512xf32> to vector<8x128xf32>
    %412 = arith.negf %411 : vector<8x128xf32>
    %413 = math.exp %412 : vector<8x128xf32>
    %cst_100 = arith.constant 1.000000e+00 : f32
    %414 = vector.broadcast %cst_100 : f32 to vector<8x128xf32>
    %415 = arith.addf %414, %413 : vector<8x128xf32>
    %416 = arith.divf %414, %415 : vector<8x128xf32>
    %417 = vector.extract_strided_slice %410 {offsets = [0, 128], sizes = [8, 128], strides = [1, 1]} : vector<8x512xf32> to vector<8x128xf32>
    %418 = arith.negf %417 : vector<8x128xf32>
    %419 = math.exp %418 : vector<8x128xf32>
    %cst_101 = arith.constant 1.000000e+00 : f32
    %420 = vector.broadcast %cst_101 : f32 to vector<8x128xf32>
    %421 = arith.addf %420, %419 : vector<8x128xf32>
    %422 = arith.divf %420, %421 : vector<8x128xf32>
    %423 = vector.extract_strided_slice %410 {offsets = [0, 256], sizes = [8, 128], strides = [1, 1]} : vector<8x512xf32> to vector<8x128xf32>
    %424 = math.tanh %423 : vector<8x128xf32>
    %425 = vector.extract_strided_slice %410 {offsets = [0, 384], sizes = [8, 128], strides = [1, 1]} : vector<8x512xf32> to vector<8x128xf32>
    %426 = arith.negf %425 : vector<8x128xf32>
    %427 = math.exp %426 : vector<8x128xf32>
    %cst_102 = arith.constant 1.000000e+00 : f32
    %428 = vector.broadcast %cst_102 : f32 to vector<8x128xf32>
    %429 = arith.addf %428, %427 : vector<8x128xf32>
    %430 = arith.divf %428, %429 : vector<8x128xf32>
    %431 = arith.mulf %422, %369 : vector<8x128xf32>
    %432 = arith.mulf %416, %424 : vector<8x128xf32>
    %433 = arith.addf %431, %432 : vector<8x128xf32>
    %434 = math.tanh %433 : vector<8x128xf32>
    %435 = arith.mulf %430, %434 : vector<8x128xf32>
    %436 = tpu.concatenate %435, %400 in 1 : vector<8x128xf32>, vector<8x128xf32> -> vector<8x256xf32>
    %437 = arith.truncf %436 : vector<8x256xf32> to vector<8x256xbf16>
    %cst_103 = arith.constant dense<0.000000e+00> : vector<8x512xf32>
    %438 = tpu.matmul %437, %13, %cst_103 {dimension_numbers = #tpu.dot_dimension_numbers<[1], [0], [0], [1], [0, 0, 1, 1], [], []>} : vector<8x256xbf16>, vector<256x512xbf16>, vector<8x512xf32> -> vector<8x512xf32>
    %439 = arith.addf %438, %16 : vector<8x512xf32>
    %440 = vector.extract_strided_slice %439 {offsets = [0, 0], sizes = [8, 128], strides = [1, 1]} : vector<8x512xf32> to vector<8x128xf32>
    %441 = arith.negf %440 : vector<8x128xf32>
    %442 = math.exp %441 : vector<8x128xf32>
    %cst_104 = arith.constant 1.000000e+00 : f32
    %443 = vector.broadcast %cst_104 : f32 to vector<8x128xf32>
    %444 = arith.addf %443, %442 : vector<8x128xf32>
    %445 = arith.divf %443, %444 : vector<8x128xf32>
    %446 = vector.extract_strided_slice %439 {offsets = [0, 128], sizes = [8, 128], strides = [1, 1]} : vector<8x512xf32> to vector<8x128xf32>
    %447 = arith.negf %446 : vector<8x128xf32>
    %448 = math.exp %447 : vector<8x128xf32>
    %cst_105 = arith.constant 1.000000e+00 : f32
    %449 = vector.broadcast %cst_105 : f32 to vector<8x128xf32>
    %450 = arith.addf %449, %448 : vector<8x128xf32>
    %451 = arith.divf %449, %450 : vector<8x128xf32>
    %452 = vector.extract_strided_slice %439 {offsets = [0, 256], sizes = [8, 128], strides = [1, 1]} : vector<8x512xf32> to vector<8x128xf32>
    %453 = math.tanh %452 : vector<8x128xf32>
    %454 = vector.extract_strided_slice %439 {offsets = [0, 384], sizes = [8, 128], strides = [1, 1]} : vector<8x512xf32> to vector<8x128xf32>
    %455 = arith.negf %454 : vector<8x128xf32>
    %456 = math.exp %455 : vector<8x128xf32>
    %cst_106 = arith.constant 1.000000e+00 : f32
    %457 = vector.broadcast %cst_106 : f32 to vector<8x128xf32>
    %458 = arith.addf %457, %456 : vector<8x128xf32>
    %459 = arith.divf %457, %458 : vector<8x128xf32>
    %460 = arith.mulf %451, %398 : vector<8x128xf32>
    %461 = arith.mulf %445, %453 : vector<8x128xf32>
    %462 = arith.addf %460, %461 : vector<8x128xf32>
    %463 = math.tanh %462 : vector<8x128xf32>
    %464 = arith.mulf %459, %463 : vector<8x128xf32>
    %465 = arith.index_cast %c6_i32 : i32 to index
    %c0_107 = arith.constant 0 : index
    %c0_108 = arith.constant 0 : index
    %466 = vector.load %arg20[%465, %c0_107, %c0_108] : memref<8x8x128xf32, #tpu.memory_space<vmem>>, vector<1x8x128xf32>
    %467 = vector.shape_cast %466 : vector<1x8x128xf32> to vector<8x128xf32>
    %468 = vector.shape_cast %464 : vector<8x128xf32> to vector<1x8x128xf32>
    tpu.vector_store %arg20[%465, %c0_107, %c0_108], %468 {strides = array<i32>} : memref<8x8x128xf32, #tpu.memory_space<vmem>>, vector<1x8x128xf32>,
    %c7_i32 = arith.constant 7 : i32
    %469 = arith.index_cast %c7_i32 : i32 to index
    %c0_109 = arith.constant 0 : index
    %c0_110 = arith.constant 0 : index
    %470 = vector.load %arg19[%469, %c0_109, %c0_110] : memref<8x8x512xf32, #tpu.memory_space<vmem>>, vector<1x8x512xf32>
    %471 = vector.shape_cast %470 : vector<1x8x512xf32> to vector<8x512xf32>
    %472 = arith.truncf %435 : vector<8x128xf32> to vector<8x128xbf16>
    %cst_111 = arith.constant dense<0.000000e+00> : vector<8x512xf32>
    %473 = tpu.matmul %472, %12, %cst_111 {dimension_numbers = #tpu.dot_dimension_numbers<[1], [0], [0], [1], [0, 0, 1, 1], [], []>} : vector<8x128xbf16>, vector<128x512xbf16>, vector<8x512xf32> -> vector<8x512xf32>
    %474 = arith.addf %471, %473 : vector<8x512xf32>
    %475 = vector.extract_strided_slice %474 {offsets = [0, 0], sizes = [8, 128], strides = [1, 1]} : vector<8x512xf32> to vector<8x128xf32>
    %476 = arith.negf %475 : vector<8x128xf32>
    %477 = math.exp %476 : vector<8x128xf32>
    %cst_112 = arith.constant 1.000000e+00 : f32
    %478 = vector.broadcast %cst_112 : f32 to vector<8x128xf32>
    %479 = arith.addf %478, %477 : vector<8x128xf32>
    %480 = arith.divf %478, %479 : vector<8x128xf32>
    %481 = vector.extract_strided_slice %474 {offsets = [0, 128], sizes = [8, 128], strides = [1, 1]} : vector<8x512xf32> to vector<8x128xf32>
    %482 = arith.negf %481 : vector<8x128xf32>
    %483 = math.exp %482 : vector<8x128xf32>
    %cst_113 = arith.constant 1.000000e+00 : f32
    %484 = vector.broadcast %cst_113 : f32 to vector<8x128xf32>
    %485 = arith.addf %484, %483 : vector<8x128xf32>
    %486 = arith.divf %484, %485 : vector<8x128xf32>
    %487 = vector.extract_strided_slice %474 {offsets = [0, 256], sizes = [8, 128], strides = [1, 1]} : vector<8x512xf32> to vector<8x128xf32>
    %488 = math.tanh %487 : vector<8x128xf32>
    %489 = vector.extract_strided_slice %474 {offsets = [0, 384], sizes = [8, 128], strides = [1, 1]} : vector<8x512xf32> to vector<8x128xf32>
    %490 = arith.negf %489 : vector<8x128xf32>
    %491 = math.exp %490 : vector<8x128xf32>
    %cst_114 = arith.constant 1.000000e+00 : f32
    %492 = vector.broadcast %cst_114 : f32 to vector<8x128xf32>
    %493 = arith.addf %492, %491 : vector<8x128xf32>
    %494 = arith.divf %492, %493 : vector<8x128xf32>
    %495 = arith.mulf %486, %433 : vector<8x128xf32>
    %496 = arith.mulf %480, %488 : vector<8x128xf32>
    %497 = arith.addf %495, %496 : vector<8x128xf32>
    %498 = math.tanh %497 : vector<8x128xf32>
    %499 = arith.mulf %494, %498 : vector<8x128xf32>
    %500 = tpu.concatenate %499, %464 in 1 : vector<8x128xf32>, vector<8x128xf32> -> vector<8x256xf32>
    %501 = arith.truncf %500 : vector<8x256xf32> to vector<8x256xbf16>
    %cst_115 = arith.constant dense<0.000000e+00> : vector<8x512xf32>
    %502 = tpu.matmul %501, %13, %cst_115 {dimension_numbers = #tpu.dot_dimension_numbers<[1], [0], [0], [1], [0, 0, 1, 1], [], []>} : vector<8x256xbf16>, vector<256x512xbf16>, vector<8x512xf32> -> vector<8x512xf32>
    %503 = arith.addf %502, %16 : vector<8x512xf32>
    %504 = vector.extract_strided_slice %503 {offsets = [0, 0], sizes = [8, 128], strides = [1, 1]} : vector<8x512xf32> to vector<8x128xf32>
    %505 = arith.negf %504 : vector<8x128xf32>
    %506 = math.exp %505 : vector<8x128xf32>
    %cst_116 = arith.constant 1.000000e+00 : f32
    %507 = vector.broadcast %cst_116 : f32 to vector<8x128xf32>
    %508 = arith.addf %507, %506 : vector<8x128xf32>
    %509 = arith.divf %507, %508 : vector<8x128xf32>
    %510 = vector.extract_strided_slice %503 {offsets = [0, 128], sizes = [8, 128], strides = [1, 1]} : vector<8x512xf32> to vector<8x128xf32>
    %511 = arith.negf %510 : vector<8x128xf32>
    %512 = math.exp %511 : vector<8x128xf32>
    %cst_117 = arith.constant 1.000000e+00 : f32
    %513 = vector.broadcast %cst_117 : f32 to vector<8x128xf32>
    %514 = arith.addf %513, %512 : vector<8x128xf32>
    %515 = arith.divf %513, %514 : vector<8x128xf32>
    %516 = vector.extract_strided_slice %503 {offsets = [0, 256], sizes = [8, 128], strides = [1, 1]} : vector<8x512xf32> to vector<8x128xf32>
    %517 = math.tanh %516 : vector<8x128xf32>
    %518 = vector.extract_strided_slice %503 {offsets = [0, 384], sizes = [8, 128], strides = [1, 1]} : vector<8x512xf32> to vector<8x128xf32>
    %519 = arith.negf %518 : vector<8x128xf32>
    %520 = math.exp %519 : vector<8x128xf32>
    %cst_118 = arith.constant 1.000000e+00 : f32
    %521 = vector.broadcast %cst_118 : f32 to vector<8x128xf32>
    %522 = arith.addf %521, %520 : vector<8x128xf32>
    %523 = arith.divf %521, %522 : vector<8x128xf32>
    %524 = arith.mulf %515, %462 : vector<8x128xf32>
    %525 = arith.mulf %509, %517 : vector<8x128xf32>
    %526 = arith.addf %524, %525 : vector<8x128xf32>
    %527 = math.tanh %526 : vector<8x128xf32>
    %528 = arith.mulf %523, %527 : vector<8x128xf32>
    %529 = arith.index_cast %c7_i32 : i32 to index
    %c0_119 = arith.constant 0 : index
    %c0_120 = arith.constant 0 : index
    %530 = vector.load %arg20[%529, %c0_119, %c0_120] : memref<8x8x128xf32, #tpu.memory_space<vmem>>, vector<1x8x128xf32>
    %531 = vector.shape_cast %530 : vector<1x8x128xf32> to vector<8x128xf32>
    %532 = vector.shape_cast %528 : vector<8x128xf32> to vector<1x8x128xf32>
    tpu.vector_store %arg20[%529, %c0_119, %c0_120], %532 {strides = array<i32>} : memref<8x8x128xf32, #tpu.memory_space<vmem>>, vector<1x8x128xf32>,
    %c8_i32 = arith.constant 8 : i32
    %c0_121 = arith.constant 0 : index
    %c0_122 = arith.constant 0 : index
    %533 = vector.load %arg15[%c0_121, %c0_122] : memref<8x128xf32, #tpu.memory_space<vmem>>, vector<8x128xf32>
    tpu.vector_store %arg15[%c0_121, %c0_122], %499 {strides = array<i32>} : memref<8x128xf32, #tpu.memory_space<vmem>>, vector<8x128xf32>,
    %c0_123 = arith.constant 0 : index
    %c0_124 = arith.constant 0 : index
    %534 = vector.load %arg16[%c0_123, %c0_124] : memref<8x128xf32, #tpu.memory_space<vmem>>, vector<8x128xf32>
    tpu.vector_store %arg16[%c0_123, %c0_124], %497 {strides = array<i32>} : memref<8x128xf32, #tpu.memory_space<vmem>>, vector<8x128xf32>,
    %c0_125 = arith.constant 0 : index
    %c0_126 = arith.constant 0 : index
    %535 = vector.load %arg17[%c0_125, %c0_126] : memref<8x128xf32, #tpu.memory_space<vmem>>, vector<8x128xf32>
    tpu.vector_store %arg17[%c0_125, %c0_126], %528 {strides = array<i32>} : memref<8x128xf32, #tpu.memory_space<vmem>>, vector<8x128xf32>,
    %c0_127 = arith.constant 0 : index
    %c0_128 = arith.constant 0 : index
    %536 = vector.load %arg18[%c0_127, %c0_128] : memref<8x128xf32, #tpu.memory_space<vmem>>, vector<8x128xf32>
    tpu.vector_store %arg18[%c0_127, %c0_128], %526 {strides = array<i32>} : memref<8x128xf32, #tpu.memory_space<vmem>>, vector<8x128xf32>,
    %c0_129 = arith.constant 0 : index
    %c0_130 = arith.constant 0 : index
    %c0_131 = arith.constant 0 : index
    %537 = vector.load %arg20[%c0_129, %c0_130, %c0_131] : memref<8x8x128xf32, #tpu.memory_space<vmem>>, vector<8x8x128xf32>
    %538 = vector.shape_cast %537 : vector<8x8x128xf32> to vector<64x128xf32>
    %539 = arith.truncf %538 : vector<64x128xf32> to vector<64x128xbf16>
    %c0_132 = arith.constant 0 : index
    %c0_133 = arith.constant 0 : index
    %540 = vector.load %arg8[%c0_132, %c0_133] : memref<128x128xbf16, #tpu.memory_space<vmem>>, vector<128x128xbf16>
    %cst_134 = arith.constant dense<0.000000e+00> : vector<64x128xf32>
    %541 = tpu.matmul %539, %540, %cst_134 {dimension_numbers = #tpu.dot_dimension_numbers<[1], [0], [0], [1], [0, 0, 1, 1], [], []>} : vector<64x128xbf16>, vector<128x128xbf16>, vector<64x128xf32> -> vector<64x128xf32>
    %c0_135 = arith.constant 0 : index
    %c0_136 = arith.constant 0 : index
    %542 = vector.load %arg9[%c0_135, %c0_136] : memref<1x128xf32, #tpu.memory_space<vmem>>, vector<1x128xf32>
    %543 = vector.broadcast %542 : vector<1x128xf32> to vector<64x128xf32>
    %544 = arith.addf %541, %543 : vector<64x128xf32>
    %cst_137 = arith.constant 0.000000e+00 : f32
    %545 = vector.broadcast %cst_137 : f32 to vector<64x128xf32>
    %546 = arith.maximumf %544, %545 : vector<64x128xf32>
    %547 = arith.truncf %546 : vector<64x128xf32> to vector<64x128xbf16>
    %c0_138 = arith.constant 0 : index
    %c0_139 = arith.constant 0 : index
    %548 = vector.load %arg10[%c0_138, %c0_139] : memref<128x128xbf16, #tpu.memory_space<vmem>>, vector<128x128xbf16>
    %cst_140 = arith.constant dense<0.000000e+00> : vector<64x128xf32>
    %549 = tpu.matmul %547, %548, %cst_140 {dimension_numbers = #tpu.dot_dimension_numbers<[1], [0], [0], [1], [0, 0, 1, 1], [], []>} : vector<64x128xbf16>, vector<128x128xbf16>, vector<64x128xf32> -> vector<64x128xf32>
    %c0_141 = arith.constant 0 : index
    %c0_142 = arith.constant 0 : index
    %550 = vector.load %arg11[%c0_141, %c0_142] : memref<1x128xf32, #tpu.memory_space<vmem>>, vector<1x128xf32>
    %551 = vector.broadcast %550 : vector<1x128xf32> to vector<64x128xf32>
    %552 = arith.addf %549, %551 : vector<64x128xf32>
    %cst_143 = arith.constant 0.000000e+00 : f32
    %553 = vector.broadcast %cst_143 : f32 to vector<64x128xf32>
    %554 = arith.maximumf %552, %553 : vector<64x128xf32>
    %555 = arith.truncf %554 : vector<64x128xf32> to vector<64x128xbf16>
    %c0_144 = arith.constant 0 : index
    %c0_145 = arith.constant 0 : index
    %556 = vector.load %arg12[%c0_144, %c0_145] : memref<128x128xbf16, #tpu.memory_space<vmem>>, vector<128x128xbf16>
    %cst_146 = arith.constant dense<0.000000e+00> : vector<64x128xf32>
    %557 = tpu.matmul %555, %556, %cst_146 {dimension_numbers = #tpu.dot_dimension_numbers<[1], [0], [0], [1], [0, 0, 1, 1], [], []>} : vector<64x128xbf16>, vector<128x128xbf16>, vector<64x128xf32> -> vector<64x128xf32>
    %c0_147 = arith.constant 0 : index
    %c0_148 = arith.constant 0 : index
    %558 = vector.load %arg13[%c0_147, %c0_148] : memref<1x128xf32, #tpu.memory_space<vmem>>, vector<1x128xf32>
    %559 = vector.broadcast %558 : vector<1x128xf32> to vector<64x128xf32>
    %560 = arith.addf %557, %559 : vector<64x128xf32>
    %561 = vector.shape_cast %560 : vector<64x128xf32> to vector<8x8x128xf32>
    %c0_149 = arith.constant 0 : index
    %c0_150 = arith.constant 0 : index
    %c0_151 = arith.constant 0 : index
    %562 = vector.load %arg14[%c0_149, %c0_150, %c0_151] : memref<8x8x128xf32, #tpu.memory_space<vmem>>, vector<8x8x128xf32>
    tpu.vector_store %arg14[%c0_149, %c0_150, %c0_151], %561 {strides = array<i32>} : memref<8x8x128xf32, #tpu.memory_space<vmem>>, vector<8x8x128xf32>,
    return
  }
  func.func @transform_0(%arg0: i32, %arg1: i32) -> (i32, i32, i32) {
    %c0_i32 = arith.constant 0 : i32
    %c0_i32_0 = arith.constant 0 : i32
    return %arg1, %arg0, %c0_i32 : i32, i32, i32
  }
  func.func @transform_1(%arg0: i32, %arg1: i32) -> (i32, i32) {
    %c0_i32 = arith.constant 0 : i32
    %c0_i32_0 = arith.constant 0 : i32
    %c0_i32_1 = arith.constant 0 : i32
    return %c0_i32, %c0_i32_0 : i32, i32
  }
  func.func @transform_2(%arg0: i32, %arg1: i32) -> (i32, i32) {
    %c0_i32 = arith.constant 0 : i32
    %c0_i32_0 = arith.constant 0 : i32
    %c0_i32_1 = arith.constant 0 : i32
    return %c0_i32, %c0_i32_0 : i32, i32
  }
  func.func @transform_3(%arg0: i32, %arg1: i32) -> (i32, i32) {
    %c0_i32 = arith.constant 0 : i32
    %c0_i32_0 = arith.constant 0 : i32
    %c0_i32_1 = arith.constant 0 : i32
    return %c0_i32, %c0_i32_0 : i32, i32
  }
  func.func @transform_4(%arg0: i32, %arg1: i32) -> (i32, i32) {
    %c0_i32 = arith.constant 0 : i32
    %c0_i32_0 = arith.constant 0 : i32
    %c0_i32_1 = arith.constant 0 : i32
    return %c0_i32, %c0_i32_0 : i32, i32
  }
  func.func @transform_5(%arg0: i32, %arg1: i32) -> (i32, i32) {
    %c0_i32 = arith.constant 0 : i32
    %c0_i32_0 = arith.constant 0 : i32
    %c0_i32_1 = arith.constant 0 : i32
    return %c0_i32, %c0_i32_0 : i32, i32
  }
  func.func @transform_6(%arg0: i32, %arg1: i32) -> (i32, i32) {
    %c0_i32 = arith.constant 0 : i32
    %c0_i32_0 = arith.constant 0 : i32
    %c0_i32_1 = arith.constant 0 : i32
    return %c0_i32, %c0_i32_0 : i32, i32
  }
  func.func @transform_7(%arg0: i32, %arg1: i32) -> (i32, i32) {
    %c0_i32 = arith.constant 0 : i32
    %c0_i32_0 = arith.constant 0 : i32
    %c0_i32_1 = arith.constant 0 : i32
    return %c0_i32, %c0_i32_0 : i32, i32
  }
  func.func @transform_8(%arg0: i32, %arg1: i32) -> (i32, i32) {
    %c0_i32 = arith.constant 0 : i32
    %c0_i32_0 = arith.constant 0 : i32
    %c0_i32_1 = arith.constant 0 : i32
    return %c0_i32, %c0_i32_0 : i32, i32
  }
  func.func @transform_9(%arg0: i32, %arg1: i32) -> (i32, i32) {
    %c0_i32 = arith.constant 0 : i32
    %c0_i32_0 = arith.constant 0 : i32
    %c0_i32_1 = arith.constant 0 : i32
    return %c0_i32, %c0_i32_0 : i32, i32
  }
  func.func @transform_10(%arg0: i32, %arg1: i32) -> (i32, i32) {
    %c0_i32 = arith.constant 0 : i32
    %c0_i32_0 = arith.constant 0 : i32
    %c0_i32_1 = arith.constant 0 : i32
    return %c0_i32, %c0_i32_0 : i32, i32
  }
  func.func @transform_11(%arg0: i32, %arg1: i32) -> (i32, i32) {
    %c0_i32 = arith.constant 0 : i32
    %c0_i32_0 = arith.constant 0 : i32
    %c0_i32_1 = arith.constant 0 : i32
    return %c0_i32, %c0_i32_0 : i32, i32
  }
  func.func @transform_12(%arg0: i32, %arg1: i32) -> (i32, i32, i32) {
    %c0_i32 = arith.constant 0 : i32
    %c0_i32_0 = arith.constant 0 : i32
    return %arg1, %arg0, %c0_i32 : i32, i32, i32
  }
}

</mosaic_0001>

<llo_original>
// kernel: tpu_custom_call.1
$region0: #{tpu_custom_call.1}
  #allocation0 [shape = 'u32[]', space=smem, size = 0x4, offset = 0x4, fixed_abs, tag = 'smem constant byte address 0x4 - core index']
  #allocation1 [shape = 'u32[144,128]{1,0:T(1,128)}', space=vmem, size = 0x12000, scoped, tag = 'internal scratch']
  #allocation2 [shape = 'f32[8,128]{1,0:T(8,128)}', space=vmem, size = 0x1000, scoped, tag = 'scratch operand']
  #allocation3 [shape = 'f32[8,128]{1,0:T(8,128)}', space=vmem, size = 0x1000, scoped, tag = 'scratch operand']
  #allocation4 [shape = 'f32[8,128]{1,0:T(8,128)}', space=vmem, size = 0x1000, scoped, tag = 'scratch operand']
  #allocation5 [shape = 'f32[8,128]{1,0:T(8,128)}', space=vmem, size = 0x1000, scoped, tag = 'scratch operand']
  #allocation6 [shape = 'f32[8,8,512]{2,1,0:T(8,128)}', space=vmem, size = 0x20000, scoped, tag = 'scratch operand']
  #allocation7 [shape = 'f32[8,8,128]{2,1,0:T(8,128)}', space=vmem, size = 0x8000, scoped, tag = 'scratch operand']
  %s0 = inlined_call_operand.hbm [shape: bf16[8,8,128], index: 0, kind: input, shape index: {}]
  %s1 = inlined_call_operand.hbm [shape: bf16[128,512], index: 1, kind: input, shape index: {}]
  %s2 = inlined_call_operand.vmem [shape: f32[1,512], index: 2, kind: input, shape index: {}]
  %s3 = inlined_call_operand.hbm [shape: bf16[128,512], index: 3, kind: input, shape index: {}]
  %s4 = inlined_call_operand.hbm [shape: bf16[256,512], index: 4, kind: input, shape index: {}]
  %s5 = inlined_call_operand.vmem [shape: f32[1,512], index: 5, kind: input, shape index: {}]
  %s6 = inlined_call_operand.hbm [shape: bf16[128,128], index: 6, kind: input, shape index: {}]
  %s7 = inlined_call_operand.vmem [shape: f32[1,128], index: 7, kind: input, shape index: {}]
  %s8 = inlined_call_operand.hbm [shape: bf16[128,128], index: 8, kind: input, shape index: {}]
  %s9 = inlined_call_operand.vmem [shape: f32[1,128], index: 9, kind: input, shape index: {}]
  %s10 = inlined_call_operand.hbm [shape: bf16[128,128], index: 10, kind: input, shape index: {}]
  %s11 = inlined_call_operand.vmem [shape: f32[1,128], index: 11, kind: input, shape index: {}]
  %s12 = inlined_call_operand.hbm [shape: f32[8,8,128], index: 12, kind: output, shape index: {}]
  %s13 = sld [smem:[#allocation0]]
  $region90: #{tpu_custom_call.1} parent=0
    _
  %s15 = ssub.s32 1, %s13
  %s16 = scalar_select 0, %s15, %s13
  $region1: #{tpu_custom_call.1} parent=0
    #allocation8 [shape = 'u8[16384]{0}', space=vmem, size = 0x4000, scoped, tag = 'input window, operand 0, single buffered']
    #allocation9 [shape = 's32[1]{0}', space=sflag, size = 0x4, scoped, tag = 'scoped memory for tpu_custom_call.1']
    #allocation10 [shape = 's32[1]{0}', space=sflag, size = 0x4, scoped, tag = 'scoped memory for tpu_custom_call.1']
    #allocation11 [shape = 'u8[131072]{0}', space=vmem, size = 0x20000, scoped, tag = 'input window, operand 1, single buffered']
    #allocation12 [shape = 's32[1]{0}', space=sflag, size = 0x4, scoped, tag = 'scoped memory for tpu_custom_call.1']
    #allocation13 [shape = 'u8[131072]{0}', space=vmem, size = 0x20000, scoped, tag = 'input window, operand 3, single buffered']
    #allocation14 [shape = 'u8[262144]{0}', space=vmem, size = 0x40000, scoped, tag = 'input window, operand 4, single buffered']
    #allocation15 [shape = 's32[1]{0}', space=sflag, size = 0x4, scoped, tag = 'scoped memory for tpu_custom_call.1']
    #allocation16 [shape = 'u8[32768]{0}', space=vmem, size = 0x8000, scoped, tag = 'input window, operand 6, single buffered']
    #allocation17 [shape = 'u8[32768]{0}', space=vmem, size = 0x8000, scoped, tag = 'input window, operand 8, single buffered']
    #allocation18 [shape = 's32[1]{0}', space=sflag, size = 0x4, scoped, tag = 'scoped memory for tpu_custom_call.1']
    #allocation19 [shape = 'u8[32768]{0}', space=vmem, size = 0x8000, scoped, tag = 'input window, operand 10, single buffered']
    #allocation20 [shape = 'u8[32768]{0}', space=vmem, size = 0x8000, scoped, tag = 'output window, operand 0, single buffered']
    %17 = vsyncpa [#allocation9], 0
    %18 = vsyncpa [#allocation12], 0
    %19 = vsyncpa [#allocation15], 0
    %20 = vsyncpa [#allocation18], 0
    %21 = vsyncpa [#allocation10], 0
    // Predicated region
    $region2: #{tpu_custom_call.1} parent=1 // pred_check
      _
    $region3: #{tpu_custom_call.1} parent=1 // pred_check_branch
      %23 = sbr.rel (0) target = $region5
    $region4: #{tpu_custom_call.1} parent=1 // pred_region
      %s25 = ssub.s32 512, 512
      %26 = vsyncadd [#allocation9], %s25
      %s27 = sshll.u32 [#allocation8], 4
      %s28 = int_to_ptr.vmem [resolvable:$true] %s27
      %33 = dma.hbm_to_vmem [thread:$0]  %s0, 512, %s28, [#allocation9], 64, 64, 4
    $region5: #{tpu_custom_call.1} parent=1 // pred_fallthru
      _
    // Predicated region
    $region6: #{tpu_custom_call.1} parent=1 // pred_check
      _
    $region7: #{tpu_custom_call.1} parent=1 // pred_check_branch
      %35 = sbr.rel (0) target = $region9
    $region8: #{tpu_custom_call.1} parent=1 // pred_region
      %s37 = ssub.s32 4096, 4096
      %38 = vsyncadd [#allocation12], %s37
      %s39 = sshll.u32 [#allocation11], 4
      %s40 = int_to_ptr.vmem [resolvable:$true] %s39
      %45 = dma.hbm_to_vmem [thread:$0]  %s1, 4096, %s40, [#allocation12], 256, 256, 16
    $region9: #{tpu_custom_call.1} parent=1 // pred_fallthru
      _
    // Predicated region
    $region10: #{tpu_custom_call.1} parent=1 // pred_check
      _
    $region11: #{tpu_custom_call.1} parent=1 // pred_check_branch
      %47 = sbr.rel (0) target = $region13
    $region12: #{tpu_custom_call.1} parent=1 // pred_region
      _
    $region13: #{tpu_custom_call.1} parent=1 // pred_fallthru
      _
    // Predicated region
    $region14: #{tpu_custom_call.1} parent=1 // pred_check
      _
    $region15: #{tpu_custom_call.1} parent=1 // pred_check_branch
      %49 = sbr.rel (0) target = $region17
    $region16: #{tpu_custom_call.1} parent=1 // pred_region
      %s51 = ssub.s32 4096, 4096
      %52 = vsyncadd [#allocation12], %s51
      %s53 = sshll.u32 [#allocation13], 4
      %s54 = int_to_ptr.vmem [resolvable:$true] %s53
      %59 = dma.hbm_to_vmem [thread:$0]  %s3, 4096, %s54, [#allocation12], 256, 256, 16
    $region17: #{tpu_custom_call.1} parent=1 // pred_fallthru
      _
    // Predicated region
    $region18: #{tpu_custom_call.1} parent=1 // pred_check
      _
    $region19: #{tpu_custom_call.1} parent=1 // pred_check_branch
      %61 = sbr.rel (0) target = $region21
    $region20: #{tpu_custom_call.1} parent=1 // pred_region
      %s63 = ssub.s32 8192, 8192
      %64 = vsyncadd [#allocation15], %s63
      %s65 = sshll.u32 [#allocation14], 4
      %s66 = int_to_ptr.vmem [resolvable:$true] %s65
      %71 = dma.hbm_to_vmem [thread:$0]  %s4, 8192, %s66, [#allocation15], 256, 256, 16
    $region21: #{tpu_custom_call.1} parent=1 // pred_fallthru
      _
    // Predicated region
    $region22: #{tpu_custom_call.1} parent=1 // pred_check
      _
    $region23: #{tpu_custom_call.1} parent=1 // pred_check_branch
      %73 = sbr.rel (0) target = $region25
    $region24: #{tpu_custom_call.1} parent=1 // pred_region
      _
    $region25: #{tpu_custom_call.1} parent=1 // pred_fallthru
      _
    // Predicated region
    $region26: #{tpu_custom_call.1} parent=1 // pred_check
      _
    $region27: #{tpu_custom_call.1} parent=1 // pred_check_branch
      %75 = sbr.rel (0) target = $region29
    $region28: #{tpu_custom_call.1} parent=1 // pred_region
      %s77 = ssub.s32 1024, 1024
      %78 = vsyncadd [#allocation15], %s77
      %s79 = sshll.u32 [#allocation16], 4
      %s80 = int_to_ptr.vmem [resolvable:$true] %s79
      %85 = dma.hbm_to_vmem [thread:$0]  %s6, 1024, %s80, [#allocation15], 64, 64, 4
    $region29: #{tpu_custom_call.1} parent=1 // pred_fallthru
      _
    // Predicated region
    $region30: #{tpu_custom_call.1} parent=1 // pred_check
      _
    $region31: #{tpu_custom_call.1} parent=1 // pred_check_branch
      %87 = sbr.rel (0) target = $region33
    $region32: #{tpu_custom_call.1} parent=1 // pred_region
      _
    $region33: #{tpu_custom_call.1} parent=1 // pred_fallthru
      _
    // Predicated region
    $region34: #{tpu_custom_call.1} parent=1 // pred_check
      _
    $region35: #{tpu_custom_call.1} parent=1 // pred_check_branch
      %89 = sbr.rel (0) target = $region37
    $region36: #{tpu_custom_call.1} parent=1 // pred_region
      %s91 = ssub.s32 1024, 1024
      %92 = vsyncadd [#allocation18], %s91
      %s93 = sshll.u32 [#allocation17], 4
      %s94 = int_to_ptr.vmem [resolvable:$true] %s93
      %99 = dma.hbm_to_vmem [thread:$0]  %s8, 1024, %s94, [#allocation18], 64, 64, 4
    $region37: #{tpu_custom_call.1} parent=1 // pred_fallthru
      _
    // Predicated region
    $region38: #{tpu_custom_call.1} parent=1 // pred_check
      _
    $region39: #{tpu_custom_call.1} parent=1 // pred_check_branch
      %101 = sbr.rel (0) target = $region41
    $region40: #{tpu_custom_call.1} parent=1 // pred_region
      _
    $region41: #{tpu_custom_call.1} parent=1 // pred_fallthru
      _
    // Predicated region
    $region42: #{tpu_custom_call.1} parent=1 // pred_check
      _
    $region43: #{tpu_custom_call.1} parent=1 // pred_check_branch
      %103 = sbr.rel (0) target = $region45
    $region44: #{tpu_custom_call.1} parent=1 // pred_region
      %s105 = ssub.s32 1024, 1024
      %106 = vsyncadd [#allocation18], %s105
      %s107 = sshll.u32 [#allocation19], 4
      %s108 = int_to_ptr.vmem [resolvable:$true] %s107
      %113 = dma.hbm_to_vmem [thread:$0]  %s10, 1024, %s108, [#allocation18], 64, 64, 4
    $region45: #{tpu_custom_call.1} parent=1 // pred_fallthru
      _
    // Predicated region
    $region46: #{tpu_custom_call.1} parent=1 // pred_check
      _
    $region47: #{tpu_custom_call.1} parent=1 // pred_check_branch
      %115 = sbr.rel (0) target = $region49
    $region48: #{tpu_custom_call.1} parent=1 // pred_region
      _
    $region49: #{tpu_custom_call.1} parent=1 // pred_fallthru
      _
    // Predicated region
    $region50: #{tpu_custom_call.1} parent=1 // pred_check
      _
    $region51: #{tpu_custom_call.1} parent=1 // pred_check_branch
      %117 = sbr.rel (0) target = $region53
    $region52: #{tpu_custom_call.1} parent=1 // pred_region
      %118 = dma.done [#allocation9], 512
    $region53: #{tpu_custom_call.1} parent=1 // pred_fallthru
      _
    // Predicated region
    $region54: #{tpu_custom_call.1} parent=1 // pred_check
      _
    $region55: #{tpu_custom_call.1} parent=1 // pred_check_branch
      %120 = sbr.rel (0) target = $region57
    $region56: #{tpu_custom_call.1} parent=1 // pred_region
      %121 = dma.done [#allocation12], 4096
    $region57: #{tpu_custom_call.1} parent=1 // pred_fallthru
      _
    // Predicated region
    $region58: #{tpu_custom_call.1} parent=1 // pred_check
      _
    $region59: #{tpu_custom_call.1} parent=1 // pred_check_branch
      %123 = sbr.rel (0) target = $region61
    $region60: #{tpu_custom_call.1} parent=1 // pred_region
      %124 = dma.done [#allocation12], 4096
    $region61: #{tpu_custom_call.1} parent=1 // pred_fallthru
      _
    // Predicated region
    $region62: #{tpu_custom_call.1} parent=1 // pred_check
      _
    $region63: #{tpu_custom_call.1} parent=1 // pred_check_branch
      %126 = sbr.rel (0) target = $region65
    $region64: #{tpu_custom_call.1} parent=1 // pred_region
      %127 = dma.done [#allocation15], 8192
    $region65: #{tpu_custom_call.1} parent=1 // pred_fallthru
      _
    // Predicated region
    $region66: #{tpu_custom_call.1} parent=1 // pred_check
      _
    $region67: #{tpu_custom_call.1} parent=1 // pred_check_branch
      %129 = sbr.rel (0) target = $region69
    $region68: #{tpu_custom_call.1} parent=1 // pred_region
      %130 = dma.done [#allocation15], 1024
    $region69: #{tpu_custom_call.1} parent=1 // pred_fallthru
      _
    // Predicated region
    $region70: #{tpu_custom_call.1} parent=1 // pred_check
      _
    $region71: #{tpu_custom_call.1} parent=1 // pred_check_branch
      %132 = sbr.rel (0) target = $region73
    $region72: #{tpu_custom_call.1} parent=1 // pred_region
      %133 = dma.done [#allocation18], 1024
    $region73: #{tpu_custom_call.1} parent=1 // pred_fallthru
      _
    // Predicated region
    $region74: #{tpu_custom_call.1} parent=1 // pred_check
      _
    $region75: #{tpu_custom_call.1} parent=1 // pred_check_branch
      %135 = sbr.rel (0) target = $region77
    $region76: #{tpu_custom_call.1} parent=1 // pred_region
      %136 = dma.done [#allocation18], 1024
    $region77: #{tpu_custom_call.1} parent=1 // pred_fallthru
      _
    %p138 = scmp.eq.s32.totalorder 0, 0
    // Predicated region
    $region78: #{tpu_custom_call.1} parent=1 // pred_check
      %p139 = pneg %p138
    $region79: #{tpu_custom_call.1} parent=1 // pred_check_branch
      %141 = sbr.rel (%p139) target = $region81
    $region80: #{tpu_custom_call.1} parent=1 // pred_region
      %142 = vst [vmem:[#allocation2] sm:$0xff] 0.0
      %143 = vst [vmem:[#allocation3] sm:$0xff] 0.0
      %144 = vst [vmem:[#allocation4] sm:$0xff] 0.0
      %145 = vst [vmem:[#allocation5] sm:$0xff] 0.0
    $region81: #{tpu_custom_call.1} parent=1 // pred_fallthru
      _
    %v146 = vld [vmem:[#allocation8] sm:$0xf]
    %v147 = vld [vmem:[#allocation8 + $0x4] sm:$0xf]
    %v148 = vld [vmem:[#allocation8 + $0x8] sm:$0xf]
    %v149 = vld [vmem:[#allocation8 + $0xc] sm:$0xf]
    %v150 = vld [vmem:[#allocation8 + $0x10] sm:$0xf]
    %v151 = vld [vmem:[#allocation8 + $0x14] sm:$0xf]
    %v152 = vld [vmem:[#allocation8 + $0x18] sm:$0xf]
    %v153 = vld [vmem:[#allocation8 + $0x1c] sm:$0xf]
    %v154 = vld [vmem:[#allocation11] sm:$0xff]
    %v155 = vld [vmem:[#allocation11 + $0x8] sm:$0xff]
    %v156 = vld [vmem:[#allocation11 + $0x10] sm:$0xff]
    %v157 = vld [vmem:[#allocation11 + $0x18] sm:$0xff]
    %v158 = vld [vmem:[#allocation11 + $0x20] sm:$0xff]
    %v159 = vld [vmem:[#allocation11 + $0x28] sm:$0xff]
    %v160 = vld [vmem:[#allocation11 + $0x30] sm:$0xff]
    %v161 = vld [vmem:[#allocation11 + $0x38] sm:$0xff]
    %v162 = vld [vmem:[#allocation11 + $0x40] sm:$0xff]
    %v163 = vld [vmem:[#allocation11 + $0x48] sm:$0xff]
    %v164 = vld [vmem:[#allocation11 + $0x50] sm:$0xff]
    %v165 = vld [vmem:[#allocation11 + $0x58] sm:$0xff]
    %v166 = vld [vmem:[#allocation11 + $0x60] sm:$0xff]
    %v167 = vld [vmem:[#allocation11 + $0x68] sm:$0xff]
    %v168 = vld [vmem:[#allocation11 + $0x70] sm:$0xff]
    %v169 = vld [vmem:[#allocation11 + $0x78] sm:$0xff]
    %v170 = vld [vmem:[#allocation11 + $0x80] sm:$0xff]
    %v171 = vld [vmem:[#allocation11 + $0x88] sm:$0xff]
    %v172 = vld [vmem:[#allocation11 + $0x90] sm:$0xff]
    %v173 = vld [vmem:[#allocation11 + $0x98] sm:$0xff]
    %v174 = vld [vmem:[#allocation11 + $0xa0] sm:$0xff]
    %v175 = vld [vmem:[#allocation11 + $0xa8] sm:$0xff]
    %v176 = vld [vmem:[#allocation11 + $0xb0] sm:$0xff]
    %v177 = vld [vmem:[#allocation11 + $0xb8] sm:$0xff]
    %v178 = vld [vmem:[#allocation11 + $0xc0] sm:$0xff]
    %v179 = vld [vmem:[#allocation11 + $0xc8] sm:$0xff]
    %v180 = vld [vmem:[#allocation11 + $0xd0] sm:$0xff]
    %v181 = vld [vmem:[#allocation11 + $0xd8] sm:$0xff]
    %v182 = vld [vmem:[#allocation11 + $0xe0] sm:$0xff]
    %v183 = vld [vmem:[#allocation11 + $0xe8] sm:$0xff]
    %v184 = vld [vmem:[#allocation11 + $0xf0] sm:$0xff]
    %v185 = vld [vmem:[#allocation11 + $0xf8] sm:$0xff]
    %v186 = vld [vmem:[%s2] sm:$0xf]
    %v188 = vlaneseq
    %v189 = vshrl.u32 %v188, 7
    %v190 = vsub.s32 0, %v189
    %v191 = vrot.slane %v186, %v190
    %v192 = vlaneseq
    %v193 = vshrl.u32 %v192, 7
    %v194 = vsub.s32 1, %v193
    %v195 = vrot.slane %v186, %v194
    %v196 = vlaneseq
    %v197 = vshrl.u32 %v196, 7
    %v198 = vsub.s32 2, %v197
    %v199 = vrot.slane %v186, %v198
    %v200 = vlaneseq
    %v201 = vshrl.u32 %v200, 7
    %v202 = vsub.s32 3, %v201
    %v203 = vrot.slane %v186, %v202
    %v216 = vunpack.c.l.b16 %v146
    %v217 = vunpack.c.l.b16 %v147
    %v218 = vunpack.c.l.b16 %v148
    %v219 = vunpack.c.l.b16 %v149
    %v220 = vunpack.c.l.b16 %v150
    %v221 = vunpack.c.l.b16 %v151
    %v222 = vunpack.c.l.b16 %v152
    %v223 = vunpack.c.l.b16 %v153
    %v224 = vpack.c.b16 %v217, %v216
    %v225 = vpack.c.b16 %v219, %v218
    %v226 = vpack.c.b16 %v221, %v220
    %v227 = vpack.c.b16 %v223, %v222
    %v264 = vunpack.c.l.b16 %v154
    %v265 = vunpack.c.h.b16 %v154
    %v266 = vunpack.c.l.b16 %v155
    %v267 = vunpack.c.h.b16 %v155
    %v268 = vunpack.c.l.b16 %v156
    %v269 = vunpack.c.h.b16 %v156
    %v270 = vunpack.c.l.b16 %v157
    %v271 = vunpack.c.h.b16 %v157
    %v272 = vunpack.c.l.b16 %v158
    %v273 = vunpack.c.h.b16 %v158
    %v274 = vunpack.c.l.b16 %v159
    %v275 = vunpack.c.h.b16 %v159
    %v276 = vunpack.c.l.b16 %v160
    %v277 = vunpack.c.h.b16 %v160
    %v278 = vunpack.c.l.b16 %v161
    %v279 = vunpack.c.h.b16 %v161
    %v280 = vunpack.c.l.b16 %v162
    %v281 = vunpack.c.h.b16 %v162
    %v282 = vunpack.c.l.b16 %v163
    %v283 = vunpack.c.h.b16 %v163
    %v284 = vunpack.c.l.b16 %v164
    %v285 = vunpack.c.h.b16 %v164
    %v286 = vunpack.c.l.b16 %v165
    %v287 = vunpack.c.h.b16 %v165
    %v288 = vunpack.c.l.b16 %v166
    %v289 = vunpack.c.h.b16 %v166
    %v290 = vunpack.c.l.b16 %v167
    %v291 = vunpack.c.h.b16 %v167
    %v292 = vunpack.c.l.b16 %v168
    %v293 = vunpack.c.h.b16 %v168
    %v294 = vunpack.c.l.b16 %v169
    %v295 = vunpack.c.h.b16 %v169
    %v296 = vunpack.c.l.b16 %v170
    %v297 = vunpack.c.h.b16 %v170
    %v298 = vunpack.c.l.b16 %v171
    %v299 = vunpack.c.h.b16 %v171
    %v300 = vunpack.c.l.b16 %v172
    %v301 = vunpack.c.h.b16 %v172
    %v302 = vunpack.c.l.b16 %v173
    %v303 = vunpack.c.h.b16 %v173
    %v304 = vunpack.c.l.b16 %v174
    %v305 = vunpack.c.h.b16 %v174
    %v306 = vunpack.c.l.b16 %v175
    %v307 = vunpack.c.h.b16 %v175
    %v308 = vunpack.c.l.b16 %v176
    %v309 = vunpack.c.h.b16 %v176
    %v310 = vunpack.c.l.b16 %v177
    %v311 = vunpack.c.h.b16 %v177
    %v312 = vunpack.c.l.b16 %v178
    %v313 = vunpack.c.h.b16 %v178
    %v314 = vunpack.c.l.b16 %v179
    %v315 = vunpack.c.h.b16 %v179
    %v316 = vunpack.c.l.b16 %v180
    %v317 = vunpack.c.h.b16 %v180
    %v318 = vunpack.c.l.b16 %v181
    %v319 = vunpack.c.h.b16 %v181
    %v320 = vunpack.c.l.b16 %v182
    %v321 = vunpack.c.h.b16 %v182
    %v322 = vunpack.c.l.b16 %v183
    %v323 = vunpack.c.h.b16 %v183
    %v324 = vunpack.c.l.b16 %v184
    %v325 = vunpack.c.h.b16 %v184
    %v326 = vunpack.c.l.b16 %v185
    %v327 = vunpack.c.h.b16 %v185
    %v328 = vpack.c.b16 %v268, %v264
    %v329 = vpack.c.b16 %v269, %v265
    %v330 = vpack.c.b16 %v270, %v266
    %v331 = vpack.c.b16 %v271, %v267
    %v332 = vpack.c.b16 %v276, %v272
    %v333 = vpack.c.b16 %v277, %v273
    %v334 = vpack.c.b16 %v278, %v274
    %v335 = vpack.c.b16 %v279, %v275
    %v336 = vpack.c.b16 %v284, %v280
    %v337 = vpack.c.b16 %v285, %v281
    %v338 = vpack.c.b16 %v286, %v282
    %v339 = vpack.c.b16 %v287, %v283
    %v340 = vpack.c.b16 %v292, %v288
    %v341 = vpack.c.b16 %v293, %v289
    %v342 = vpack.c.b16 %v294, %v290
    %v343 = vpack.c.b16 %v295, %v291
    %v344 = vpack.c.b16 %v300, %v296
    %v345 = vpack.c.b16 %v301, %v297
    %v346 = vpack.c.b16 %v302, %v298
    %v347 = vpack.c.b16 %v303, %v299
    %v348 = vpack.c.b16 %v308, %v304
    %v349 = vpack.c.b16 %v309, %v305
    %v350 = vpack.c.b16 %v310, %v306
    %v351 = vpack.c.b16 %v311, %v307
    %v352 = vpack.c.b16 %v316, %v312
    %v353 = vpack.c.b16 %v317, %v313
    %v354 = vpack.c.b16 %v318, %v314
    %v355 = vpack.c.b16 %v319, %v315
    %v356 = vpack.c.b16 %v324, %v320
    %v357 = vpack.c.b16 %v325, %v321
    %v358 = vpack.c.b16 %v326, %v322
    %v359 = vpack.c.b16 %v327, %v323
    %392 = vmatprep.subr.bf16.mxu0 %v329
    %393 = vmatpush1.bf16.msra.mxu0 %v328
    %394 = vmatprep.subr.bf16.mxu0 %v333
    %395 = vmatpush1.bf16.msra.mxu0 %v332
    %396 = vmatprep.subr.bf16.mxu0 %v337
    %397 = vmatpush1.bf16.msra.mxu0 %v336
    %398 = vmatprep.subr.bf16.mxu0 %v341
    %399 = vmatpush1.bf16.msra.mxu0 %v340
    %400 = vmatprep.subr.bf16.mxu0 %v345
    %401 = vmatpush1.bf16.msra.mxu0 %v344
    %402 = vmatprep.subr.bf16.mxu0 %v349
    %403 = vmatpush1.bf16.msra.mxu0 %v348
    %404 = vmatprep.subr.bf16.mxu0 %v353
    %405 = vmatpush1.bf16.msra.mxu0 %v352
    %406 = vmatprep.subr.bf16.mxu0 %v357
    %407 = vmatpush1.bf16.msra.mxu0 %v356
    %408 = vmatprep.subr.bf16.mxu0 0
    %409 = vmatpush1.bf16.msra.mxu0 0
    %410 = vmatprep.subr.bf16.mxu0 0
    %411 = vmatpush1.bf16.msra.mxu0 0
    %412 = vmatprep.subr.bf16.mxu0 0
    %413 = vmatpush1.bf16.msra.mxu0 0
    %414 = vmatprep.subr.bf16.mxu0 0
    %415 = vmatpush1.bf16.msra.mxu0 0
    %416 = vmatprep.subr.bf16.mxu0 0
    %417 = vmatpush1.bf16.msra.mxu0 0
    %418 = vmatprep.subr.bf16.mxu0 0
    %419 = vmatpush1.bf16.msra.mxu0 0
    %420 = vmatprep.subr.bf16.mxu0 0
    %421 = vmatpush1.bf16.msra.mxu0 0
    %422 = vmatprep.subr.bf16.mxu0 0
    %423 = vmatpush1.bf16.msra.mxu0 0
    %424 = vmatprep.mubr.bf16.mxu0 0
    %425 = vmatmul.mubr.bf16.gmra.mrb[0].mxu0 %v224
    %v426 = vpop.f32.mrb[0].mxu0
    %v427 = vadd.f32 %v191, %v426
    %v428 = vpop.f32.mrb[0].mxu0
    %v429 = vadd.f32 %v195, %v428
    %v430 = vpop.f32.mrb[0].mxu0
    %v431 = vadd.f32 %v191, %v430
    %v432 = vpop.f32.mrb[0].mxu0
    %v433 = vadd.f32 %v195, %v432
    %434 = vmatprep.mubr.bf16.mxu0 0
    %435 = vmatmul.mubr.bf16.gmra.mrb[0].mxu0 %v225
    %v436 = vpop.f32.mrb[0].mxu0
    %v437 = vadd.f32 %v191, %v436
    %v438 = vpop.f32.mrb[0].mxu0
    %v439 = vadd.f32 %v195, %v438
    %v440 = vpop.f32.mrb[0].mxu0
    %v441 = vadd.f32 %v191, %v440
    %v442 = vpop.f32.mrb[0].mxu0
    %v443 = vadd.f32 %v195, %v442
    %444 = vmatprep.mubr.bf16.mxu0 0
    %445 = vmatmul.mubr.bf16.gmra.mrb[0].mxu0 %v226
    %v446 = vpop.f32.mrb[0].mxu0
    %v447 = vadd.f32 %v191, %v446
    %v448 = vpop.f32.mrb[0].mxu0
    %v449 = vadd.f32 %v195, %v448
    %v450 = vpop.f32.mrb[0].mxu0
    %v451 = vadd.f32 %v191, %v450
    %v452 = vpop.f32.mrb[0].mxu0
    %v453 = vadd.f32 %v195, %v452
    %454 = vmatprep.mubr.bf16.mxu0 0
    %455 = vmatmul.mubr.bf16.gmra.mrb[0].mxu0 %v227
    %v456 = vpop.f32.mrb[0].mxu0
    %v457 = vadd.f32 %v191, %v456
    %v458 = vpop.f32.mrb[0].mxu0
    %v459 = vadd.f32 %v195, %v458
    %v460 = vpop.f32.mrb[0].mxu0
    %v461 = vadd.f32 %v191, %v460
    %v462 = vpop.f32.mrb[0].mxu0
    %v463 = vadd.f32 %v195, %v462
    %464 = vdwg.mxu0
    %465 = vmatprep.subr.bf16.mxu0 %v331
    %466 = vmatpush1.bf16.msra.mxu0 %v330
    %467 = vmatprep.subr.bf16.mxu0 %v335
    %468 = vmatpush1.bf16.msra.mxu0 %v334
    %469 = vmatprep.subr.bf16.mxu0 %v339
    %470 = vmatpush1.bf16.msra.mxu0 %v338
    %471 = vmatprep.subr.bf16.mxu0 %v343
    %472 = vmatpush1.bf16.msra.mxu0 %v342
    %473 = vmatprep.subr.bf16.mxu0 %v347
    %474 = vmatpush1.bf16.msra.mxu0 %v346
    %475 = vmatprep.subr.bf16.mxu0 %v351
    %476 = vmatpush1.bf16.msra.mxu0 %v350
    %477 = vmatprep.subr.bf16.mxu0 %v355
    %478 = vmatpush1.bf16.msra.mxu0 %v354
    %479 = vmatprep.subr.bf16.mxu0 %v359
    %480 = vmatpush1.bf16.msra.mxu0 %v358
    %481 = vmatprep.subr.bf16.mxu0 0
    %482 = vmatpush1.bf16.msra.mxu0 0
    %483 = vmatprep.subr.bf16.mxu0 0
    %484 = vmatpush1.bf16.msra.mxu0 0
    %485 = vmatprep.subr.bf16.mxu0 0
    %486 = vmatpush1.bf16.msra.mxu0 0
    %487 = vmatprep.subr.bf16.mxu0 0
    %488 = vmatpush1.bf16.msra.mxu0 0
    %489 = vmatprep.subr.bf16.mxu0 0
    %490 = vmatpush1.bf16.msra.mxu0 0
    %491 = vmatprep.subr.bf16.mxu0 0
    %492 = vmatpush1.bf16.msra.mxu0 0
    %493 = vmatprep.subr.bf16.mxu0 0
    %494 = vmatpush1.bf16.msra.mxu0 0
    %495 = vmatprep.subr.bf16.mxu0 0
    %496 = vmatpush1.bf16.msra.mxu0 0
    %497 = vmatprep.mubr.bf16.mxu0 0
    %498 = vmatmul.mubr.bf16.gmra.mrb[0].mxu0 %v224
    %v499 = vpop.f32.mrb[0].mxu0
    %v500 = vadd.f32 %v199, %v499
    %v501 = vpop.f32.mrb[0].mxu0
    %v502 = vadd.f32 %v203, %v501
    %v503 = vpop.f32.mrb[0].mxu0
    %v504 = vadd.f32 %v199, %v503
    %v505 = vpop.f32.mrb[0].mxu0
    %v506 = vadd.f32 %v203, %v505
    %507 = vmatprep.mubr.bf16.mxu0 0
    %508 = vmatmul.mubr.bf16.gmra.mrb[0].mxu0 %v225
    %v509 = vpop.f32.mrb[0].mxu0
    %v510 = vadd.f32 %v199, %v509
    %v511 = vpop.f32.mrb[0].mxu0
    %v512 = vadd.f32 %v203, %v511
    %v513 = vpop.f32.mrb[0].mxu0
    %v514 = vadd.f32 %v199, %v513
    %v515 = vpop.f32.mrb[0].mxu0
    %v516 = vadd.f32 %v203, %v515
    %517 = vmatprep.mubr.bf16.mxu0 0
    %518 = vmatmul.mubr.bf16.gmra.mrb[0].mxu0 %v226
    %v519 = vpop.f32.mrb[0].mxu0
    %v520 = vadd.f32 %v199, %v519
    %v521 = vpop.f32.mrb[0].mxu0
    %v522 = vadd.f32 %v203, %v521
    %v523 = vpop.f32.mrb[0].mxu0
    %v524 = vadd.f32 %v199, %v523
    %v525 = vpop.f32.mrb[0].mxu0
    %v526 = vadd.f32 %v203, %v525
    %527 = vmatprep.mubr.bf16.mxu0 0
    %528 = vmatmul.mubr.bf16.gmra.mrb[0].mxu0 %v227
    %v529 = vpop.f32.mrb[0].mxu0
    %v530 = vadd.f32 %v199, %v529
    %v531 = vpop.f32.mrb[0].mxu0
    %v532 = vadd.f32 %v203, %v531
    %v533 = vpop.f32.mrb[0].mxu0
    %v534 = vadd.f32 %v199, %v533
    %v535 = vpop.f32.mrb[0].mxu0
    %v536 = vadd.f32 %v203, %v535
    %537 = vdwg.mxu0
    %538 = vst [vmem:[#allocation6] sm:$0xff] %v427
    %539 = vst [vmem:[#allocation6 + $0x8] sm:$0xff] %v429
    %540 = vst [vmem:[#allocation6 + $0x10] sm:$0xff] %v500
    %541 = vst [vmem:[#allocation6 + $0x18] sm:$0xff] %v502
    %542 = vst [vmem:[#allocation6 + $0x20] sm:$0xff] %v431
    %543 = vst [vmem:[#allocation6 + $0x28] sm:$0xff] %v433
    %544 = vst [vmem:[#allocation6 + $0x30] sm:$0xff] %v504
    %545 = vst [vmem:[#allocation6 + $0x38] sm:$0xff] %v506
    %546 = vst [vmem:[#allocation6 + $0x40] sm:$0xff] %v437
    %547 = vst [vmem:[#allocation6 + $0x48] sm:$0xff] %v439
    %548 = vst [vmem:[#allocation6 + $0x50] sm:$0xff] %v510
    %549 = vst [vmem:[#allocation6 + $0x58] sm:$0xff] %v512
    %550 = vst [vmem:[#allocation6 + $0x60] sm:$0xff] %v441
    %551 = vst [vmem:[#allocation6 + $0x68] sm:$0xff] %v443
    %552 = vst [vmem:[#allocation6 + $0x70] sm:$0xff] %v514
    %553 = vst [vmem:[#allocation6 + $0x78] sm:$0xff] %v516
    %554 = vst [vmem:[#allocation6 + $0x80] sm:$0xff] %v447
    %555 = vst [vmem:[#allocation6 + $0x88] sm:$0xff] %v449
    %556 = vst [vmem:[#allocation6 + $0x90] sm:$0xff] %v520
    %557 = vst [vmem:[#allocation6 + $0x98] sm:$0xff] %v522
    %558 = vst [vmem:[#allocation6 + $0xa0] sm:$0xff] %v451
    %559 = vst [vmem:[#allocation6 + $0xa8] sm:$0xff] %v453
    %560 = vst [vmem:[#allocation6 + $0xb0] sm:$0xff] %v524
    %561 = vst [vmem:[#allocation6 + $0xb8] sm:$0xff] %v526
    %562 = vst [vmem:[#allocation6 + $0xc0] sm:$0xff] %v457
    %563 = vst [vmem:[#allocation6 + $0xc8] sm:$0xff] %v459
    %564 = vst [vmem:[#allocation6 + $0xd0] sm:$0xff] %v530
    %565 = vst [vmem:[#allocation6 + $0xd8] sm:$0xff] %v532
    %566 = vst [vmem:[#allocation6 + $0xe0] sm:$0xff] %v461
    %567 = vst [vmem:[#allocation6 + $0xe8] sm:$0xff] %v463
    %568 = vst [vmem:[#allocation6 + $0xf0] sm:$0xff] %v534
    %569 = vst [vmem:[#allocation6 + $0xf8] sm:$0xff] %v536
    %v570 = vld [vmem:[#allocation13] sm:$0xff]
    %v571 = vld [vmem:[#allocation13 + $0x8] sm:$0xff]
    %v572 = vld [vmem:[#allocation13 + $0x10] sm:$0xff]
    %v573 = vld [vmem:[#allocation13 + $0x18] sm:$0xff]
    %v574 = vld [vmem:[#allocation13 + $0x20] sm:$0xff]
    %v575 = vld [vmem:[#allocation13 + $0x28] sm:$0xff]
    %v576 = vld [vmem:[#allocation13 + $0x30] sm:$0xff]
    %v577 = vld [vmem:[#allocation13 + $0x38] sm:$0xff]
    %v578 = vld [vmem:[#allocation13 + $0x40] sm:$0xff]
    %v579 = vld [vmem:[#allocation13 + $0x48] sm:$0xff]
    %v580 = vld [vmem:[#allocation13 + $0x50] sm:$0xff]
    %v581 = vld [vmem:[#allocation13 + $0x58] sm:$0xff]
    %v582 = vld [vmem:[#allocation13 + $0x60] sm:$0xff]
    %v583 = vld [vmem:[#allocation13 + $0x68] sm:$0xff]
    %v584 = vld [vmem:[#allocation13 + $0x70] sm:$0xff]
    %v585 = vld [vmem:[#allocation13 + $0x78] sm:$0xff]
    %v586 = vld [vmem:[#allocation13 + $0x80] sm:$0xff]
    %v587 = vld [vmem:[#allocation13 + $0x88] sm:$0xff]
    %v588 = vld [vmem:[#allocation13 + $0x90] sm:$0xff]
    %v589 = vld [vmem:[#allocation13 + $0x98] sm:$0xff]
    %v590 = vld [vmem:[#allocation13 + $0xa0] sm:$0xff]
    %v591 = vld [vmem:[#allocation13 + $0xa8] sm:$0xff]
    %v592 = vld [vmem:[#allocation13 + $0xb0] sm:$0xff]
    %v593 = vld [vmem:[#allocation13 + $0xb8] sm:$0xff]
    %v594 = vld [vmem:[#allocation13 + $0xc0] sm:$0xff]
    %v595 = vld [vmem:[#allocation13 + $0xc8] sm:$0xff]
    %v596 = vld [vmem:[#allocation13 + $0xd0] sm:$0xff]
    %v597 = vld [vmem:[#allocation13 + $0xd8] sm:$0xff]
    %v598 = vld [vmem:[#allocation13 + $0xe0] sm:$0xff]
    %v599 = vld [vmem:[#allocation13 + $0xe8] sm:$0xff]
    %v600 = vld [vmem:[#allocation13 + $0xf0] sm:$0xff]
    %v601 = vld [vmem:[#allocation13 + $0xf8] sm:$0xff]
    %v602 = vld [vmem:[#allocation14] sm:$0xff]
    %v603 = vld [vmem:[#allocation14 + $0x8] sm:$0xff]
    %v604 = vld [vmem:[#allocation14 + $0x10] sm:$0xff]
    %v605 = vld [vmem:[#allocation14 + $0x18] sm:$0xff]
    %v606 = vld [vmem:[#allocation14 + $0x20] sm:$0xff]
    %v607 = vld [vmem:[#allocation14 + $0x28] sm:$0xff]
    %v608 = vld [vmem:[#allocation14 + $0x30] sm:$0xff]
    %v609 = vld [vmem:[#allocation14 + $0x38] sm:$0xff]
    %v610 = vld [vmem:[#allocation14 + $0x40] sm:$0xff]
    %v611 = vld [vmem:[#allocation14 + $0x48] sm:$0xff]
    %v612 = vld [vmem:[#allocation14 + $0x50] sm:$0xff]
    %v613 = vld [vmem:[#allocation14 + $0x58] sm:$0xff]
    %v614 = vld [vmem:[#allocation14 + $0x60] sm:$0xff]
    %v615 = vld [vmem:[#allocation14 + $0x68] sm:$0xff]
    %v616 = vld [vmem:[#allocation14 + $0x70] sm:$0xff]
    %v617 = vld [vmem:[#allocation14 + $0x78] sm:$0xff]
    %v618 = vld [vmem:[#allocation14 + $0x80] sm:$0xff]
    %v619 = vld [vmem:[#allocation14 + $0x88] sm:$0xff]
    %v620 = vld [vmem:[#allocation14 + $0x90] sm:$0xff]
    %v621 = vld [vmem:[#allocation14 + $0x98] sm:$0xff]
    %v622 = vld [vmem:[#allocation14 + $0xa0] sm:$0xff]
    %v623 = vld [vmem:[#allocation14 + $0xa8] sm:$0xff]
    %v624 = vld [vmem:[#allocation14 + $0xb0] sm:$0xff]
    %v625 = vld [vmem:[#allocation14 + $0xb8] sm:$0xff]
    %v626 = vld [vmem:[#allocation14 + $0xc0] sm:$0xff]
    %v627 = vld [vmem:[#allocation14 + $0xc8] sm:$0xff]
    %v628 = vld [vmem:[#allocation14 + $0xd0] sm:$0xff]
    %v629 = vld [vmem:[#allocation14 + $0xd8] sm:$0xff]
    %v630 = vld [vmem:[#allocation14 + $0xe0] sm:$0xff]
    %v631 = vld [vmem:[#allocation14 + $0xe8] sm:$0xff]
    %v632 = vld [vmem:[#allocation14 + $0xf0] sm:$0xff]
    %v633 = vld [vmem:[#allocation14 + $0xf8] sm:$0xff]
    %v634 = vld [vmem:[#allocation14 + $0x100] sm:$0xff]
    %v635 = vld [vmem:[#allocation14 + $0x108] sm:$0xff]
    %v636 = vld [vmem:[#allocation14 + $0x110] sm:$0xff]
    %v637 = vld [vmem:[#allocation14 + $0x118] sm:$0xff]
    %v638 = vld [vmem:[#allocation14 + $0x120] sm:$0xff]
    %v639 = vld [vmem:[#allocation14 + $0x128] sm:$0xff]
    %v640 = vld [vmem:[#allocation14 + $0x130] sm:$0xff]
    %v641 = vld [vmem:[#allocation14 + $0x138] sm:$0xff]
    %v642 = vld [vmem:[#allocation14 + $0x140] sm:$0xff]
    %v643 = vld [vmem:[#allocation14 + $0x148] sm:$0xff]
    %v644 = vld [vmem:[#allocation14 + $0x150] sm:$0xff]
    %v645 = vld [vmem:[#allocation14 + $0x158] sm:$0xff]
    %v646 = vld [vmem:[#allocation14 + $0x160] sm:$0xff]
    %v647 = vld [vmem:[#allocation14 + $0x168] sm:$0xff]
    %v648 = vld [vmem:[#allocation14 + $0x170] sm:$0xff]
    %v649 = vld [vmem:[#allocation14 + $0x178] sm:$0xff]
    %v650 = vld [vmem:[#allocation14 + $0x180] sm:$0xff]
    %v651 = vld [vmem:[#allocation14 + $0x188] sm:$0xff]
    %v652 = vld [vmem:[#allocation14 + $0x190] sm:$0xff]
    %v653 = vld [vmem:[#allocation14 + $0x198] sm:$0xff]
    %v654 = vld [vmem:[#allocation14 + $0x1a0] sm:$0xff]
    %v655 = vld [vmem:[#allocation14 + $0x1a8] sm:$0xff]
    %v656 = vld [vmem:[#allocation14 + $0x1b0] sm:$0xff]
    %v657 = vld [vmem:[#allocation14 + $0x1b8] sm:$0xff]
    %v658 = vld [vmem:[#allocation14 + $0x1c0] sm:$0xff]
    %v659 = vld [vmem:[#allocation14 + $0x1c8] sm:$0xff]
    %v660 = vld [vmem:[#allocation14 + $0x1d0] sm:$0xff]
    %v661 = vld [vmem:[#allocation14 + $0x1d8] sm:$0xff]
    %v662 = vld [vmem:[#allocation14 + $0x1e0] sm:$0xff]
    %v663 = vld [vmem:[#allocation14 + $0x1e8] sm:$0xff]
    %v664 = vld [vmem:[#allocation14 + $0x1f0] sm:$0xff]
    %v665 = vld [vmem:[#allocation14 + $0x1f8] sm:$0xff]
    %v666 = vld [vmem:[%s5] sm:$0xf]
    %v668 = vlaneseq
    %v669 = vshrl.u32 %v668, 7
    %v670 = vsub.s32 0, %v669
    %v671 = vrot.slane %v666, %v670
    %v672 = vlaneseq
    %v673 = vshrl.u32 %v672, 7
    %v674 = vsub.s32 1, %v673
    %v675 = vrot.slane %v666, %v674
    %v676 = vlaneseq
    %v677 = vshrl.u32 %v676, 7
    %v678 = vsub.s32 2, %v677
    %v679 = vrot.slane %v666, %v678
    %v680 = vlaneseq
    %v681 = vshrl.u32 %v680, 7
    %v682 = vsub.s32 3, %v681
    %v683 = vrot.slane %v666, %v682
    %v688 = vld [vmem:[#allocation2] sm:$0xff]
    %v689 = vld [vmem:[#allocation3] sm:$0xff]
    %v690 = vld [vmem:[#allocation4] sm:$0xff]
    %v691 = vld [vmem:[#allocation5] sm:$0xff]
    %v692 = vld [vmem:[#allocation6] sm:$0xff]
    %v693 = vld [vmem:[#allocation6 + $0x8] sm:$0xff]
    %v694 = vld [vmem:[#allocation6 + $0x10] sm:$0xff]
    %v695 = vld [vmem:[#allocation6 + $0x18] sm:$0xff]
    %v696 = vpack.c.bf16 %v688, %v688
    %v729 = vunpack.c.l.b16 %v570
    %v730 = vunpack.c.h.b16 %v570
    %v731 = vunpack.c.l.b16 %v571
    %v732 = vunpack.c.h.b16 %v571
    %v733 = vunpack.c.l.b16 %v572
    %v734 = vunpack.c.h.b16 %v572
    %v735 = vunpack.c.l.b16 %v573
    %v736 = vunpack.c.h.b16 %v573
    %v737 = vunpack.c.l.b16 %v574
    %v738 = vunpack.c.h.b16 %v574
    %v739 = vunpack.c.l.b16 %v575
    %v740 = vunpack.c.h.b16 %v575
    %v741 = vunpack.c.l.b16 %v576
    %v742 = vunpack.c.h.b16 %v576
    %v743 = vunpack.c.l.b16 %v577
    %v744 = vunpack.c.h.b16 %v577
    %v745 = vunpack.c.l.b16 %v578
    %v746 = vunpack.c.h.b16 %v578
    %v747 = vunpack.c.l.b16 %v579
    %v748 = vunpack.c.h.b16 %v579
    %v749 = vunpack.c.l.b16 %v580
    %v750 = vunpack.c.h.b16 %v580
    %v751 = vunpack.c.l.b16 %v581
    %v752 = vunpack.c.h.b16 %v581
    %v753 = vunpack.c.l.b16 %v582
    %v754 = vunpack.c.h.b16 %v582
    %v755 = vunpack.c.l.b16 %v583
    %v756 = vunpack.c.h.b16 %v583
    %v757 = vunpack.c.l.b16 %v584
    %v758 = vunpack.c.h.b16 %v584
    %v759 = vunpack.c.l.b16 %v585
    %v760 = vunpack.c.h.b16 %v585
    %v761 = vunpack.c.l.b16 %v586
    %v762 = vunpack.c.h.b16 %v586
    %v763 = vunpack.c.l.b16 %v587
    %v764 = vunpack.c.h.b16 %v587
    %v765 = vunpack.c.l.b16 %v588
    %v766 = vunpack.c.h.b16 %v588
    %v767 = vunpack.c.l.b16 %v589
    %v768 = vunpack.c.h.b16 %v589
    %v769 = vunpack.c.l.b16 %v590
    %v770 = vunpack.c.h.b16 %v590
    %v771 = vunpack.c.l.b16 %v591
    %v772 = vunpack.c.h.b16 %v591
    %v773 = vunpack.c.l.b16 %v592
    %v774 = vunpack.c.h.b16 %v592
    %v775 = vunpack.c.l.b16 %v593
    %v776 = vunpack.c.h.b16 %v593
    %v777 = vunpack.c.l.b16 %v594
    %v778 = vunpack.c.h.b16 %v594
    %v779 = vunpack.c.l.b16 %v595
    %v780 = vunpack.c.h.b16 %v595
    %v781 = vunpack.c.l.b16 %v596
    %v782 = vunpack.c.h.b16 %v596
    %v783 = vunpack.c.l.b16 %v597
    %v784 = vunpack.c.h.b16 %v597
    %v785 = vunpack.c.l.b16 %v598
    %v786 = vunpack.c.h.b16 %v598
    %v787 = vunpack.c.l.b16 %v599
    %v788 = vunpack.c.h.b16 %v599
    %v789 = vunpack.c.l.b16 %v600
    %v790 = vunpack.c.h.b16 %v600
    %v791 = vunpack.c.l.b16 %v601
    %v792 = vunpack.c.h.b16 %v601
    %v793 = vpack.c.b16 %v733, %v729
    %v794 = vpack.c.b16 %v734, %v730
    %v795 = vpack.c.b16 %v735, %v731
    %v796 = vpack.c.b16 %v736, %v732
    %v797 = vpack.c.b16 %v741, %v737
    %v798 = vpack.c.b16 %v742, %v738
    %v799 = vpack.c.b16 %v743, %v739
    %v800 = vpack.c.b16 %v744, %v740
    %v801 = vpack.c.b16 %v749, %v745
    %v802 = vpack.c.b16 %v750, %v746
    %v803 = vpack.c.b16 %v751, %v747
    %v804 = vpack.c.b16 %v752, %v748
    %v805 = vpack.c.b16 %v757, %v753
    %v806 = vpack.c.b16 %v758, %v754
    %v807 = vpack.c.b16 %v759, %v755
    %v808 = vpack.c.b16 %v760, %v756
    %v809 = vpack.c.b16 %v765, %v761
    %v810 = vpack.c.b16 %v766, %v762
    %v811 = vpack.c.b16 %v767, %v763
    %v812 = vpack.c.b16 %v768, %v764
    %v813 = vpack.c.b16 %v773, %v769
    %v814 = vpack.c.b16 %v774, %v770
    %v815 = vpack.c.b16 %v775, %v771
    %v816 = vpack.c.b16 %v776, %v772
    %v817 = vpack.c.b16 %v781, %v777
    %v818 = vpack.c.b16 %v782, %v778
    %v819 = vpack.c.b16 %v783, %v779
    %v820 = vpack.c.b16 %v784, %v780
    %v821 = vpack.c.b16 %v789, %v785
    %v822 = vpack.c.b16 %v790, %v786
    %v823 = vpack.c.b16 %v791, %v787
    %v824 = vpack.c.b16 %v792, %v788
    %857 = vmatprep.subr.bf16.mxu0 %v794
    %858 = vmatpush1.bf16.msra.mxu0 %v793
    %859 = vmatprep.subr.bf16.mxu0 %v798
    %860 = vmatpush1.bf16.msra.mxu0 %v797
    %861 = vmatprep.subr.bf16.mxu0 %v802
    %862 = vmatpush1.bf16.msra.mxu0 %v801
    %863 = vmatprep.subr.bf16.mxu0 %v806
    %864 = vmatpush1.bf16.msra.mxu0 %v805
    %865 = vmatprep.subr.bf16.mxu0 %v810
    %866 = vmatpush1.bf16.msra.mxu0 %v809
    %867 = vmatprep.subr.bf16.mxu0 %v814
    %868 = vmatpush1.bf16.msra.mxu0 %v813
    %869 = vmatprep.subr.bf16.mxu0 %v818
    %870 = vmatpush1.bf16.msra.mxu0 %v817
    %871 = vmatprep.subr.bf16.mxu0 %v822
    %872 = vmatpush1.bf16.msra.mxu0 %v821
    %873 = vmatprep.subr.bf16.mxu0 0
    %874 = vmatpush1.bf16.msra.mxu0 0
    %875 = vmatprep.subr.bf16.mxu0 0
    %876 = vmatpush1.bf16.msra.mxu0 0
    %877 = vmatprep.subr.bf16.mxu0 0
    %878 = vmatpush1.bf16.msra.mxu0 0
    %879 = vmatprep.subr.bf16.mxu0 0
    %880 = vmatpush1.bf16.msra.mxu0 0
    %881 = vmatprep.subr.bf16.mxu0 0
    %882 = vmatpush1.bf16.msra.mxu0 0
    %883 = vmatprep.subr.bf16.mxu0 0
    %884 = vmatpush1.bf16.msra.mxu0 0
    %885 = vmatprep.subr.bf16.mxu0 0
    %886 = vmatpush1.bf16.msra.mxu0 0
    %887 = vmatprep.subr.bf16.mxu0 0
    %888 = vmatpush1.bf16.msra.mxu0 0
    %889 = vmatprep.mubr.bf16.mxu0 0
    %890 = vmatmul.mubr.bf16.gmra.mrb[0].mxu0 %v696
    %v891 = vpop.f32.mrb[0].mxu0
    %v892 = vadd.f32 0.0, %v891
    %v893 = vpop.f32.mrb[0].mxu0
    %v894 = vadd.f32 0.0, %v893
    %v895 = vpop.f32.mrb[0].mxu0
    %v896 = vpop.f32.mrb[0].mxu0
    %897 = vdwg.mxu0
    %898 = vmatprep.subr.bf16.mxu0 %v796
    %899 = vmatpush1.bf16.msra.mxu0 %v795
    %900 = vmatprep.subr.bf16.mxu0 %v800
    %901 = vmatpush1.bf16.msra.mxu0 %v799
    %902 = vmatprep.subr.bf16.mxu0 %v804
    %903 = vmatpush1.bf16.msra.mxu0 %v803
    %904 = vmatprep.subr.bf16.mxu0 %v808
    %905 = vmatpush1.bf16.msra.mxu0 %v807
    %906 = vmatprep.subr.bf16.mxu0 %v812
    %907 = vmatpush1.bf16.msra.mxu0 %v811
    %908 = vmatprep.subr.bf16.mxu0 %v816
    %909 = vmatpush1.bf16.msra.mxu0 %v815
    %910 = vmatprep.subr.bf16.mxu0 %v820
    %911 = vmatpush1.bf16.msra.mxu0 %v819
    %912 = vmatprep.subr.bf16.mxu0 %v824
    %913 = vmatpush1.bf16.msra.mxu0 %v823
    %914 = vmatprep.subr.bf16.mxu0 0
    %915 = vmatpush1.bf16.msra.mxu0 0
    %916 = vmatprep.subr.bf16.mxu0 0
    %917 = vmatpush1.bf16.msra.mxu0 0
    %918 = vmatprep.subr.bf16.mxu0 0
    %919 = vmatpush1.bf16.msra.mxu0 0
    %920 = vmatprep.subr.bf16.mxu0 0
    %921 = vmatpush1.bf16.msra.mxu0 0
    %922 = vmatprep.subr.bf16.mxu0 0
    %923 = vmatpush1.bf16.msra.mxu0 0
    %924 = vmatprep.subr.bf16.mxu0 0
    %925 = vmatpush1.bf16.msra.mxu0 0
    %926 = vmatprep.subr.bf16.mxu0 0
    %927 = vmatpush1.bf16.msra.mxu0 0
    %928 = vmatprep.subr.bf16.mxu0 0
    %929 = vmatpush1.bf16.msra.mxu0 0
    %930 = vmatprep.mubr.bf16.mxu0 0
    %931 = vmatmul.mubr.bf16.gmra.mrb[0].mxu0 %v696
    %v932 = vpop.f32.mrb[0].mxu0
    %v933 = vadd.f32 0.0, %v932
    %v934 = vpop.f32.mrb[0].mxu0
    %v935 = vadd.f32 0.0, %v934
    %v936 = vpop.f32.mrb[0].mxu0
    %v937 = vpop.f32.mrb[0].mxu0
    %938 = vdwg.mxu0
    %v939 = vadd.f32 %v692, %v892
    %v940 = vadd.f32 %v693, %v894
    %v941 = vadd.f32 %v694, %v933
    %v942 = vadd.f32 %v695, %v935
    %v943 = vxor.u32 %v939, 2147483648
    %v944 = vmul.f32 %v943, 1.442695
    %v945 = vpow.pop %v944
    %v946 = vadd.f32 %v945, 1.0
    %v947 = vrcp.pop %v946
    %v948 = vmul.f32 1.0, %v947
    %v949 = vxor.u32 %v940, 2147483648
    %v950 = vmul.f32 %v949, 1.442695
    %v951 = vpow.pop %v950
    %v952 = vadd.f32 %v951, 1.0
    %v953 = vrcp.pop %v952
    %v954 = vmul.f32 1.0, %v953
    %v955 = vtanh.pop %v941
    %v956 = vxor.u32 %v942, 2147483648
    %v957 = vmul.f32 %v956, 1.442695
    %v958 = vpow.pop %v957
    %v959 = vadd.f32 %v958, 1.0
    %v960 = vrcp.pop %v959
    %v961 = vmul.f32 1.0, %v960
    %v962 = vmul.f32 %v954, %v689
    %v963 = vmul.f32 %v948, %v955
    %v964 = vadd.f32 %v962, %v963
    %v965 = vtanh.pop %v964
    %v966 = vmul.f32 %v961, %v965
    %v967 = vpack.c.bf16 %v966, %v966
    %v968 = vpack.c.bf16 %v690, %v690
    %v1033 = vunpack.c.l.b16 %v602
    %v1034 = vunpack.c.h.b16 %v602
    %v1035 = vunpack.c.l.b16 %v603
    %v1036 = vunpack.c.h.b16 %v603
    %v1037 = vunpack.c.l.b16 %v604
    %v1038 = vunpack.c.h.b16 %v604
    %v1039 = vunpack.c.l.b16 %v605
    %v1040 = vunpack.c.h.b16 %v605
    %v1041 = vunpack.c.l.b16 %v606
    %v1042 = vunpack.c.h.b16 %v606
    %v1043 = vunpack.c.l.b16 %v607
    %v1044 = vunpack.c.h.b16 %v607
    %v1045 = vunpack.c.l.b16 %v608
    %v1046 = vunpack.c.h.b16 %v608
    %v1047 = vunpack.c.l.b16 %v609
    %v1048 = vunpack.c.h.b16 %v609
    %v1049 = vunpack.c.l.b16 %v610
    %v1050 = vunpack.c.h.b16 %v610
    %v1051 = vunpack.c.l.b16 %v611
    %v1052 = vunpack.c.h.b16 %v611
    %v1053 = vunpack.c.l.b16 %v612
    %v1054 = vunpack.c.h.b16 %v612
    %v1055 = vunpack.c.l.b16 %v613
    %v1056 = vunpack.c.h.b16 %v613
    %v1057 = vunpack.c.l.b16 %v614
    %v1058 = vunpack.c.h.b16 %v614
    %v1059 = vunpack.c.l.b16 %v615
    %v1060 = vunpack.c.h.b16 %v615
    %v1061 = vunpack.c.l.b16 %v616
    %v1062 = vunpack.c.h.b16 %v616
    %v1063 = vunpack.c.l.b16 %v617
    %v1064 = vunpack.c.h.b16 %v617
    %v1065 = vunpack.c.l.b16 %v618
    %v1066 = vunpack.c.h.b16 %v618
    %v1067 = vunpack.c.l.b16 %v619
    %v1068 = vunpack.c.h.b16 %v619
    %v1069 = vunpack.c.l.b16 %v620
    %v1070 = vunpack.c.h.b16 %v620
    %v1071 = vunpack.c.l.b16 %v621
    %v1072 = vunpack.c.h.b16 %v621
    %v1073 = vunpack.c.l.b16 %v622
    %v1074 = vunpack.c.h.b16 %v622
    %v1075 = vunpack.c.l.b16 %v623
    %v1076 = vunpack.c.h.b16 %v623
    %v1077 = vunpack.c.l.b16 %v624
    %v1078 = vunpack.c.h.b16 %v624
    %v1079 = vunpack.c.l.b16 %v625
    %v1080 = vunpack.c.h.b16 %v625
    %v1081 = vunpack.c.l.b16 %v626
    %v1082 = vunpack.c.h.b16 %v626
    %v1083 = vunpack.c.l.b16 %v627
    %v1084 = vunpack.c.h.b16 %v627
    %v1085 = vunpack.c.l.b16 %v628
    %v1086 = vunpack.c.h.b16 %v628
    %v1087 = vunpack.c.l.b16 %v629
    %v1088 = vunpack.c.h.b16 %v629
    %v1089 = vunpack.c.l.b16 %v630
    %v1090 = vunpack.c.h.b16 %v630
    %v1091 = vunpack.c.l.b16 %v631
    %v1092 = vunpack.c.h.b16 %v631
    %v1093 = vunpack.c.l.b16 %v632
    %v1094 = vunpack.c.h.b16 %v632
    %v1095 = vunpack.c.l.b16 %v633
    %v1096 = vunpack.c.h.b16 %v633
    %v1097 = vunpack.c.l.b16 %v634
    %v1098 = vunpack.c.h.b16 %v634
    %v1099 = vunpack.c.l.b16 %v635
    %v1100 = vunpack.c.h.b16 %v635
    %v1101 = vunpack.c.l.b16 %v636
    %v1102 = vunpack.c.h.b16 %v636
    %v1103 = vunpack.c.l.b16 %v637
    %v1104 = vunpack.c.h.b16 %v637
    %v1105 = vunpack.c.l.b16 %v638
    %v1106 = vunpack.c.h.b16 %v638
    %v1107 = vunpack.c.l.b16 %v639
    %v1108 = vunpack.c.h.b16 %v639
    %v1109 = vunpack.c.l.b16 %v640
    %v1110 = vunpack.c.h.b16 %v640
    %v1111 = vunpack.c.l.b16 %v641
    %v1112 = vunpack.c.h.b16 %v641
    %v1113 = vunpack.c.l.b16 %v642
    %v1114 = vunpack.c.h.b16 %v642
    %v1115 = vunpack.c.l.b16 %v643
    %v1116 = vunpack.c.h.b16 %v643
    %v1117 = vunpack.c.l.b16 %v644
    %v1118 = vunpack.c.h.b16 %v644
    %v1119 = vunpack.c.l.b16 %v645
    %v1120 = vunpack.c.h.b16 %v645
    %v1121 = vunpack.c.l.b16 %v646
    %v1122 = vunpack.c.h.b16 %v646
    %v1123 = vunpack.c.l.b16 %v647
    %v1124 = vunpack.c.h.b16 %v647
    %v1125 = vunpack.c.l.b16 %v648
    %v1126 = vunpack.c.h.b16 %v648
    %v1127 = vunpack.c.l.b16 %v649
    %v1128 = vunpack.c.h.b16 %v649
    %v1129 = vunpack.c.l.b16 %v650
    %v1130 = vunpack.c.h.b16 %v650
    %v1131 = vunpack.c.l.b16 %v651
    %v1132 = vunpack.c.h.b16 %v651
    %v1133 = vunpack.c.l.b16 %v652
    %v1134 = vunpack.c.h.b16 %v652
    %v1135 = vunpack.c.l.b16 %v653
    %v1136 = vunpack.c.h.b16 %v653
    %v1137 = vunpack.c.l.b16 %v654
    %v1138 = vunpack.c.h.b16 %v654
    %v1139 = vunpack.c.l.b16 %v655
    %v1140 = vunpack.c.h.b16 %v655
    %v1141 = vunpack.c.l.b16 %v656
    %v1142 = vunpack.c.h.b16 %v656
    %v1143 = vunpack.c.l.b16 %v657
    %v1144 = vunpack.c.h.b16 %v657
    %v1145 = vunpack.c.l.b16 %v658
    %v1146 = vunpack.c.h.b16 %v658
    %v1147 = vunpack.c.l.b16 %v659
    %v1148 = vunpack.c.h.b16 %v659
    %v1149 = vunpack.c.l.b16 %v660
    %v1150 = vunpack.c.h.b16 %v660
    %v1151 = vunpack.c.l.b16 %v661
    %v1152 = vunpack.c.h.b16 %v661
    %v1153 = vunpack.c.l.b16 %v662
    %v1154 = vunpack.c.h.b16 %v662
    %v1155 = vunpack.c.l.b16 %v663
    %v1156 = vunpack.c.h.b16 %v663
    %v1157 = vunpack.c.l.b16 %v664
    %v1158 = vunpack.c.h.b16 %v664
    %v1159 = vunpack.c.l.b16 %v665
    %v1160 = vunpack.c.h.b16 %v665
    %v1161 = vpack.c.b16 %v1037, %v1033
    %v1162 = vpack.c.b16 %v1038, %v1034
    %v1163 = vpack.c.b16 %v1039, %v1035
    %v1164 = vpack.c.b16 %v1040, %v1036
    %v1165 = vpack.c.b16 %v1045, %v1041
    %v1166 = vpack.c.b16 %v1046, %v1042
    %v1167 = vpack.c.b16 %v1047, %v1043
    %v1168 = vpack.c.b16 %v1048, %v1044
    %v1169 = vpack.c.b16 %v1053, %v1049
    %v1170 = vpack.c.b16 %v1054, %v1050
    %v1171 = vpack.c.b16 %v1055, %v1051
    %v1172 = vpack.c.b16 %v1056, %v1052
    %v1173 = vpack.c.b16 %v1061, %v1057
    %v1174 = vpack.c.b16 %v1062, %v1058
    %v1175 = vpack.c.b16 %v1063, %v1059
    %v1176 = vpack.c.b16 %v1064, %v1060
    %v1177 = vpack.c.b16 %v1069, %v1065
    %v1178 = vpack.c.b16 %v1070, %v1066
    %v1179 = vpack.c.b16 %v1071, %v1067
    %v1180 = vpack.c.b16 %v1072, %v1068
    %v1181 = vpack.c.b16 %v1077, %v1073
    %v1182 = vpack.c.b16 %v1078, %v1074
    %v1183 = vpack.c.b16 %v1079, %v1075
    %v1184 = vpack.c.b16 %v1080, %v1076
    %v1185 = vpack.c.b16 %v1085, %v1081
    %v1186 = vpack.c.b16 %v1086, %v1082
    %v1187 = vpack.c.b16 %v1087, %v1083
    %v1188 = vpack.c.b16 %v1088, %v1084
    %v1189 = vpack.c.b16 %v1093, %v1089
    %v1190 = vpack.c.b16 %v1094, %v1090
    %v1191 = vpack.c.b16 %v1095, %v1091
    %v1192 = vpack.c.b16 %v1096, %v1092
    %v1193 = vpack.c.b16 %v1101, %v1097
    %v1194 = vpack.c.b16 %v1102, %v1098
    %v1195 = vpack.c.b16 %v1103, %v1099
    %v1196 = vpack.c.b16 %v1104, %v1100
    %v1197 = vpack.c.b16 %v1109, %v1105
    %v1198 = vpack.c.b16 %v1110, %v1106
    %v1199 = vpack.c.b16 %v1111, %v1107
    %v1200 = vpack.c.b16 %v1112, %v1108
    %v1201 = vpack.c.b16 %v1117, %v1113
    %v1202 = vpack.c.b16 %v1118, %v1114
    %v1203 = vpack.c.b16 %v1119, %v1115
    %v1204 = vpack.c.b16 %v1120, %v1116
    %v1205 = vpack.c.b16 %v1125, %v1121
    %v1206 = vpack.c.b16 %v1126, %v1122
    %v1207 = vpack.c.b16 %v1127, %v1123
    %v1208 = vpack.c.b16 %v1128, %v1124
    %v1209 = vpack.c.b16 %v1133, %v1129
    %v1210 = vpack.c.b16 %v1134, %v1130
    %v1211 = vpack.c.b16 %v1135, %v1131
    %v1212 = vpack.c.b16 %v1136, %v1132
    %v1213 = vpack.c.b16 %v1141, %v1137
    %v1214 = vpack.c.b16 %v1142, %v1138
    %v1215 = vpack.c.b16 %v1143, %v1139
    %v1216 = vpack.c.b16 %v1144, %v1140
    %v1217 = vpack.c.b16 %v1149, %v1145
    %v1218 = vpack.c.b16 %v1150, %v1146
    %v1219 = vpack.c.b16 %v1151, %v1147
    %v1220 = vpack.c.b16 %v1152, %v1148
    %v1221 = vpack.c.b16 %v1157, %v1153
    %v1222 = vpack.c.b16 %v1158, %v1154
    %v1223 = vpack.c.b16 %v1159, %v1155
    %v1224 = vpack.c.b16 %v1160, %v1156
    %1289 = vmatprep.subr.bf16.mxu0 %v1162
    %1290 = vmatpush1.bf16.msra.mxu0 %v1161
    %1291 = vmatprep.subr.bf16.mxu0 %v1166
    %1292 = vmatpush1.bf16.msra.mxu0 %v1165
    %1293 = vmatprep.subr.bf16.mxu0 %v1170
    %1294 = vmatpush1.bf16.msra.mxu0 %v1169
    %1295 = vmatprep.subr.bf16.mxu0 %v1174
    %1296 = vmatpush1.bf16.msra.mxu0 %v1173
    %1297 = vmatprep.subr.bf16.mxu0 %v1178
    %1298 = vmatpush1.bf16.msra.mxu0 %v1177
    %1299 = vmatprep.subr.bf16.mxu0 %v1182
    %1300 = vmatpush1.bf16.msra.mxu0 %v1181
    %1301 = vmatprep.subr.bf16.mxu0 %v1186
    %1302 = vmatpush1.bf16.msra.mxu0 %v1185
    %1303 = vmatprep.subr.bf16.mxu0 %v1190
    %1304 = vmatpush1.bf16.msra.mxu0 %v1189
    %1305 = vmatprep.subr.bf16.mxu0 %v1194
    %1306 = vmatpush1.bf16.msra.mxu0 %v1193
    %1307 = vmatprep.subr.bf16.mxu0 %v1198
    %1308 = vmatpush1.bf16.msra.mxu0 %v1197
    %1309 = vmatprep.subr.bf16.mxu0 %v1202
    %1310 = vmatpush1.bf16.msra.mxu0 %v1201
    %1311 = vmatprep.subr.bf16.mxu0 %v1206
    %1312 = vmatpush1.bf16.msra.mxu0 %v1205
    %1313 = vmatprep.subr.bf16.mxu0 %v1210
    %1314 = vmatpush1.bf16.msra.mxu0 %v1209
    %1315 = vmatprep.subr.bf16.mxu0 %v1214
    %1316 = vmatpush1.bf16.msra.mxu0 %v1213
    %1317 = vmatprep.subr.bf16.mxu0 %v1218
    %1318 = vmatpush1.bf16.msra.mxu0 %v1217
    %1319 = vmatprep.subr.bf16.mxu0 %v1222
    %1320 = vmatpush1.bf16.msra.mxu0 %v1221
    %1321 = vmatprep.mubr.bf16.mxu0 %v968
    %1322 = vmatmul.mubr.bf16.gmra.mrb[0].mxu0 %v967
    %v1323 = vpop.f32.mrb[0].mxu0
    %v1324 = vadd.f32 %v671, %v1323
    %v1325 = vpop.f32.mrb[0].mxu0
    %v1326 = vadd.f32 %v675, %v1325
    %v1327 = vpop.f32.mrb[0].mxu0
    %v1328 = vpop.f32.mrb[0].mxu0
    %1329 = vdwg.mxu0
    %1330 = vmatprep.subr.bf16.mxu0 %v1164
    %1331 = vmatpush1.bf16.msra.mxu0 %v1163
    %1332 = vmatprep.subr.bf16.mxu0 %v1168
    %1333 = vmatpush1.bf16.msra.mxu0 %v1167
    %1334 = vmatprep.subr.bf16.mxu0 %v1172
    %1335 = vmatpush1.bf16.msra.mxu0 %v1171
    %1336 = vmatprep.subr.bf16.mxu0 %v1176
    %1337 = vmatpush1.bf16.msra.mxu0 %v1175
    %1338 = vmatprep.subr.bf16.mxu0 %v1180
    %1339 = vmatpush1.bf16.msra.mxu0 %v1179
    %1340 = vmatprep.subr.bf16.mxu0 %v1184
    %1341 = vmatpush1.bf16.msra.mxu0 %v1183
    %1342 = vmatprep.subr.bf16.mxu0 %v1188
    %1343 = vmatpush1.bf16.msra.mxu0 %v1187
    %1344 = vmatprep.subr.bf16.mxu0 %v1192
    %1345 = vmatpush1.bf16.msra.mxu0 %v1191
    %1346 = vmatprep.subr.bf16.mxu0 %v1196
    %1347 = vmatpush1.bf16.msra.mxu0 %v1195
    %1348 = vmatprep.subr.bf16.mxu0 %v1200
    %1349 = vmatpush1.bf16.msra.mxu0 %v1199
    %1350 = vmatprep.subr.bf16.mxu0 %v1204
    %1351 = vmatpush1.bf16.msra.mxu0 %v1203
    %1352 = vmatprep.subr.bf16.mxu0 %v1208
    %1353 = vmatpush1.bf16.msra.mxu0 %v1207
    %1354 = vmatprep.subr.bf16.mxu0 %v1212
    %1355 = vmatpush1.bf16.msra.mxu0 %v1211
    %1356 = vmatprep.subr.bf16.mxu0 %v1216
    %1357 = vmatpush1.bf16.msra.mxu0 %v1215
    %1358 = vmatprep.subr.bf16.mxu0 %v1220
    %1359 = vmatpush1.bf16.msra.mxu0 %v1219
    %1360 = vmatprep.subr.bf16.mxu0 %v1224
    %1361 = vmatpush1.bf16.msra.mxu0 %v1223
    %1362 = vmatprep.mubr.bf16.mxu0 %v968
    %1363 = vmatmul.mubr.bf16.gmra.mrb[0].mxu0 %v967
    %v1364 = vpop.f32.mrb[0].mxu0
    %v1365 = vadd.f32 %v679, %v1364
    %v1366 = vpop.f32.mrb[0].mxu0
    %v1367 = vadd.f32 %v683, %v1366
    %v1368 = vpop.f32.mrb[0].mxu0
    %v1369 = vpop.f32.mrb[0].mxu0
    %1370 = vdwg.mxu0
    %v1371 = vxor.u32 %v1324, 2147483648
    %v1372 = vmul.f32 %v1371, 1.442695
    %v1373 = vpow.pop %v1372
    %v1374 = vadd.f32 %v1373, 1.0
    %v1375 = vrcp.pop %v1374
    %v1376 = vmul.f32 1.0, %v1375
    %v1377 = vxor.u32 %v1326, 2147483648
    %v1378 = vmul.f32 %v1377, 1.442695
    %v1379 = vpow.pop %v1378
    %v1380 = vadd.f32 %v1379, 1.0
    %v1381 = vrcp.pop %v1380
    %v1382 = vmul.f32 1.0, %v1381
    %v1383 = vtanh.pop %v1365
    %v1384 = vxor.u32 %v1367, 2147483648
    %v1385 = vmul.f32 %v1384, 1.442695
    %v1386 = vpow.pop %v1385
    %v1387 = vadd.f32 %v1386, 1.0
    %v1388 = vrcp.pop %v1387
    %v1389 = vmul.f32 1.0, %v1388
    %v1390 = vmul.f32 %v1382, %v691
    %v1391 = vmul.f32 %v1376, %v1383
    %v1392 = vadd.f32 %v1390, %v1391
    %v1393 = vtanh.pop %v1392
    %v1394 = vmul.f32 %v1389, %v1393
    %1395 = vst [vmem:[#allocation7] sm:$0xff] %v1394
    %s1396 = scalar_lea.vmem [#allocation6], 32
    %v1397 = vld [vmem:[%s1396] sm:$0xff]
    %v1398 = vld [vmem:[%s1396 + $0x8] sm:$0xff]
    %v1399 = vld [vmem:[%s1396 + $0x10] sm:$0xff]
    %v1400 = vld [vmem:[%s1396 + $0x18] sm:$0xff]
    %1401 = vmatprep.subr.bf16.mxu0 %v794
    %1402 = vmatpush1.bf16.msra.mxu0 %v793
    %1403 = vmatprep.subr.bf16.mxu0 %v798
    %1404 = vmatpush1.bf16.msra.mxu0 %v797
    %1405 = vmatprep.subr.bf16.mxu0 %v802
    %1406 = vmatpush1.bf16.msra.mxu0 %v801
    %1407 = vmatprep.subr.bf16.mxu0 %v806
    %1408 = vmatpush1.bf16.msra.mxu0 %v805
    %1409 = vmatprep.subr.bf16.mxu0 %v810
    %1410 = vmatpush1.bf16.msra.mxu0 %v809
    %1411 = vmatprep.subr.bf16.mxu0 %v814
    %1412 = vmatpush1.bf16.msra.mxu0 %v813
    %1413 = vmatprep.subr.bf16.mxu0 %v818
    %1414 = vmatpush1.bf16.msra.mxu0 %v817
    %1415 = vmatprep.subr.bf16.mxu0 %v822
    %1416 = vmatpush1.bf16.msra.mxu0 %v821
    %1417 = vmatprep.subr.bf16.mxu0 0
    %1418 = vmatpush1.bf16.msra.mxu0 0
    %1419 = vmatprep.subr.bf16.mxu0 0
    %1420 = vmatpush1.bf16.msra.mxu0 0
    %1421 = vmatprep.subr.bf16.mxu0 0
    %1422 = vmatpush1.bf16.msra.mxu0 0
    %1423 = vmatprep.subr.bf16.mxu0 0
    %1424 = vmatpush1.bf16.msra.mxu0 0
    %1425 = vmatprep.subr.bf16.mxu0 0
    %1426 = vmatpush1.bf16.msra.mxu0 0
    %1427 = vmatprep.subr.bf16.mxu0 0
    %1428 = vmatpush1.bf16.msra.mxu0 0
    %1429 = vmatprep.subr.bf16.mxu0 0
    %1430 = vmatpush1.bf16.msra.mxu0 0
    %1431 = vmatprep.subr.bf16.mxu0 0
    %1432 = vmatpush1.bf16.msra.mxu0 0
    %1433 = vmatprep.mubr.bf16.mxu0 0
    %1434 = vmatmul.mubr.bf16.gmra.mrb[0].mxu0 %v967
    %v1435 = vpop.f32.mrb[0].mxu0
    %v1436 = vadd.f32 0.0, %v1435
    %v1437 = vpop.f32.mrb[0].mxu0
    %v1438 = vadd.f32 0.0, %v1437
    %v1439 = vpop.f32.mrb[0].mxu0
    %v1440 = vpop.f32.mrb[0].mxu0
    %1441 = vdwg.mxu0
    %1442 = vmatprep.subr.bf16.mxu0 %v796
    %1443 = vmatpush1.bf16.msra.mxu0 %v795
    %1444 = vmatprep.subr.bf16.mxu0 %v800
    %1445 = vmatpush1.bf16.msra.mxu0 %v799
    %1446 = vmatprep.subr.bf16.mxu0 %v804
    %1447 = vmatpush1.bf16.msra.mxu0 %v803
    %1448 = vmatprep.subr.bf16.mxu0 %v808
    %1449 = vmatpush1.bf16.msra.mxu0 %v807
    %1450 = vmatprep.subr.bf16.mxu0 %v812
    %1451 = vmatpush1.bf16.msra.mxu0 %v811
    %1452 = vmatprep.subr.bf16.mxu0 %v816
    %1453 = vmatpush1.bf16.msra.mxu0 %v815
    %1454 = vmatprep.subr.bf16.mxu0 %v820
    %1455 = vmatpush1.bf16.msra.mxu0 %v819
    %1456 = vmatprep.subr.bf16.mxu0 %v824
    %1457 = vmatpush1.bf16.msra.mxu0 %v823
    %1458 = vmatprep.subr.bf16.mxu0 0
    %1459 = vmatpush1.bf16.msra.mxu0 0
    %1460 = vmatprep.subr.bf16.mxu0 0
    %1461 = vmatpush1.bf16.msra.mxu0 0
    %1462 = vmatprep.subr.bf16.mxu0 0
    %1463 = vmatpush1.bf16.msra.mxu0 0
    %1464 = vmatprep.subr.bf16.mxu0 0
    %1465 = vmatpush1.bf16.msra.mxu0 0
    %1466 = vmatprep.subr.bf16.mxu0 0
    %1467 = vmatpush1.bf16.msra.mxu0 0
    %1468 = vmatprep.subr.bf16.mxu0 0
    %1469 = vmatpush1.bf16.msra.mxu0 0
    %1470 = vmatprep.subr.bf16.mxu0 0
    %1471 = vmatpush1.bf16.msra.mxu0 0
    %1472 = vmatprep.subr.bf16.mxu0 0
    %1473 = vmatpush1.bf16.msra.mxu0 0
    %1474 = vmatprep.mubr.bf16.mxu0 0
    %1475 = vmatmul.mubr.bf16.gmra.mrb[0].mxu0 %v967
    %v1476 = vpop.f32.mrb[0].mxu0
    %v1477 = vadd.f32 0.0, %v1476
    %v1478 = vpop.f32.mrb[0].mxu0
    %v1479 = vadd.f32 0.0, %v1478
    %v1480 = vpop.f32.mrb[0].mxu0
    %v1481 = vpop.f32.mrb[0].mxu0
    %1482 = vdwg.mxu0
    %v1483 = vadd.f32 %v1397, %v1436
    %v1484 = vadd.f32 %v1398, %v1438
    %v1485 = vadd.f32 %v1399, %v1477
    %v1486 = vadd.f32 %v1400, %v1479
    %v1487 = vxor.u32 %v1483, 2147483648
    %v1488 = vmul.f32 %v1487, 1.442695
    %v1489 = vpow.pop %v1488
    %v1490 = vadd.f32 %v1489, 1.0
    %v1491 = vrcp.pop %v1490
    %v1492 = vmul.f32 1.0, %v1491
    %v1493 = vxor.u32 %v1484, 2147483648
    %v1494 = vmul.f32 %v1493, 1.442695
    %v1495 = vpow.pop %v1494
    %v1496 = vadd.f32 %v1495, 1.0
    %v1497 = vrcp.pop %v1496
    %v1498 = vmul.f32 1.0, %v1497
    %v1499 = vtanh.pop %v1485
    %v1500 = vxor.u32 %v1486, 2147483648
    %v1501 = vmul.f32 %v1500, 1.442695
    %v1502 = vpow.pop %v1501
    %v1503 = vadd.f32 %v1502, 1.0
    %v1504 = vrcp.pop %v1503
    %v1505 = vmul.f32 1.0, %v1504
    %v1506 = vmul.f32 %v1498, %v964
    %v1507 = vmul.f32 %v1492, %v1499
    %v1508 = vadd.f32 %v1506, %v1507
    %v1509 = vtanh.pop %v1508
    %v1510 = vmul.f32 %v1505, %v1509
    %v1511 = vpack.c.bf16 %v1510, %v1510
    %v1512 = vpack.c.bf16 %v1394, %v1394
    %1513 = vmatprep.subr.bf16.mxu0 %v1162
    %1514 = vmatpush1.bf16.msra.mxu0 %v1161
    %1515 = vmatprep.subr.bf16.mxu0 %v1166
    %1516 = vmatpush1.bf16.msra.mxu0 %v1165
    %1517 = vmatprep.subr.bf16.mxu0 %v1170
    %1518 = vmatpush1.bf16.msra.mxu0 %v1169
    %1519 = vmatprep.subr.bf16.mxu0 %v1174
    %1520 = vmatpush1.bf16.msra.mxu0 %v1173
    %1521 = vmatprep.subr.bf16.mxu0 %v1178
    %1522 = vmatpush1.bf16.msra.mxu0 %v1177
    %1523 = vmatprep.subr.bf16.mxu0 %v1182
    %1524 = vmatpush1.bf16.msra.mxu0 %v1181
    %1525 = vmatprep.subr.bf16.mxu0 %v1186
    %1526 = vmatpush1.bf16.msra.mxu0 %v1185
    %1527 = vmatprep.subr.bf16.mxu0 %v1190
    %1528 = vmatpush1.bf16.msra.mxu0 %v1189
    %1529 = vmatprep.subr.bf16.mxu0 %v1194
    %1530 = vmatpush1.bf16.msra.mxu0 %v1193
    %1531 = vmatprep.subr.bf16.mxu0 %v1198
    %1532 = vmatpush1.bf16.msra.mxu0 %v1197
    %1533 = vmatprep.subr.bf16.mxu0 %v1202
    %1534 = vmatpush1.bf16.msra.mxu0 %v1201
    %1535 = vmatprep.subr.bf16.mxu0 %v1206
    %1536 = vmatpush1.bf16.msra.mxu0 %v1205
    %1537 = vmatprep.subr.bf16.mxu0 %v1210
    %1538 = vmatpush1.bf16.msra.mxu0 %v1209
    %1539 = vmatprep.subr.bf16.mxu0 %v1214
    %1540 = vmatpush1.bf16.msra.mxu0 %v1213
    %1541 = vmatprep.subr.bf16.mxu0 %v1218
    %1542 = vmatpush1.bf16.msra.mxu0 %v1217
    %1543 = vmatprep.subr.bf16.mxu0 %v1222
    %1544 = vmatpush1.bf16.msra.mxu0 %v1221
    %1545 = vmatprep.mubr.bf16.mxu0 %v1512
    %1546 = vmatmul.mubr.bf16.gmra.mrb[0].mxu0 %v1511
    %v1547 = vpop.f32.mrb[0].mxu0
    %v1548 = vadd.f32 %v671, %v1547
    %v1549 = vpop.f32.mrb[0].mxu0
    %v1550 = vadd.f32 %v675, %v1549
    %v1551 = vpop.f32.mrb[0].mxu0
    %v1552 = vpop.f32.mrb[0].mxu0
    %1553 = vdwg.mxu0
    %1554 = vmatprep.subr.bf16.mxu0 %v1164
    %1555 = vmatpush1.bf16.msra.mxu0 %v1163
    %1556 = vmatprep.subr.bf16.mxu0 %v1168
    %1557 = vmatpush1.bf16.msra.mxu0 %v1167
    %1558 = vmatprep.subr.bf16.mxu0 %v1172
    %1559 = vmatpush1.bf16.msra.mxu0 %v1171
    %1560 = vmatprep.subr.bf16.mxu0 %v1176
    %1561 = vmatpush1.bf16.msra.mxu0 %v1175
    %1562 = vmatprep.subr.bf16.mxu0 %v1180
    %1563 = vmatpush1.bf16.msra.mxu0 %v1179
    %1564 = vmatprep.subr.bf16.mxu0 %v1184
    %1565 = vmatpush1.bf16.msra.mxu0 %v1183
    %1566 = vmatprep.subr.bf16.mxu0 %v1188
    %1567 = vmatpush1.bf16.msra.mxu0 %v1187
    %1568 = vmatprep.subr.bf16.mxu0 %v1192
    %1569 = vmatpush1.bf16.msra.mxu0 %v1191
    %1570 = vmatprep.subr.bf16.mxu0 %v1196
    %1571 = vmatpush1.bf16.msra.mxu0 %v1195
    %1572 = vmatprep.subr.bf16.mxu0 %v1200
    %1573 = vmatpush1.bf16.msra.mxu0 %v1199
    %1574 = vmatprep.subr.bf16.mxu0 %v1204
    %1575 = vmatpush1.bf16.msra.mxu0 %v1203
    %1576 = vmatprep.subr.bf16.mxu0 %v1208
    %1577 = vmatpush1.bf16.msra.mxu0 %v1207
    %1578 = vmatprep.subr.bf16.mxu0 %v1212
    %1579 = vmatpush1.bf16.msra.mxu0 %v1211
    %1580 = vmatprep.subr.bf16.mxu0 %v1216
    %1581 = vmatpush1.bf16.msra.mxu0 %v1215
    %1582 = vmatprep.subr.bf16.mxu0 %v1220
    %1583 = vmatpush1.bf16.msra.mxu0 %v1219
    %1584 = vmatprep.subr.bf16.mxu0 %v1224
    %1585 = vmatpush1.bf16.msra.mxu0 %v1223
    %1586 = vmatprep.mubr.bf16.mxu0 %v1512
    %1587 = vmatmul.mubr.bf16.gmra.mrb[0].mxu0 %v1511
    %v1588 = vpop.f32.mrb[0].mxu0
    %v1589 = vadd.f32 %v679, %v1588
    %v1590 = vpop.f32.mrb[0].mxu0
    %v1591 = vadd.f32 %v683, %v1590
    %v1592 = vpop.f32.mrb[0].mxu0
    %v1593 = vpop.f32.mrb[0].mxu0
    %1594 = vdwg.mxu0
    %v1595 = vxor.u32 %v1548, 2147483648
    %v1596 = vmul.f32 %v1595, 1.442695
    %v1597 = vpow.pop %v1596
    %v1598 = vadd.f32 %v1597, 1.0
    %v1599 = vrcp.pop %v1598
    %v1600 = vmul.f32 1.0, %v1599
    %v1601 = vxor.u32 %v1550, 2147483648
    %v1602 = vmul.f32 %v1601, 1.442695
    %v1603 = vpow.pop %v1602
    %v1604 = vadd.f32 %v1603, 1.0
    %v1605 = vrcp.pop %v1604
    %v1606 = vmul.f32 1.0, %v1605
    %v1607 = vtanh.pop %v1589
    %v1608 = vxor.u32 %v1591, 2147483648
    %v1609 = vmul.f32 %v1608, 1.442695
    %v1610 = vpow.pop %v1609
    %v1611 = vadd.f32 %v1610, 1.0
    %v1612 = vrcp.pop %v1611
    %v1613 = vmul.f32 1.0, %v1612
    %v1614 = vmul.f32 %v1606, %v1392
    %v1615 = vmul.f32 %v1600, %v1607
    %v1616 = vadd.f32 %v1614, %v1615
    %v1617 = vtanh.pop %v1616
    %v1618 = vmul.f32 %v1613, %v1617
    %s1619 = scalar_lea.vmem [#allocation7], 8
    %1620 = vst [vmem:[%s1619] sm:$0xff] %v1618
    %s1621 = scalar_lea.vmem [#allocation6], 64
    %v1622 = vld [vmem:[%s1621] sm:$0xff]
    %v1623 = vld [vmem:[%s1621 + $0x8] sm:$0xff]
    %v1624 = vld [vmem:[%s1621 + $0x10] sm:$0xff]
    %v1625 = vld [vmem:[%s1621 + $0x18] sm:$0xff]
    %1626 = vmatprep.subr.bf16.mxu0 %v794
    %1627 = vmatpush1.bf16.msra.mxu0 %v793
    %1628 = vmatprep.subr.bf16.mxu0 %v798
    %1629 = vmatpush1.bf16.msra.mxu0 %v797
    %1630 = vmatprep.subr.bf16.mxu0 %v802
    %1631 = vmatpush1.bf16.msra.mxu0 %v801
    %1632 = vmatprep.subr.bf16.mxu0 %v806
    %1633 = vmatpush1.bf16.msra.mxu0 %v805
    %1634 = vmatprep.subr.bf16.mxu0 %v810
    %1635 = vmatpush1.bf16.msra.mxu0 %v809
    %1636 = vmatprep.subr.bf16.mxu0 %v814
    %1637 = vmatpush1.bf16.msra.mxu0 %v813
    %1638 = vmatprep.subr.bf16.mxu0 %v818
    %1639 = vmatpush1.bf16.msra.mxu0 %v817
    %1640 = vmatprep.subr.bf16.mxu0 %v822
    %1641 = vmatpush1.bf16.msra.mxu0 %v821
    %1642 = vmatprep.subr.bf16.mxu0 0
    %1643 = vmatpush1.bf16.msra.mxu0 0
    %1644 = vmatprep.subr.bf16.mxu0 0
    %1645 = vmatpush1.bf16.msra.mxu0 0
    %1646 = vmatprep.subr.bf16.mxu0 0
    %1647 = vmatpush1.bf16.msra.mxu0 0
    %1648 = vmatprep.subr.bf16.mxu0 0
    %1649 = vmatpush1.bf16.msra.mxu0 0
    %1650 = vmatprep.subr.bf16.mxu0 0
    %1651 = vmatpush1.bf16.msra.mxu0 0
    %1652 = vmatprep.subr.bf16.mxu0 0
    %1653 = vmatpush1.bf16.msra.mxu0 0
    %1654 = vmatprep.subr.bf16.mxu0 0
    %1655 = vmatpush1.bf16.msra.mxu0 0
    %1656 = vmatprep.subr.bf16.mxu0 0
    %1657 = vmatpush1.bf16.msra.mxu0 0
    %1658 = vmatprep.mubr.bf16.mxu0 0
    %1659 = vmatmul.mubr.bf16.gmra.mrb[0].mxu0 %v1511
    %v1660 = vpop.f32.mrb[0].mxu0
    %v1661 = vadd.f32 0.0, %v1660
    %v1662 = vpop.f32.mrb[0].mxu0
    %v1663 = vadd.f32 0.0, %v1662
    %v1664 = vpop.f32.mrb[0].mxu0
    %v1665 = vpop.f32.mrb[0].mxu0
    %1666 = vdwg.mxu0
    %1667 = vmatprep.subr.bf16.mxu0 %v796
    %1668 = vmatpush1.bf16.msra.mxu0 %v795
    %1669 = vmatprep.subr.bf16.mxu0 %v800
    %1670 = vmatpush1.bf16.msra.mxu0 %v799
    %1671 = vmatprep.subr.bf16.mxu0 %v804
    %1672 = vmatpush1.bf16.msra.mxu0 %v803
    %1673 = vmatprep.subr.bf16.mxu0 %v808
    %1674 = vmatpush1.bf16.msra.mxu0 %v807
    %1675 = vmatprep.subr.bf16.mxu0 %v812
    %1676 = vmatpush1.bf16.msra.mxu0 %v811
    %1677 = vmatprep.subr.bf16.mxu0 %v816
    %1678 = vmatpush1.bf16.msra.mxu0 %v815
    %1679 = vmatprep.subr.bf16.mxu0 %v820
    %1680 = vmatpush1.bf16.msra.mxu0 %v819
    %1681 = vmatprep.subr.bf16.mxu0 %v824
    %1682 = vmatpush1.bf16.msra.mxu0 %v823
    %1683 = vmatprep.subr.bf16.mxu0 0
    %1684 = vmatpush1.bf16.msra.mxu0 0
    %1685 = vmatprep.subr.bf16.mxu0 0
    %1686 = vmatpush1.bf16.msra.mxu0 0
    %1687 = vmatprep.subr.bf16.mxu0 0
    %1688 = vmatpush1.bf16.msra.mxu0 0
    %1689 = vmatprep.subr.bf16.mxu0 0
    %1690 = vmatpush1.bf16.msra.mxu0 0
    %1691 = vmatprep.subr.bf16.mxu0 0
    %1692 = vmatpush1.bf16.msra.mxu0 0
    %1693 = vmatprep.subr.bf16.mxu0 0
    %1694 = vmatpush1.bf16.msra.mxu0 0
    %1695 = vmatprep.subr.bf16.mxu0 0
    %1696 = vmatpush1.bf16.msra.mxu0 0
    %1697 = vmatprep.subr.bf16.mxu0 0
    %1698 = vmatpush1.bf16.msra.mxu0 0
    %1699 = vmatprep.mubr.bf16.mxu0 0
    %1700 = vmatmul.mubr.bf16.gmra.mrb[0].mxu0 %v1511
    %v1701 = vpop.f32.mrb[0].mxu0
    %v1702 = vadd.f32 0.0, %v1701
    %v1703 = vpop.f32.mrb[0].mxu0
    %v1704 = vadd.f32 0.0, %v1703
    %v1705 = vpop.f32.mrb[0].mxu0
    %v1706 = vpop.f32.mrb[0].mxu0
    %1707 = vdwg.mxu0
    %v1708 = vadd.f32 %v1622, %v1661
    %v1709 = vadd.f32 %v1623, %v1663
    %v1710 = vadd.f32 %v1624, %v1702
    %v1711 = vadd.f32 %v1625, %v1704
    %v1712 = vxor.u32 %v1708, 2147483648
    %v1713 = vmul.f32 %v1712, 1.442695
    %v1714 = vpow.pop %v1713
    %v1715 = vadd.f32 %v1714, 1.0
    %v1716 = vrcp.pop %v1715
    %v1717 = vmul.f32 1.0, %v1716
    %v1718 = vxor.u32 %v1709, 2147483648
    %v1719 = vmul.f32 %v1718, 1.442695
    %v1720 = vpow.pop %v1719
    %v1721 = vadd.f32 %v1720, 1.0
    %v1722 = vrcp.pop %v1721
    %v1723 = vmul.f32 1.0, %v1722
    %v1724 = vtanh.pop %v1710
    %v1725 = vxor.u32 %v1711, 2147483648
    %v1726 = vmul.f32 %v1725, 1.442695
    %v1727 = vpow.pop %v1726
    %v1728 = vadd.f32 %v1727, 1.0
    %v1729 = vrcp.pop %v1728
    %v1730 = vmul.f32 1.0, %v1729
    %v1731 = vmul.f32 %v1723, %v1508
    %v1732 = vmul.f32 %v1717, %v1724
    %v1733 = vadd.f32 %v1731, %v1732
    %v1734 = vtanh.pop %v1733
    %v1735 = vmul.f32 %v1730, %v1734
    %v1736 = vpack.c.bf16 %v1735, %v1735
    %v1737 = vpack.c.bf16 %v1618, %v1618
    %1738 = vmatprep.subr.bf16.mxu0 %v1162
    %1739 = vmatpush1.bf16.msra.mxu0 %v1161
    %1740 = vmatprep.subr.bf16.mxu0 %v1166
    %1741 = vmatpush1.bf16.msra.mxu0 %v1165
    %1742 = vmatprep.subr.bf16.mxu0 %v1170
    %1743 = vmatpush1.bf16.msra.mxu0 %v1169
    %1744 = vmatprep.subr.bf16.mxu0 %v1174
    %1745 = vmatpush1.bf16.msra.mxu0 %v1173
    %1746 = vmatprep.subr.bf16.mxu0 %v1178
    %1747 = vmatpush1.bf16.msra.mxu0 %v1177
    %1748 = vmatprep.subr.bf16.mxu0 %v1182
    %1749 = vmatpush1.bf16.msra.mxu0 %v1181
    %1750 = vmatprep.subr.bf16.mxu0 %v1186
    %1751 = vmatpush1.bf16.msra.mxu0 %v1185
    %1752 = vmatprep.subr.bf16.mxu0 %v1190
    %1753 = vmatpush1.bf16.msra.mxu0 %v1189
    %1754 = vmatprep.subr.bf16.mxu0 %v1194
    %1755 = vmatpush1.bf16.msra.mxu0 %v1193
    %1756 = vmatprep.subr.bf16.mxu0 %v1198
    %1757 = vmatpush1.bf16.msra.mxu0 %v1197
    %1758 = vmatprep.subr.bf16.mxu0 %v1202
    %1759 = vmatpush1.bf16.msra.mxu0 %v1201
    %1760 = vmatprep.subr.bf16.mxu0 %v1206
    %1761 = vmatpush1.bf16.msra.mxu0 %v1205
    %1762 = vmatprep.subr.bf16.mxu0 %v1210
    %1763 = vmatpush1.bf16.msra.mxu0 %v1209
    %1764 = vmatprep.subr.bf16.mxu0 %v1214
    %1765 = vmatpush1.bf16.msra.mxu0 %v1213
    %1766 = vmatprep.subr.bf16.mxu0 %v1218
    %1767 = vmatpush1.bf16.msra.mxu0 %v1217
    %1768 = vmatprep.subr.bf16.mxu0 %v1222
    %1769 = vmatpush1.bf16.msra.mxu0 %v1221
    %1770 = vmatprep.mubr.bf16.mxu0 %v1737
    %1771 = vmatmul.mubr.bf16.gmra.mrb[0].mxu0 %v1736
    %v1772 = vpop.f32.mrb[0].mxu0
    %v1773 = vadd.f32 %v671, %v1772
    %v1774 = vpop.f32.mrb[0].mxu0
    %v1775 = vadd.f32 %v675, %v1774
    %v1776 = vpop.f32.mrb[0].mxu0
    %v1777 = vpop.f32.mrb[0].mxu0
    %1778 = vdwg.mxu0
    %1779 = vmatprep.subr.bf16.mxu0 %v1164
    %1780 = vmatpush1.bf16.msra.mxu0 %v1163
    %1781 = vmatprep.subr.bf16.mxu0 %v1168
    %1782 = vmatpush1.bf16.msra.mxu0 %v1167
    %1783 = vmatprep.subr.bf16.mxu0 %v1172
    %1784 = vmatpush1.bf16.msra.mxu0 %v1171
    %1785 = vmatprep.subr.bf16.mxu0 %v1176
    %1786 = vmatpush1.bf16.msra.mxu0 %v1175
    %1787 = vmatprep.subr.bf16.mxu0 %v1180
    %1788 = vmatpush1.bf16.msra.mxu0 %v1179
    %1789 = vmatprep.subr.bf16.mxu0 %v1184
    %1790 = vmatpush1.bf16.msra.mxu0 %v1183
    %1791 = vmatprep.subr.bf16.mxu0 %v1188
    %1792 = vmatpush1.bf16.msra.mxu0 %v1187
    %1793 = vmatprep.subr.bf16.mxu0 %v1192
    %1794 = vmatpush1.bf16.msra.mxu0 %v1191
    %1795 = vmatprep.subr.bf16.mxu0 %v1196
    %1796 = vmatpush1.bf16.msra.mxu0 %v1195
    %1797 = vmatprep.subr.bf16.mxu0 %v1200
    %1798 = vmatpush1.bf16.msra.mxu0 %v1199
    %1799 = vmatprep.subr.bf16.mxu0 %v1204
    %1800 = vmatpush1.bf16.msra.mxu0 %v1203
    %1801 = vmatprep.subr.bf16.mxu0 %v1208
    %1802 = vmatpush1.bf16.msra.mxu0 %v1207
    %1803 = vmatprep.subr.bf16.mxu0 %v1212
    %1804 = vmatpush1.bf16.msra.mxu0 %v1211
    %1805 = vmatprep.subr.bf16.mxu0 %v1216
    %1806 = vmatpush1.bf16.msra.mxu0 %v1215
    %1807 = vmatprep.subr.bf16.mxu0 %v1220
    %1808 = vmatpush1.bf16.msra.mxu0 %v1219
    %1809 = vmatprep.subr.bf16.mxu0 %v1224
    %1810 = vmatpush1.bf16.msra.mxu0 %v1223
    %1811 = vmatprep.mubr.bf16.mxu0 %v1737
    %1812 = vmatmul.mubr.bf16.gmra.mrb[0].mxu0 %v1736
    %v1813 = vpop.f32.mrb[0].mxu0
    %v1814 = vadd.f32 %v679, %v1813
    %v1815 = vpop.f32.mrb[0].mxu0
    %v1816 = vadd.f32 %v683, %v1815
    %v1817 = vpop.f32.mrb[0].mxu0
    %v1818 = vpop.f32.mrb[0].mxu0
    %1819 = vdwg.mxu0
    %v1820 = vxor.u32 %v1773, 2147483648
    %v1821 = vmul.f32 %v1820, 1.442695
    %v1822 = vpow.pop %v1821
    %v1823 = vadd.f32 %v1822, 1.0
    %v1824 = vrcp.pop %v1823
    %v1825 = vmul.f32 1.0, %v1824
    %v1826 = vxor.u32 %v1775, 2147483648
    %v1827 = vmul.f32 %v1826, 1.442695
    %v1828 = vpow.pop %v1827
    %v1829 = vadd.f32 %v1828, 1.0
    %v1830 = vrcp.pop %v1829
    %v1831 = vmul.f32 1.0, %v1830
    %v1832 = vtanh.pop %v1814
    %v1833 = vxor.u32 %v1816, 2147483648
    %v1834 = vmul.f32 %v1833, 1.442695
    %v1835 = vpow.pop %v1834
    %v1836 = vadd.f32 %v1835, 1.0
    %v1837 = vrcp.pop %v1836
    %v1838 = vmul.f32 1.0, %v1837
    %v1839 = vmul.f32 %v1831, %v1616
    %v1840 = vmul.f32 %v1825, %v1832
    %v1841 = vadd.f32 %v1839, %v1840
    %v1842 = vtanh.pop %v1841
    %v1843 = vmul.f32 %v1838, %v1842
    %s1844 = scalar_lea.vmem [#allocation7], 16
    %1845 = vst [vmem:[%s1844] sm:$0xff] %v1843
    %s1846 = scalar_lea.vmem [#allocation6], 96
    %v1847 = vld [vmem:[%s1846] sm:$0xff]
    %v1848 = vld [vmem:[%s1846 + $0x8] sm:$0xff]
    %v1849 = vld [vmem:[%s1846 + $0x10] sm:$0xff]
    %v1850 = vld [vmem:[%s1846 + $0x18] sm:$0xff]
    %1851 = vmatprep.subr.bf16.mxu0 %v794
    %1852 = vmatpush1.bf16.msra.mxu0 %v793
    %1853 = vmatprep.subr.bf16.mxu0 %v798
    %1854 = vmatpush1.bf16.msra.mxu0 %v797
    %1855 = vmatprep.subr.bf16.mxu0 %v802
    %1856 = vmatpush1.bf16.msra.mxu0 %v801
    %1857 = vmatprep.subr.bf16.mxu0 %v806
    %1858 = vmatpush1.bf16.msra.mxu0 %v805
    %1859 = vmatprep.subr.bf16.mxu0 %v810
    %1860 = vmatpush1.bf16.msra.mxu0 %v809
    %1861 = vmatprep.subr.bf16.mxu0 %v814
    %1862 = vmatpush1.bf16.msra.mxu0 %v813
    %1863 = vmatprep.subr.bf16.mxu0 %v818
    %1864 = vmatpush1.bf16.msra.mxu0 %v817
    %1865 = vmatprep.subr.bf16.mxu0 %v822
    %1866 = vmatpush1.bf16.msra.mxu0 %v821
    %1867 = vmatprep.subr.bf16.mxu0 0
    %1868 = vmatpush1.bf16.msra.mxu0 0
    %1869 = vmatprep.subr.bf16.mxu0 0
    %1870 = vmatpush1.bf16.msra.mxu0 0
    %1871 = vmatprep.subr.bf16.mxu0 0
    %1872 = vmatpush1.bf16.msra.mxu0 0
    %1873 = vmatprep.subr.bf16.mxu0 0
    %1874 = vmatpush1.bf16.msra.mxu0 0
    %1875 = vmatprep.subr.bf16.mxu0 0
    %1876 = vmatpush1.bf16.msra.mxu0 0
    %1877 = vmatprep.subr.bf16.mxu0 0
    %1878 = vmatpush1.bf16.msra.mxu0 0
    %1879 = vmatprep.subr.bf16.mxu0 0
    %1880 = vmatpush1.bf16.msra.mxu0 0
    %1881 = vmatprep.subr.bf16.mxu0 0
    %1882 = vmatpush1.bf16.msra.mxu0 0
    %1883 = vmatprep.mubr.bf16.mxu0 0
    %1884 = vmatmul.mubr.bf16.gmra.mrb[0].mxu0 %v1736
    %v1885 = vpop.f32.mrb[0].mxu0
    %v1886 = vadd.f32 0.0, %v1885
    %v1887 = vpop.f32.mrb[0].mxu0
    %v1888 = vadd.f32 0.0, %v1887
    %v1889 = vpop.f32.mrb[0].mxu0
    %v1890 = vpop.f32.mrb[0].mxu0
    %1891 = vdwg.mxu0
    %1892 = vmatprep.subr.bf16.mxu0 %v796
    %1893 = vmatpush1.bf16.msra.mxu0 %v795
    %1894 = vmatprep.subr.bf16.mxu0 %v800
    %1895 = vmatpush1.bf16.msra.mxu0 %v799
    %1896 = vmatprep.subr.bf16.mxu0 %v804
    %1897 = vmatpush1.bf16.msra.mxu0 %v803
    %1898 = vmatprep.subr.bf16.mxu0 %v808
    %1899 = vmatpush1.bf16.msra.mxu0 %v807
    %1900 = vmatprep.subr.bf16.mxu0 %v812
    %1901 = vmatpush1.bf16.msra.mxu0 %v811
    %1902 = vmatprep.subr.bf16.mxu0 %v816
    %1903 = vmatpush1.bf16.msra.mxu0 %v815
    %1904 = vmatprep.subr.bf16.mxu0 %v820
    %1905 = vmatpush1.bf16.msra.mxu0 %v819
    %1906 = vmatprep.subr.bf16.mxu0 %v824
    %1907 = vmatpush1.bf16.msra.mxu0 %v823
    %1908 = vmatprep.subr.bf16.mxu0 0
    %1909 = vmatpush1.bf16.msra.mxu0 0
    %1910 = vmatprep.subr.bf16.mxu0 0
    %1911 = vmatpush1.bf16.msra.mxu0 0
    %1912 = vmatprep.subr.bf16.mxu0 0
    %1913 = vmatpush1.bf16.msra.mxu0 0
    %1914 = vmatprep.subr.bf16.mxu0 0
    %1915 = vmatpush1.bf16.msra.mxu0 0
    %1916 = vmatprep.subr.bf16.mxu0 0
    %1917 = vmatpush1.bf16.msra.mxu0 0
    %1918 = vmatprep.subr.bf16.mxu0 0
    %1919 = vmatpush1.bf16.msra.mxu0 0
    %1920 = vmatprep.subr.bf16.mxu0 0
    %1921 = vmatpush1.bf16.msra.mxu0 0
    %1922 = vmatprep.subr.bf16.mxu0 0
    %1923 = vmatpush1.bf16.msra.mxu0 0
    %1924 = vmatprep.mubr.bf16.mxu0 0
    %1925 = vmatmul.mubr.bf16.gmra.mrb[0].mxu0 %v1736
    %v1926 = vpop.f32.mrb[0].mxu0
    %v1927 = vadd.f32 0.0, %v1926
    %v1928 = vpop.f32.mrb[0].mxu0
    %v1929 = vadd.f32 0.0, %v1928
    %v1930 = vpop.f32.mrb[0].mxu0
    %v1931 = vpop.f32.mrb[0].mxu0
    %1932 = vdwg.mxu0
    %v1933 = vadd.f32 %v1847, %v1886
    %v1934 = vadd.f32 %v1848, %v1888
    %v1935 = vadd.f32 %v1849, %v1927
    %v1936 = vadd.f32 %v1850, %v1929
    %v1937 = vxor.u32 %v1933, 2147483648
    %v1938 = vmul.f32 %v1937, 1.442695
    %v1939 = vpow.pop %v1938
    %v1940 = vadd.f32 %v1939, 1.0
    %v1941 = vrcp.pop %v1940
    %v1942 = vmul.f32 1.0, %v1941
    %v1943 = vxor.u32 %v1934, 2147483648
    %v1944 = vmul.f32 %v1943, 1.442695
    %v1945 = vpow.pop %v1944
    %v1946 = vadd.f32 %v1945, 1.0
    %v1947 = vrcp.pop %v1946
    %v1948 = vmul.f32 1.0, %v1947
    %v1949 = vtanh.pop %v1935
    %v1950 = vxor.u32 %v1936, 2147483648
    %v1951 = vmul.f32 %v1950, 1.442695
    %v1952 = vpow.pop %v1951
    %v1953 = vadd.f32 %v1952, 1.0
    %v1954 = vrcp.pop %v1953
    %v1955 = vmul.f32 1.0, %v1954
    %v1956 = vmul.f32 %v1948, %v1733
    %v1957 = vmul.f32 %v1942, %v1949
    %v1958 = vadd.f32 %v1956, %v1957
    %v1959 = vtanh.pop %v1958
    %v1960 = vmul.f32 %v1955, %v1959
    %v1961 = vpack.c.bf16 %v1960, %v1960
    %v1962 = vpack.c.bf16 %v1843, %v1843
    %1963 = vmatprep.subr.bf16.mxu0 %v1162
    %1964 = vmatpush1.bf16.msra.mxu0 %v1161
    %1965 = vmatprep.subr.bf16.mxu0 %v1166
    %1966 = vmatpush1.bf16.msra.mxu0 %v1165
    %1967 = vmatprep.subr.bf16.mxu0 %v1170
    %1968 = vmatpush1.bf16.msra.mxu0 %v1169
    %1969 = vmatprep.subr.bf16.mxu0 %v1174
    %1970 = vmatpush1.bf16.msra.mxu0 %v1173
    %1971 = vmatprep.subr.bf16.mxu0 %v1178
    %1972 = vmatpush1.bf16.msra.mxu0 %v1177
    %1973 = vmatprep.subr.bf16.mxu0 %v1182
    %1974 = vmatpush1.bf16.msra.mxu0 %v1181
    %1975 = vmatprep.subr.bf16.mxu0 %v1186
    %1976 = vmatpush1.bf16.msra.mxu0 %v1185
    %1977 = vmatprep.subr.bf16.mxu0 %v1190
    %1978 = vmatpush1.bf16.msra.mxu0 %v1189
    %1979 = vmatprep.subr.bf16.mxu0 %v1194
    %1980 = vmatpush1.bf16.msra.mxu0 %v1193
    %1981 = vmatprep.subr.bf16.mxu0 %v1198
    %1982 = vmatpush1.bf16.msra.mxu0 %v1197
    %1983 = vmatprep.subr.bf16.mxu0 %v1202
    %1984 = vmatpush1.bf16.msra.mxu0 %v1201
    %1985 = vmatprep.subr.bf16.mxu0 %v1206
    %1986 = vmatpush1.bf16.msra.mxu0 %v1205
    %1987 = vmatprep.subr.bf16.mxu0 %v1210
    %1988 = vmatpush1.bf16.msra.mxu0 %v1209
    %1989 = vmatprep.subr.bf16.mxu0 %v1214
    %1990 = vmatpush1.bf16.msra.mxu0 %v1213
    %1991 = vmatprep.subr.bf16.mxu0 %v1218
    %1992 = vmatpush1.bf16.msra.mxu0 %v1217
    %1993 = vmatprep.subr.bf16.mxu0 %v1222
    %1994 = vmatpush1.bf16.msra.mxu0 %v1221
    %1995 = vmatprep.mubr.bf16.mxu0 %v1962
    %1996 = vmatmul.mubr.bf16.gmra.mrb[0].mxu0 %v1961
    %v1997 = vpop.f32.mrb[0].mxu0
    %v1998 = vadd.f32 %v671, %v1997
    %v1999 = vpop.f32.mrb[0].mxu0
    %v2000 = vadd.f32 %v675, %v1999
    %v2001 = vpop.f32.mrb[0].mxu0
    %v2002 = vpop.f32.mrb[0].mxu0
    %2003 = vdwg.mxu0
    %2004 = vmatprep.subr.bf16.mxu0 %v1164
    %2005 = vmatpush1.bf16.msra.mxu0 %v1163
    %2006 = vmatprep.subr.bf16.mxu0 %v1168
    %2007 = vmatpush1.bf16.msra.mxu0 %v1167
    %2008 = vmatprep.subr.bf16.mxu0 %v1172
    %2009 = vmatpush1.bf16.msra.mxu0 %v1171
    %2010 = vmatprep.subr.bf16.mxu0 %v1176
    %2011 = vmatpush1.bf16.msra.mxu0 %v1175
    %2012 = vmatprep.subr.bf16.mxu0 %v1180
    %2013 = vmatpush1.bf16.msra.mxu0 %v1179
    %2014 = vmatprep.subr.bf16.mxu0 %v1184
    %2015 = vmatpush1.bf16.msra.mxu0 %v1183
    %2016 = vmatprep.subr.bf16.mxu0 %v1188
    %2017 = vmatpush1.bf16.msra.mxu0 %v1187
    %2018 = vmatprep.subr.bf16.mxu0 %v1192
    %2019 = vmatpush1.bf16.msra.mxu0 %v1191
    %2020 = vmatprep.subr.bf16.mxu0 %v1196
    %2021 = vmatpush1.bf16.msra.mxu0 %v1195
    %2022 = vmatprep.subr.bf16.mxu0 %v1200
    %2023 = vmatpush1.bf16.msra.mxu0 %v1199
    %2024 = vmatprep.subr.bf16.mxu0 %v1204
    %2025 = vmatpush1.bf16.msra.mxu0 %v1203
    %2026 = vmatprep.subr.bf16.mxu0 %v1208
    %2027 = vmatpush1.bf16.msra.mxu0 %v1207
    %2028 = vmatprep.subr.bf16.mxu0 %v1212
    %2029 = vmatpush1.bf16.msra.mxu0 %v1211
    %2030 = vmatprep.subr.bf16.mxu0 %v1216
    %2031 = vmatpush1.bf16.msra.mxu0 %v1215
    %2032 = vmatprep.subr.bf16.mxu0 %v1220
    %2033 = vmatpush1.bf16.msra.mxu0 %v1219
    %2034 = vmatprep.subr.bf16.mxu0 %v1224
    %2035 = vmatpush1.bf16.msra.mxu0 %v1223
    %2036 = vmatprep.mubr.bf16.mxu0 %v1962
    %2037 = vmatmul.mubr.bf16.gmra.mrb[0].mxu0 %v1961
    %v2038 = vpop.f32.mrb[0].mxu0
    %v2039 = vadd.f32 %v679, %v2038
    %v2040 = vpop.f32.mrb[0].mxu0
    %v2041 = vadd.f32 %v683, %v2040
    %v2042 = vpop.f32.mrb[0].mxu0
    %v2043 = vpop.f32.mrb[0].mxu0
    %2044 = vdwg.mxu0
    %v2045 = vxor.u32 %v1998, 2147483648
    %v2046 = vmul.f32 %v2045, 1.442695
    %v2047 = vpow.pop %v2046
    %v2048 = vadd.f32 %v2047, 1.0
    %v2049 = vrcp.pop %v2048
    %v2050 = vmul.f32 1.0, %v2049
    %v2051 = vxor.u32 %v2000, 2147483648
    %v2052 = vmul.f32 %v2051, 1.442695
    %v2053 = vpow.pop %v2052
    %v2054 = vadd.f32 %v2053, 1.0
    %v2055 = vrcp.pop %v2054
    %v2056 = vmul.f32 1.0, %v2055
    %v2057 = vtanh.pop %v2039
    %v2058 = vxor.u32 %v2041, 2147483648
    %v2059 = vmul.f32 %v2058, 1.442695
    %v2060 = vpow.pop %v2059
    %v2061 = vadd.f32 %v2060, 1.0
    %v2062 = vrcp.pop %v2061
    %v2063 = vmul.f32 1.0, %v2062
    %v2064 = vmul.f32 %v2056, %v1841
    %v2065 = vmul.f32 %v2050, %v2057
    %v2066 = vadd.f32 %v2064, %v2065
    %v2067 = vtanh.pop %v2066
    %v2068 = vmul.f32 %v2063, %v2067
    %s2069 = scalar_lea.vmem [#allocation7], 24
    %2070 = vst [vmem:[%s2069] sm:$0xff] %v2068
    %s2071 = scalar_lea.vmem [#allocation6], 128
    %v2072 = vld [vmem:[%s2071] sm:$0xff]
    %v2073 = vld [vmem:[%s2071 + $0x8] sm:$0xff]
    %v2074 = vld [vmem:[%s2071 + $0x10] sm:$0xff]
    %v2075 = vld [vmem:[%s2071 + $0x18] sm:$0xff]
    %2076 = vmatprep.subr.bf16.mxu0 %v794
    %2077 = vmatpush1.bf16.msra.mxu0 %v793
    %2078 = vmatprep.subr.bf16.mxu0 %v798
    %2079 = vmatpush1.bf16.msra.mxu0 %v797
    %2080 = vmatprep.subr.bf16.mxu0 %v802
    %2081 = vmatpush1.bf16.msra.mxu0 %v801
    %2082 = vmatprep.subr.bf16.mxu0 %v806
    %2083 = vmatpush1.bf16.msra.mxu0 %v805
    %2084 = vmatprep.subr.bf16.mxu0 %v810
    %2085 = vmatpush1.bf16.msra.mxu0 %v809
    %2086 = vmatprep.subr.bf16.mxu0 %v814
    %2087 = vmatpush1.bf16.msra.mxu0 %v813
    %2088 = vmatprep.subr.bf16.mxu0 %v818
    %2089 = vmatpush1.bf16.msra.mxu0 %v817
    %2090 = vmatprep.subr.bf16.mxu0 %v822
    %2091 = vmatpush1.bf16.msra.mxu0 %v821
    %2092 = vmatprep.subr.bf16.mxu0 0
    %2093 = vmatpush1.bf16.msra.mxu0 0
    %2094 = vmatprep.subr.bf16.mxu0 0
    %2095 = vmatpush1.bf16.msra.mxu0 0
    %2096 = vmatprep.subr.bf16.mxu0 0
    %2097 = vmatpush1.bf16.msra.mxu0 0
    %2098 = vmatprep.subr.bf16.mxu0 0
    %2099 = vmatpush1.bf16.msra.mxu0 0
    %2100 = vmatprep.subr.bf16.mxu0 0
    %2101 = vmatpush1.bf16.msra.mxu0 0
    %2102 = vmatprep.subr.bf16.mxu0 0
    %2103 = vmatpush1.bf16.msra.mxu0 0
    %2104 = vmatprep.subr.bf16.mxu0 0
    %2105 = vmatpush1.bf16.msra.mxu0 0
    %2106 = vmatprep.subr.bf16.mxu0 0
    %2107 = vmatpush1.bf16.msra.mxu0 0
    %2108 = vmatprep.mubr.bf16.mxu0 0
    %2109 = vmatmul.mubr.bf16.gmra.mrb[0].mxu0 %v1961
    %v2110 = vpop.f32.mrb[0].mxu0
    %v2111 = vadd.f32 0.0, %v2110
    %v2112 = vpop.f32.mrb[0].mxu0
    %v2113 = vadd.f32 0.0, %v2112
    %v2114 = vpop.f32.mrb[0].mxu0
    %v2115 = vpop.f32.mrb[0].mxu0
    %2116 = vdwg.mxu0
    %2117 = vmatprep.subr.bf16.mxu0 %v796
    %2118 = vmatpush1.bf16.msra.mxu0 %v795
    %2119 = vmatprep.subr.bf16.mxu0 %v800
    %2120 = vmatpush1.bf16.msra.mxu0 %v799
    %2121 = vmatprep.subr.bf16.mxu0 %v804
    %2122 = vmatpush1.bf16.msra.mxu0 %v803
    %2123 = vmatprep.subr.bf16.mxu0 %v808
    %2124 = vmatpush1.bf16.msra.mxu0 %v807
    %2125 = vmatprep.subr.bf16.mxu0 %v812
    %2126 = vmatpush1.bf16.msra.mxu0 %v811
    %2127 = vmatprep.subr.bf16.mxu0 %v816
    %2128 = vmatpush1.bf16.msra.mxu0 %v815
    %2129 = vmatprep.subr.bf16.mxu0 %v820
    %2130 = vmatpush1.bf16.msra.mxu0 %v819
    %2131 = vmatprep.subr.bf16.mxu0 %v824
    %2132 = vmatpush1.bf16.msra.mxu0 %v823
    %2133 = vmatprep.subr.bf16.mxu0 0
    %2134 = vmatpush1.bf16.msra.mxu0 0
    %2135 = vmatprep.subr.bf16.mxu0 0
    %2136 = vmatpush1.bf16.msra.mxu0 0
    %2137 = vmatprep.subr.bf16.mxu0 0
    %2138 = vmatpush1.bf16.msra.mxu0 0
    %2139 = vmatprep.subr.bf16.mxu0 0
    %2140 = vmatpush1.bf16.msra.mxu0 0
    %2141 = vmatprep.subr.bf16.mxu0 0
    %2142 = vmatpush1.bf16.msra.mxu0 0
    %2143 = vmatprep.subr.bf16.mxu0 0
    %2144 = vmatpush1.bf16.msra.mxu0 0
    %2145 = vmatprep.subr.bf16.mxu0 0
    %2146 = vmatpush1.bf16.msra.mxu0 0
    %2147 = vmatprep.subr.bf16.mxu0 0
    %2148 = vmatpush1.bf16.msra.mxu0 0
    %2149 = vmatprep.mubr.bf16.mxu0 0
    %2150 = vmatmul.mubr.bf16.gmra.mrb[0].mxu0 %v1961
    %v2151 = vpop.f32.mrb[0].mxu0
    %v2152 = vadd.f32 0.0, %v2151
    %v2153 = vpop.f32.mrb[0].mxu0
    %v2154 = vadd.f32 0.0, %v2153
    %v2155 = vpop.f32.mrb[0].mxu0
    %v2156 = vpop.f32.mrb[0].mxu0
    %2157 = vdwg.mxu0
    %v2158 = vadd.f32 %v2072, %v2111
    %v2159 = vadd.f32 %v2073, %v2113
    %v2160 = vadd.f32 %v2074, %v2152
    %v2161 = vadd.f32 %v2075, %v2154
    %v2162 = vxor.u32 %v2158, 2147483648
    %v2163 = vmul.f32 %v2162, 1.442695
    %v2164 = vpow.pop %v2163
    %v2165 = vadd.f32 %v2164, 1.0
    %v2166 = vrcp.pop %v2165
    %v2167 = vmul.f32 1.0, %v2166
    %v2168 = vxor.u32 %v2159, 2147483648
    %v2169 = vmul.f32 %v2168, 1.442695
    %v2170 = vpow.pop %v2169
    %v2171 = vadd.f32 %v2170, 1.0
    %v2172 = vrcp.pop %v2171
    %v2173 = vmul.f32 1.0, %v2172
    %v2174 = vtanh.pop %v2160
    %v2175 = vxor.u32 %v2161, 2147483648
    %v2176 = vmul.f32 %v2175, 1.442695
    %v2177 = vpow.pop %v2176
    %v2178 = vadd.f32 %v2177, 1.0
    %v2179 = vrcp.pop %v2178
    %v2180 = vmul.f32 1.0, %v2179
    %v2181 = vmul.f32 %v2173, %v1958
    %v2182 = vmul.f32 %v2167, %v2174
    %v2183 = vadd.f32 %v2181, %v2182
    %v2184 = vtanh.pop %v2183
    %v2185 = vmul.f32 %v2180, %v2184
    %v2186 = vpack.c.bf16 %v2185, %v2185
    %v2187 = vpack.c.bf16 %v2068, %v2068
    %2188 = vmatprep.subr.bf16.mxu0 %v1162
    %2189 = vmatpush1.bf16.msra.mxu0 %v1161
    %2190 = vmatprep.subr.bf16.mxu0 %v1166
    %2191 = vmatpush1.bf16.msra.mxu0 %v1165
    %2192 = vmatprep.subr.bf16.mxu0 %v1170
    %2193 = vmatpush1.bf16.msra.mxu0 %v1169
    %2194 = vmatprep.subr.bf16.mxu0 %v1174
    %2195 = vmatpush1.bf16.msra.mxu0 %v1173
    %2196 = vmatprep.subr.bf16.mxu0 %v1178
    %2197 = vmatpush1.bf16.msra.mxu0 %v1177
    %2198 = vmatprep.subr.bf16.mxu0 %v1182
    %2199 = vmatpush1.bf16.msra.mxu0 %v1181
    %2200 = vmatprep.subr.bf16.mxu0 %v1186
    %2201 = vmatpush1.bf16.msra.mxu0 %v1185
    %2202 = vmatprep.subr.bf16.mxu0 %v1190
    %2203 = vmatpush1.bf16.msra.mxu0 %v1189
    %2204 = vmatprep.subr.bf16.mxu0 %v1194
    %2205 = vmatpush1.bf16.msra.mxu0 %v1193
    %2206 = vmatprep.subr.bf16.mxu0 %v1198
    %2207 = vmatpush1.bf16.msra.mxu0 %v1197
    %2208 = vmatprep.subr.bf16.mxu0 %v1202
    %2209 = vmatpush1.bf16.msra.mxu0 %v1201
    %2210 = vmatprep.subr.bf16.mxu0 %v1206
    %2211 = vmatpush1.bf16.msra.mxu0 %v1205
    %2212 = vmatprep.subr.bf16.mxu0 %v1210
    %2213 = vmatpush1.bf16.msra.mxu0 %v1209
    %2214 = vmatprep.subr.bf16.mxu0 %v1214
    %2215 = vmatpush1.bf16.msra.mxu0 %v1213
    %2216 = vmatprep.subr.bf16.mxu0 %v1218
    %2217 = vmatpush1.bf16.msra.mxu0 %v1217
    %2218 = vmatprep.subr.bf16.mxu0 %v1222
    %2219 = vmatpush1.bf16.msra.mxu0 %v1221
    %2220 = vmatprep.mubr.bf16.mxu0 %v2187
    %2221 = vmatmul.mubr.bf16.gmra.mrb[0].mxu0 %v2186
    %v2222 = vpop.f32.mrb[0].mxu0
    %v2223 = vadd.f32 %v671, %v2222
    %v2224 = vpop.f32.mrb[0].mxu0
    %v2225 = vadd.f32 %v675, %v2224
    %v2226 = vpop.f32.mrb[0].mxu0
    %v2227 = vpop.f32.mrb[0].mxu0
    %2228 = vdwg.mxu0
    %2229 = vmatprep.subr.bf16.mxu0 %v1164
    %2230 = vmatpush1.bf16.msra.mxu0 %v1163
    %2231 = vmatprep.subr.bf16.mxu0 %v1168
    %2232 = vmatpush1.bf16.msra.mxu0 %v1167
    %2233 = vmatprep.subr.bf16.mxu0 %v1172
    %2234 = vmatpush1.bf16.msra.mxu0 %v1171
    %2235 = vmatprep.subr.bf16.mxu0 %v1176
    %2236 = vmatpush1.bf16.msra.mxu0 %v1175
    %2237 = vmatprep.subr.bf16.mxu0 %v1180
    %2238 = vmatpush1.bf16.msra.mxu0 %v1179
    %2239 = vmatprep.subr.bf16.mxu0 %v1184
    %2240 = vmatpush1.bf16.msra.mxu0 %v1183
    %2241 = vmatprep.subr.bf16.mxu0 %v1188
    %2242 = vmatpush1.bf16.msra.mxu0 %v1187
    %2243 = vmatprep.subr.bf16.mxu0 %v1192
    %2244 = vmatpush1.bf16.msra.mxu0 %v1191
    %2245 = vmatprep.subr.bf16.mxu0 %v1196
    %2246 = vmatpush1.bf16.msra.mxu0 %v1195
    %2247 = vmatprep.subr.bf16.mxu0 %v1200
    %2248 = vmatpush1.bf16.msra.mxu0 %v1199
    %2249 = vmatprep.subr.bf16.mxu0 %v1204
    %2250 = vmatpush1.bf16.msra.mxu0 %v1203
    %2251 = vmatprep.subr.bf16.mxu0 %v1208
    %2252 = vmatpush1.bf16.msra.mxu0 %v1207
    %2253 = vmatprep.subr.bf16.mxu0 %v1212
    %2254 = vmatpush1.bf16.msra.mxu0 %v1211
    %2255 = vmatprep.subr.bf16.mxu0 %v1216
    %2256 = vmatpush1.bf16.msra.mxu0 %v1215
    %2257 = vmatprep.subr.bf16.mxu0 %v1220
    %2258 = vmatpush1.bf16.msra.mxu0 %v1219
    %2259 = vmatprep.subr.bf16.mxu0 %v1224
    %2260 = vmatpush1.bf16.msra.mxu0 %v1223
    %2261 = vmatprep.mubr.bf16.mxu0 %v2187
    %2262 = vmatmul.mubr.bf16.gmra.mrb[0].mxu0 %v2186
    %v2263 = vpop.f32.mrb[0].mxu0
    %v2264 = vadd.f32 %v679, %v2263
    %v2265 = vpop.f32.mrb[0].mxu0
    %v2266 = vadd.f32 %v683, %v2265
    %v2267 = vpop.f32.mrb[0].mxu0
    %v2268 = vpop.f32.mrb[0].mxu0
    %2269 = vdwg.mxu0
    %v2270 = vxor.u32 %v2223, 2147483648
    %v2271 = vmul.f32 %v2270, 1.442695
    %v2272 = vpow.pop %v2271
    %v2273 = vadd.f32 %v2272, 1.0
    %v2274 = vrcp.pop %v2273
    %v2275 = vmul.f32 1.0, %v2274
    %v2276 = vxor.u32 %v2225, 2147483648
    %v2277 = vmul.f32 %v2276, 1.442695
    %v2278 = vpow.pop %v2277
    %v2279 = vadd.f32 %v2278, 1.0
    %v2280 = vrcp.pop %v2279
    %v2281 = vmul.f32 1.0, %v2280
    %v2282 = vtanh.pop %v2264
    %v2283 = vxor.u32 %v2266, 2147483648
    %v2284 = vmul.f32 %v2283, 1.442695
    %v2285 = vpow.pop %v2284
    %v2286 = vadd.f32 %v2285, 1.0
    %v2287 = vrcp.pop %v2286
    %v2288 = vmul.f32 1.0, %v2287
    %v2289 = vmul.f32 %v2281, %v2066
    %v2290 = vmul.f32 %v2275, %v2282
    %v2291 = vadd.f32 %v2289, %v2290
    %v2292 = vtanh.pop %v2291
    %v2293 = vmul.f32 %v2288, %v2292
    %s2294 = scalar_lea.vmem [#allocation7], 32
    %2295 = vst [vmem:[%s2294] sm:$0xff] %v2293
    %s2296 = scalar_lea.vmem [#allocation6], 160
    %v2297 = vld [vmem:[%s2296] sm:$0xff]
    %v2298 = vld [vmem:[%s2296 + $0x8] sm:$0xff]
    %v2299 = vld [vmem:[%s2296 + $0x10] sm:$0xff]
    %v2300 = vld [vmem:[%s2296 + $0x18] sm:$0xff]
    %2301 = vmatprep.subr.bf16.mxu0 %v794
    %2302 = vmatpush1.bf16.msra.mxu0 %v793
    %2303 = vmatprep.subr.bf16.mxu0 %v798
    %2304 = vmatpush1.bf16.msra.mxu0 %v797
    %2305 = vmatprep.subr.bf16.mxu0 %v802
    %2306 = vmatpush1.bf16.msra.mxu0 %v801
    %2307 = vmatprep.subr.bf16.mxu0 %v806
    %2308 = vmatpush1.bf16.msra.mxu0 %v805
    %2309 = vmatprep.subr.bf16.mxu0 %v810
    %2310 = vmatpush1.bf16.msra.mxu0 %v809
    %2311 = vmatprep.subr.bf16.mxu0 %v814
    %2312 = vmatpush1.bf16.msra.mxu0 %v813
    %2313 = vmatprep.subr.bf16.mxu0 %v818
    %2314 = vmatpush1.bf16.msra.mxu0 %v817
    %2315 = vmatprep.subr.bf16.mxu0 %v822
    %2316 = vmatpush1.bf16.msra.mxu0 %v821
    %2317 = vmatprep.subr.bf16.mxu0 0
    %2318 = vmatpush1.bf16.msra.mxu0 0
    %2319 = vmatprep.subr.bf16.mxu0 0
    %2320 = vmatpush1.bf16.msra.mxu0 0
    %2321 = vmatprep.subr.bf16.mxu0 0
    %2322 = vmatpush1.bf16.msra.mxu0 0
    %2323 = vmatprep.subr.bf16.mxu0 0
    %2324 = vmatpush1.bf16.msra.mxu0 0
    %2325 = vmatprep.subr.bf16.mxu0 0
    %2326 = vmatpush1.bf16.msra.mxu0 0
    %2327 = vmatprep.subr.bf16.mxu0 0
    %2328 = vmatpush1.bf16.msra.mxu0 0
    %2329 = vmatprep.subr.bf16.mxu0 0
    %2330 = vmatpush1.bf16.msra.mxu0 0
    %2331 = vmatprep.subr.bf16.mxu0 0
    %2332 = vmatpush1.bf16.msra.mxu0 0
    %2333 = vmatprep.mubr.bf16.mxu0 0
    %2334 = vmatmul.mubr.bf16.gmra.mrb[0].mxu0 %v2186
    %v2335 = vpop.f32.mrb[0].mxu0
    %v2336 = vadd.f32 0.0, %v2335
    %v2337 = vpop.f32.mrb[0].mxu0
    %v2338 = vadd.f32 0.0, %v2337
    %v2339 = vpop.f32.mrb[0].mxu0
    %v2340 = vpop.f32.mrb[0].mxu0
    %2341 = vdwg.mxu0
    %2342 = vmatprep.subr.bf16.mxu0 %v796
    %2343 = vmatpush1.bf16.msra.mxu0 %v795
    %2344 = vmatprep.subr.bf16.mxu0 %v800
    %2345 = vmatpush1.bf16.msra.mxu0 %v799
    %2346 = vmatprep.subr.bf16.mxu0 %v804
    %2347 = vmatpush1.bf16.msra.mxu0 %v803
    %2348 = vmatprep.subr.bf16.mxu0 %v808
    %2349 = vmatpush1.bf16.msra.mxu0 %v807
    %2350 = vmatprep.subr.bf16.mxu0 %v812
    %2351 = vmatpush1.bf16.msra.mxu0 %v811
    %2352 = vmatprep.subr.bf16.mxu0 %v816
    %2353 = vmatpush1.bf16.msra.mxu0 %v815
    %2354 = vmatprep.subr.bf16.mxu0 %v820
    %2355 = vmatpush1.bf16.msra.mxu0 %v819
    %2356 = vmatprep.subr.bf16.mxu0 %v824
    %2357 = vmatpush1.bf16.msra.mxu0 %v823
    %2358 = vmatprep.subr.bf16.mxu0 0
    %2359 = vmatpush1.bf16.msra.mxu0 0
    %2360 = vmatprep.subr.bf16.mxu0 0
    %2361 = vmatpush1.bf16.msra.mxu0 0
    %2362 = vmatprep.subr.bf16.mxu0 0
    %2363 = vmatpush1.bf16.msra.mxu0 0
    %2364 = vmatprep.subr.bf16.mxu0 0
    %2365 = vmatpush1.bf16.msra.mxu0 0
    %2366 = vmatprep.subr.bf16.mxu0 0
    %2367 = vmatpush1.bf16.msra.mxu0 0
    %2368 = vmatprep.subr.bf16.mxu0 0
    %2369 = vmatpush1.bf16.msra.mxu0 0
    %2370 = vmatprep.subr.bf16.mxu0 0
    %2371 = vmatpush1.bf16.msra.mxu0 0
    %2372 = vmatprep.subr.bf16.mxu0 0
    %2373 = vmatpush1.bf16.msra.mxu0 0
    %2374 = vmatprep.mubr.bf16.mxu0 0
    %2375 = vmatmul.mubr.bf16.gmra.mrb[0].mxu0 %v2186
    %v2376 = vpop.f32.mrb[0].mxu0
    %v2377 = vadd.f32 0.0, %v2376
    %v2378 = vpop.f32.mrb[0].mxu0
    %v2379 = vadd.f32 0.0, %v2378
    %v2380 = vpop.f32.mrb[0].mxu0
    %v2381 = vpop.f32.mrb[0].mxu0
    %2382 = vdwg.mxu0
    %v2383 = vadd.f32 %v2297, %v2336
    %v2384 = vadd.f32 %v2298, %v2338
    %v2385 = vadd.f32 %v2299, %v2377
    %v2386 = vadd.f32 %v2300, %v2379
    %v2387 = vxor.u32 %v2383, 2147483648
    %v2388 = vmul.f32 %v2387, 1.442695
    %v2389 = vpow.pop %v2388
    %v2390 = vadd.f32 %v2389, 1.0
    %v2391 = vrcp.pop %v2390
    %v2392 = vmul.f32 1.0, %v2391
    %v2393 = vxor.u32 %v2384, 2147483648
    %v2394 = vmul.f32 %v2393, 1.442695
    %v2395 = vpow.pop %v2394
    %v2396 = vadd.f32 %v2395, 1.0
    %v2397 = vrcp.pop %v2396
    %v2398 = vmul.f32 1.0, %v2397
    %v2399 = vtanh.pop %v2385
    %v2400 = vxor.u32 %v2386, 2147483648
    %v2401 = vmul.f32 %v2400, 1.442695
    %v2402 = vpow.pop %v2401
    %v2403 = vadd.f32 %v2402, 1.0
    %v2404 = vrcp.pop %v2403
    %v2405 = vmul.f32 1.0, %v2404
    %v2406 = vmul.f32 %v2398, %v2183
    %v2407 = vmul.f32 %v2392, %v2399
    %v2408 = vadd.f32 %v2406, %v2407
    %v2409 = vtanh.pop %v2408
    %v2410 = vmul.f32 %v2405, %v2409
    %v2411 = vpack.c.bf16 %v2410, %v2410
    %v2412 = vpack.c.bf16 %v2293, %v2293
    %2413 = vmatprep.subr.bf16.mxu0 %v1162
    %2414 = vmatpush1.bf16.msra.mxu0 %v1161
    %2415 = vmatprep.subr.bf16.mxu0 %v1166
    %2416 = vmatpush1.bf16.msra.mxu0 %v1165
    %2417 = vmatprep.subr.bf16.mxu0 %v1170
    %2418 = vmatpush1.bf16.msra.mxu0 %v1169
    %2419 = vmatprep.subr.bf16.mxu0 %v1174
    %2420 = vmatpush1.bf16.msra.mxu0 %v1173
    %2421 = vmatprep.subr.bf16.mxu0 %v1178
    %2422 = vmatpush1.bf16.msra.mxu0 %v1177
    %2423 = vmatprep.subr.bf16.mxu0 %v1182
    %2424 = vmatpush1.bf16.msra.mxu0 %v1181
    %2425 = vmatprep.subr.bf16.mxu0 %v1186
    %2426 = vmatpush1.bf16.msra.mxu0 %v1185
    %2427 = vmatprep.subr.bf16.mxu0 %v1190
    %2428 = vmatpush1.bf16.msra.mxu0 %v1189
    %2429 = vmatprep.subr.bf16.mxu0 %v1194
    %2430 = vmatpush1.bf16.msra.mxu0 %v1193
    %2431 = vmatprep.subr.bf16.mxu0 %v1198
    %2432 = vmatpush1.bf16.msra.mxu0 %v1197
    %2433 = vmatprep.subr.bf16.mxu0 %v1202
    %2434 = vmatpush1.bf16.msra.mxu0 %v1201
    %2435 = vmatprep.subr.bf16.mxu0 %v1206
    %2436 = vmatpush1.bf16.msra.mxu0 %v1205
    %2437 = vmatprep.subr.bf16.mxu0 %v1210
    %2438 = vmatpush1.bf16.msra.mxu0 %v1209
    %2439 = vmatprep.subr.bf16.mxu0 %v1214
    %2440 = vmatpush1.bf16.msra.mxu0 %v1213
    %2441 = vmatprep.subr.bf16.mxu0 %v1218
    %2442 = vmatpush1.bf16.msra.mxu0 %v1217
    %2443 = vmatprep.subr.bf16.mxu0 %v1222
    %2444 = vmatpush1.bf16.msra.mxu0 %v1221
    %2445 = vmatprep.mubr.bf16.mxu0 %v2412
    %2446 = vmatmul.mubr.bf16.gmra.mrb[0].mxu0 %v2411
    %v2447 = vpop.f32.mrb[0].mxu0
    %v2448 = vadd.f32 %v671, %v2447
    %v2449 = vpop.f32.mrb[0].mxu0
    %v2450 = vadd.f32 %v675, %v2449
    %v2451 = vpop.f32.mrb[0].mxu0
    %v2452 = vpop.f32.mrb[0].mxu0
    %2453 = vdwg.mxu0
    %2454 = vmatprep.subr.bf16.mxu0 %v1164
    %2455 = vmatpush1.bf16.msra.mxu0 %v1163
    %2456 = vmatprep.subr.bf16.mxu0 %v1168
    %2457 = vmatpush1.bf16.msra.mxu0 %v1167
    %2458 = vmatprep.subr.bf16.mxu0 %v1172
    %2459 = vmatpush1.bf16.msra.mxu0 %v1171
    %2460 = vmatprep.subr.bf16.mxu0 %v1176
    %2461 = vmatpush1.bf16.msra.mxu0 %v1175
    %2462 = vmatprep.subr.bf16.mxu0 %v1180
    %2463 = vmatpush1.bf16.msra.mxu0 %v1179
    %2464 = vmatprep.subr.bf16.mxu0 %v1184
    %2465 = vmatpush1.bf16.msra.mxu0 %v1183
    %2466 = vmatprep.subr.bf16.mxu0 %v1188
    %2467 = vmatpush1.bf16.msra.mxu0 %v1187
    %2468 = vmatprep.subr.bf16.mxu0 %v1192
    %2469 = vmatpush1.bf16.msra.mxu0 %v1191
    %2470 = vmatprep.subr.bf16.mxu0 %v1196
    %2471 = vmatpush1.bf16.msra.mxu0 %v1195
    %2472 = vmatprep.subr.bf16.mxu0 %v1200
    %2473 = vmatpush1.bf16.msra.mxu0 %v1199
    %2474 = vmatprep.subr.bf16.mxu0 %v1204
    %2475 = vmatpush1.bf16.msra.mxu0 %v1203
    %2476 = vmatprep.subr.bf16.mxu0 %v1208
    %2477 = vmatpush1.bf16.msra.mxu0 %v1207
    %2478 = vmatprep.subr.bf16.mxu0 %v1212
    %2479 = vmatpush1.bf16.msra.mxu0 %v1211
    %2480 = vmatprep.subr.bf16.mxu0 %v1216
    %2481 = vmatpush1.bf16.msra.mxu0 %v1215
    %2482 = vmatprep.subr.bf16.mxu0 %v1220
    %2483 = vmatpush1.bf16.msra.mxu0 %v1219
    %2484 = vmatprep.subr.bf16.mxu0 %v1224
    %2485 = vmatpush1.bf16.msra.mxu0 %v1223
    %2486 = vmatprep.mubr.bf16.mxu0 %v2412
    %2487 = vmatmul.mubr.bf16.gmra.mrb[0].mxu0 %v2411
    %v2488 = vpop.f32.mrb[0].mxu0
    %v2489 = vadd.f32 %v679, %v2488
    %v2490 = vpop.f32.mrb[0].mxu0
    %v2491 = vadd.f32 %v683, %v2490
    %v2492 = vpop.f32.mrb[0].mxu0
    %v2493 = vpop.f32.mrb[0].mxu0
    %2494 = vdwg.mxu0
    %v2495 = vxor.u32 %v2448, 2147483648
    %v2496 = vmul.f32 %v2495, 1.442695
    %v2497 = vpow.pop %v2496
    %v2498 = vadd.f32 %v2497, 1.0
    %v2499 = vrcp.pop %v2498
    %v2500 = vmul.f32 1.0, %v2499
    %v2501 = vxor.u32 %v2450, 2147483648
    %v2502 = vmul.f32 %v2501, 1.442695
    %v2503 = vpow.pop %v2502
    %v2504 = vadd.f32 %v2503, 1.0
    %v2505 = vrcp.pop %v2504
    %v2506 = vmul.f32 1.0, %v2505
    %v2507 = vtanh.pop %v2489
    %v2508 = vxor.u32 %v2491, 2147483648
    %v2509 = vmul.f32 %v2508, 1.442695
    %v2510 = vpow.pop %v2509
    %v2511 = vadd.f32 %v2510, 1.0
    %v2512 = vrcp.pop %v2511
    %v2513 = vmul.f32 1.0, %v2512
    %v2514 = vmul.f32 %v2506, %v2291
    %v2515 = vmul.f32 %v2500, %v2507
    %v2516 = vadd.f32 %v2514, %v2515
    %v2517 = vtanh.pop %v2516
    %v2518 = vmul.f32 %v2513, %v2517
    %s2519 = scalar_lea.vmem [#allocation7], 40
    %2520 = vst [vmem:[%s2519] sm:$0xff] %v2518
    %s2521 = scalar_lea.vmem [#allocation6], 192
    %v2522 = vld [vmem:[%s2521] sm:$0xff]
    %v2523 = vld [vmem:[%s2521 + $0x8] sm:$0xff]
    %v2524 = vld [vmem:[%s2521 + $0x10] sm:$0xff]
    %v2525 = vld [vmem:[%s2521 + $0x18] sm:$0xff]
    %2526 = vmatprep.subr.bf16.mxu0 %v794
    %2527 = vmatpush1.bf16.msra.mxu0 %v793
    %2528 = vmatprep.subr.bf16.mxu0 %v798
    %2529 = vmatpush1.bf16.msra.mxu0 %v797
    %2530 = vmatprep.subr.bf16.mxu0 %v802
    %2531 = vmatpush1.bf16.msra.mxu0 %v801
    %2532 = vmatprep.subr.bf16.mxu0 %v806
    %2533 = vmatpush1.bf16.msra.mxu0 %v805
    %2534 = vmatprep.subr.bf16.mxu0 %v810
    %2535 = vmatpush1.bf16.msra.mxu0 %v809
    %2536 = vmatprep.subr.bf16.mxu0 %v814
    %2537 = vmatpush1.bf16.msra.mxu0 %v813
    %2538 = vmatprep.subr.bf16.mxu0 %v818
    %2539 = vmatpush1.bf16.msra.mxu0 %v817
    %2540 = vmatprep.subr.bf16.mxu0 %v822
    %2541 = vmatpush1.bf16.msra.mxu0 %v821
    %2542 = vmatprep.subr.bf16.mxu0 0
    %2543 = vmatpush1.bf16.msra.mxu0 0
    %2544 = vmatprep.subr.bf16.mxu0 0
    %2545 = vmatpush1.bf16.msra.mxu0 0
    %2546 = vmatprep.subr.bf16.mxu0 0
    %2547 = vmatpush1.bf16.msra.mxu0 0
    %2548 = vmatprep.subr.bf16.mxu0 0
    %2549 = vmatpush1.bf16.msra.mxu0 0
    %2550 = vmatprep.subr.bf16.mxu0 0
    %2551 = vmatpush1.bf16.msra.mxu0 0
    %2552 = vmatprep.subr.bf16.mxu0 0
    %2553 = vmatpush1.bf16.msra.mxu0 0
    %2554 = vmatprep.subr.bf16.mxu0 0
    %2555 = vmatpush1.bf16.msra.mxu0 0
    %2556 = vmatprep.subr.bf16.mxu0 0
    %2557 = vmatpush1.bf16.msra.mxu0 0
    %2558 = vmatprep.mubr.bf16.mxu0 0
    %2559 = vmatmul.mubr.bf16.gmra.mrb[0].mxu0 %v2411
    %v2560 = vpop.f32.mrb[0].mxu0
    %v2561 = vadd.f32 0.0, %v2560
    %v2562 = vpop.f32.mrb[0].mxu0
    %v2563 = vadd.f32 0.0, %v2562
    %v2564 = vpop.f32.mrb[0].mxu0
    %v2565 = vpop.f32.mrb[0].mxu0
    %2566 = vdwg.mxu0
    %2567 = vmatprep.subr.bf16.mxu0 %v796
    %2568 = vmatpush1.bf16.msra.mxu0 %v795
    %2569 = vmatprep.subr.bf16.mxu0 %v800
    %2570 = vmatpush1.bf16.msra.mxu0 %v799
    %2571 = vmatprep.subr.bf16.mxu0 %v804
    %2572 = vmatpush1.bf16.msra.mxu0 %v803
    %2573 = vmatprep.subr.bf16.mxu0 %v808
    %2574 = vmatpush1.bf16.msra.mxu0 %v807
    %2575 = vmatprep.subr.bf16.mxu0 %v812
    %2576 = vmatpush1.bf16.msra.mxu0 %v811
    %2577 = vmatprep.subr.bf16.mxu0 %v816
    %2578 = vmatpush1.bf16.msra.mxu0 %v815
    %2579 = vmatprep.subr.bf16.mxu0 %v820
    %2580 = vmatpush1.bf16.msra.mxu0 %v819
    %2581 = vmatprep.subr.bf16.mxu0 %v824
    %2582 = vmatpush1.bf16.msra.mxu0 %v823
    %2583 = vmatprep.subr.bf16.mxu0 0
    %2584 = vmatpush1.bf16.msra.mxu0 0
    %2585 = vmatprep.subr.bf16.mxu0 0
    %2586 = vmatpush1.bf16.msra.mxu0 0
    %2587 = vmatprep.subr.bf16.mxu0 0
    %2588 = vmatpush1.bf16.msra.mxu0 0
    %2589 = vmatprep.subr.bf16.mxu0 0
    %2590 = vmatpush1.bf16.msra.mxu0 0
    %2591 = vmatprep.subr.bf16.mxu0 0
    %2592 = vmatpush1.bf16.msra.mxu0 0
    %2593 = vmatprep.subr.bf16.mxu0 0
    %2594 = vmatpush1.bf16.msra.mxu0 0
    %2595 = vmatprep.subr.bf16.mxu0 0
    %2596 = vmatpush1.bf16.msra.mxu0 0
    %2597 = vmatprep.subr.bf16.mxu0 0
    %2598 = vmatpush1.bf16.msra.mxu0 0
    %2599 = vmatprep.mubr.bf16.mxu0 0
    %2600 = vmatmul.mubr.bf16.gmra.mrb[0].mxu0 %v2411
    %v2601 = vpop.f32.mrb[0].mxu0
    %v2602 = vadd.f32 0.0, %v2601
    %v2603 = vpop.f32.mrb[0].mxu0
    %v2604 = vadd.f32 0.0, %v2603
    %v2605 = vpop.f32.mrb[0].mxu0
    %v2606 = vpop.f32.mrb[0].mxu0
    %2607 = vdwg.mxu0
    %v2608 = vadd.f32 %v2522, %v2561
    %v2609 = vadd.f32 %v2523, %v2563
    %v2610 = vadd.f32 %v2524, %v2602
    %v2611 = vadd.f32 %v2525, %v2604
    %v2612 = vxor.u32 %v2608, 2147483648
    %v2613 = vmul.f32 %v2612, 1.442695
    %v2614 = vpow.pop %v2613
    %v2615 = vadd.f32 %v2614, 1.0
    %v2616 = vrcp.pop %v2615
    %v2617 = vmul.f32 1.0, %v2616
    %v2618 = vxor.u32 %v2609, 2147483648
    %v2619 = vmul.f32 %v2618, 1.442695
    %v2620 = vpow.pop %v2619
    %v2621 = vadd.f32 %v2620, 1.0
    %v2622 = vrcp.pop %v2621
    %v2623 = vmul.f32 1.0, %v2622
    %v2624 = vtanh.pop %v2610
    %v2625 = vxor.u32 %v2611, 2147483648
    %v2626 = vmul.f32 %v2625, 1.442695
    %v2627 = vpow.pop %v2626
    %v2628 = vadd.f32 %v2627, 1.0
    %v2629 = vrcp.pop %v2628
    %v2630 = vmul.f32 1.0, %v2629
    %v2631 = vmul.f32 %v2623, %v2408
    %v2632 = vmul.f32 %v2617, %v2624
    %v2633 = vadd.f32 %v2631, %v2632
    %v2634 = vtanh.pop %v2633
    %v2635 = vmul.f32 %v2630, %v2634
    %v2636 = vpack.c.bf16 %v2635, %v2635
    %v2637 = vpack.c.bf16 %v2518, %v2518
    %2638 = vmatprep.subr.bf16.mxu0 %v1162
    %2639 = vmatpush1.bf16.msra.mxu0 %v1161
    %2640 = vmatprep.subr.bf16.mxu0 %v1166
    %2641 = vmatpush1.bf16.msra.mxu0 %v1165
    %2642 = vmatprep.subr.bf16.mxu0 %v1170
    %2643 = vmatpush1.bf16.msra.mxu0 %v1169
    %2644 = vmatprep.subr.bf16.mxu0 %v1174
    %2645 = vmatpush1.bf16.msra.mxu0 %v1173
    %2646 = vmatprep.subr.bf16.mxu0 %v1178
    %2647 = vmatpush1.bf16.msra.mxu0 %v1177
    %2648 = vmatprep.subr.bf16.mxu0 %v1182
    %2649 = vmatpush1.bf16.msra.mxu0 %v1181
    %2650 = vmatprep.subr.bf16.mxu0 %v1186
    %2651 = vmatpush1.bf16.msra.mxu0 %v1185
    %2652 = vmatprep.subr.bf16.mxu0 %v1190
    %2653 = vmatpush1.bf16.msra.mxu0 %v1189
    %2654 = vmatprep.subr.bf16.mxu0 %v1194
    %2655 = vmatpush1.bf16.msra.mxu0 %v1193
    %2656 = vmatprep.subr.bf16.mxu0 %v1198
    %2657 = vmatpush1.bf16.msra.mxu0 %v1197
    %2658 = vmatprep.subr.bf16.mxu0 %v1202
    %2659 = vmatpush1.bf16.msra.mxu0 %v1201
    %2660 = vmatprep.subr.bf16.mxu0 %v1206
    %2661 = vmatpush1.bf16.msra.mxu0 %v1205
    %2662 = vmatprep.subr.bf16.mxu0 %v1210
    %2663 = vmatpush1.bf16.msra.mxu0 %v1209
    %2664 = vmatprep.subr.bf16.mxu0 %v1214
    %2665 = vmatpush1.bf16.msra.mxu0 %v1213
    %2666 = vmatprep.subr.bf16.mxu0 %v1218
    %2667 = vmatpush1.bf16.msra.mxu0 %v1217
    %2668 = vmatprep.subr.bf16.mxu0 %v1222
    %2669 = vmatpush1.bf16.msra.mxu0 %v1221
    %2670 = vmatprep.mubr.bf16.mxu0 %v2637
    %2671 = vmatmul.mubr.bf16.gmra.mrb[0].mxu0 %v2636
    %v2672 = vpop.f32.mrb[0].mxu0
    %v2673 = vadd.f32 %v671, %v2672
    %v2674 = vpop.f32.mrb[0].mxu0
    %v2675 = vadd.f32 %v675, %v2674
    %v2676 = vpop.f32.mrb[0].mxu0
    %v2677 = vpop.f32.mrb[0].mxu0
    %2678 = vdwg.mxu0
    %2679 = vmatprep.subr.bf16.mxu0 %v1164
    %2680 = vmatpush1.bf16.msra.mxu0 %v1163
    %2681 = vmatprep.subr.bf16.mxu0 %v1168
    %2682 = vmatpush1.bf16.msra.mxu0 %v1167
    %2683 = vmatprep.subr.bf16.mxu0 %v1172
    %2684 = vmatpush1.bf16.msra.mxu0 %v1171
    %2685 = vmatprep.subr.bf16.mxu0 %v1176
    %2686 = vmatpush1.bf16.msra.mxu0 %v1175
    %2687 = vmatprep.subr.bf16.mxu0 %v1180
    %2688 = vmatpush1.bf16.msra.mxu0 %v1179
    %2689 = vmatprep.subr.bf16.mxu0 %v1184
    %2690 = vmatpush1.bf16.msra.mxu0 %v1183
    %2691 = vmatprep.subr.bf16.mxu0 %v1188
    %2692 = vmatpush1.bf16.msra.mxu0 %v1187
    %2693 = vmatprep.subr.bf16.mxu0 %v1192
    %2694 = vmatpush1.bf16.msra.mxu0 %v1191
    %2695 = vmatprep.subr.bf16.mxu0 %v1196
    %2696 = vmatpush1.bf16.msra.mxu0 %v1195
    %2697 = vmatprep.subr.bf16.mxu0 %v1200
    %2698 = vmatpush1.bf16.msra.mxu0 %v1199
    %2699 = vmatprep.subr.bf16.mxu0 %v1204
    %2700 = vmatpush1.bf16.msra.mxu0 %v1203
    %2701 = vmatprep.subr.bf16.mxu0 %v1208
    %2702 = vmatpush1.bf16.msra.mxu0 %v1207
    %2703 = vmatprep.subr.bf16.mxu0 %v1212
    %2704 = vmatpush1.bf16.msra.mxu0 %v1211
    %2705 = vmatprep.subr.bf16.mxu0 %v1216
    %2706 = vmatpush1.bf16.msra.mxu0 %v1215
    %2707 = vmatprep.subr.bf16.mxu0 %v1220
    %2708 = vmatpush1.bf16.msra.mxu0 %v1219
    %2709 = vmatprep.subr.bf16.mxu0 %v1224
    %2710 = vmatpush1.bf16.msra.mxu0 %v1223
    %2711 = vmatprep.mubr.bf16.mxu0 %v2637
    %2712 = vmatmul.mubr.bf16.gmra.mrb[0].mxu0 %v2636
    %v2713 = vpop.f32.mrb[0].mxu0
    %v2714 = vadd.f32 %v679, %v2713
    %v2715 = vpop.f32.mrb[0].mxu0
    %v2716 = vadd.f32 %v683, %v2715
    %v2717 = vpop.f32.mrb[0].mxu0
    %v2718 = vpop.f32.mrb[0].mxu0
    %2719 = vdwg.mxu0
    %v2720 = vxor.u32 %v2673, 2147483648
    %v2721 = vmul.f32 %v2720, 1.442695
    %v2722 = vpow.pop %v2721
    %v2723 = vadd.f32 %v2722, 1.0
    %v2724 = vrcp.pop %v2723
    %v2725 = vmul.f32 1.0, %v2724
    %v2726 = vxor.u32 %v2675, 2147483648
    %v2727 = vmul.f32 %v2726, 1.442695
    %v2728 = vpow.pop %v2727
    %v2729 = vadd.f32 %v2728, 1.0
    %v2730 = vrcp.pop %v2729
    %v2731 = vmul.f32 1.0, %v2730
    %v2732 = vtanh.pop %v2714
    %v2733 = vxor.u32 %v2716, 2147483648
    %v2734 = vmul.f32 %v2733, 1.442695
    %v2735 = vpow.pop %v2734
    %v2736 = vadd.f32 %v2735, 1.0
    %v2737 = vrcp.pop %v2736
    %v2738 = vmul.f32 1.0, %v2737
    %v2739 = vmul.f32 %v2731, %v2516
    %v2740 = vmul.f32 %v2725, %v2732
    %v2741 = vadd.f32 %v2739, %v2740
    %v2742 = vtanh.pop %v2741
    %v2743 = vmul.f32 %v2738, %v2742
    %s2744 = scalar_lea.vmem [#allocation7], 48
    %2745 = vst [vmem:[%s2744] sm:$0xff] %v2743
    %s2746 = scalar_lea.vmem [#allocation6], 224
    %v2747 = vld [vmem:[%s2746] sm:$0xff]
    %v2748 = vld [vmem:[%s2746 + $0x8] sm:$0xff]
    %v2749 = vld [vmem:[%s2746 + $0x10] sm:$0xff]
    %v2750 = vld [vmem:[%s2746 + $0x18] sm:$0xff]
    %2751 = vmatprep.subr.bf16.mxu0 %v794
    %2752 = vmatpush1.bf16.msra.mxu0 %v793
    %2753 = vmatprep.subr.bf16.mxu0 %v798
    %2754 = vmatpush1.bf16.msra.mxu0 %v797
    %2755 = vmatprep.subr.bf16.mxu0 %v802
    %2756 = vmatpush1.bf16.msra.mxu0 %v801
    %2757 = vmatprep.subr.bf16.mxu0 %v806
    %2758 = vmatpush1.bf16.msra.mxu0 %v805
    %2759 = vmatprep.subr.bf16.mxu0 %v810
    %2760 = vmatpush1.bf16.msra.mxu0 %v809
    %2761 = vmatprep.subr.bf16.mxu0 %v814
    %2762 = vmatpush1.bf16.msra.mxu0 %v813
    %2763 = vmatprep.subr.bf16.mxu0 %v818
    %2764 = vmatpush1.bf16.msra.mxu0 %v817
    %2765 = vmatprep.subr.bf16.mxu0 %v822
    %2766 = vmatpush1.bf16.msra.mxu0 %v821
    %2767 = vmatprep.subr.bf16.mxu0 0
    %2768 = vmatpush1.bf16.msra.mxu0 0
    %2769 = vmatprep.subr.bf16.mxu0 0
    %2770 = vmatpush1.bf16.msra.mxu0 0
    %2771 = vmatprep.subr.bf16.mxu0 0
    %2772 = vmatpush1.bf16.msra.mxu0 0
    %2773 = vmatprep.subr.bf16.mxu0 0
    %2774 = vmatpush1.bf16.msra.mxu0 0
    %2775 = vmatprep.subr.bf16.mxu0 0
    %2776 = vmatpush1.bf16.msra.mxu0 0
    %2777 = vmatprep.subr.bf16.mxu0 0
    %2778 = vmatpush1.bf16.msra.mxu0 0
    %2779 = vmatprep.subr.bf16.mxu0 0
    %2780 = vmatpush1.bf16.msra.mxu0 0
    %2781 = vmatprep.subr.bf16.mxu0 0
    %2782 = vmatpush1.bf16.msra.mxu0 0
    %2783 = vmatprep.mubr.bf16.mxu0 0
    %2784 = vmatmul.mubr.bf16.gmra.mrb[0].mxu0 %v2636
    %v2785 = vpop.f32.mrb[0].mxu0
    %v2786 = vadd.f32 0.0, %v2785
    %v2787 = vpop.f32.mrb[0].mxu0
    %v2788 = vadd.f32 0.0, %v2787
    %v2789 = vpop.f32.mrb[0].mxu0
    %v2790 = vpop.f32.mrb[0].mxu0
    %2791 = vdwg.mxu0
    %2792 = vmatprep.subr.bf16.mxu0 %v796
    %2793 = vmatpush1.bf16.msra.mxu0 %v795
    %2794 = vmatprep.subr.bf16.mxu0 %v800
    %2795 = vmatpush1.bf16.msra.mxu0 %v799
    %2796 = vmatprep.subr.bf16.mxu0 %v804
    %2797 = vmatpush1.bf16.msra.mxu0 %v803
    %2798 = vmatprep.subr.bf16.mxu0 %v808
    %2799 = vmatpush1.bf16.msra.mxu0 %v807
    %2800 = vmatprep.subr.bf16.mxu0 %v812
    %2801 = vmatpush1.bf16.msra.mxu0 %v811
    %2802 = vmatprep.subr.bf16.mxu0 %v816
    %2803 = vmatpush1.bf16.msra.mxu0 %v815
    %2804 = vmatprep.subr.bf16.mxu0 %v820
    %2805 = vmatpush1.bf16.msra.mxu0 %v819
    %2806 = vmatprep.subr.bf16.mxu0 %v824
    %2807 = vmatpush1.bf16.msra.mxu0 %v823
    %2808 = vmatprep.subr.bf16.mxu0 0
    %2809 = vmatpush1.bf16.msra.mxu0 0
    %2810 = vmatprep.subr.bf16.mxu0 0
    %2811 = vmatpush1.bf16.msra.mxu0 0
    %2812 = vmatprep.subr.bf16.mxu0 0
    %2813 = vmatpush1.bf16.msra.mxu0 0
    %2814 = vmatprep.subr.bf16.mxu0 0
    %2815 = vmatpush1.bf16.msra.mxu0 0
    %2816 = vmatprep.subr.bf16.mxu0 0
    %2817 = vmatpush1.bf16.msra.mxu0 0
    %2818 = vmatprep.subr.bf16.mxu0 0
    %2819 = vmatpush1.bf16.msra.mxu0 0
    %2820 = vmatprep.subr.bf16.mxu0 0
    %2821 = vmatpush1.bf16.msra.mxu0 0
    %2822 = vmatprep.subr.bf16.mxu0 0
    %2823 = vmatpush1.bf16.msra.mxu0 0
    %2824 = vmatprep.mubr.bf16.mxu0 0
    %2825 = vmatmul.mubr.bf16.gmra.mrb[0].mxu0 %v2636
    %v2826 = vpop.f32.mrb[0].mxu0
    %v2827 = vadd.f32 0.0, %v2826
    %v2828 = vpop.f32.mrb[0].mxu0
    %v2829 = vadd.f32 0.0, %v2828
    %v2830 = vpop.f32.mrb[0].mxu0
    %v2831 = vpop.f32.mrb[0].mxu0
    %2832 = vdwg.mxu0
    %v2833 = vadd.f32 %v2747, %v2786
    %v2834 = vadd.f32 %v2748, %v2788
    %v2835 = vadd.f32 %v2749, %v2827
    %v2836 = vadd.f32 %v2750, %v2829
    %v2837 = vxor.u32 %v2833, 2147483648
    %v2838 = vmul.f32 %v2837, 1.442695
    %v2839 = vpow.pop %v2838
    %v2840 = vadd.f32 %v2839, 1.0
    %v2841 = vrcp.pop %v2840
    %v2842 = vmul.f32 1.0, %v2841
    %v2843 = vxor.u32 %v2834, 2147483648
    %v2844 = vmul.f32 %v2843, 1.442695
    %v2845 = vpow.pop %v2844
    %v2846 = vadd.f32 %v2845, 1.0
    %v2847 = vrcp.pop %v2846
    %v2848 = vmul.f32 1.0, %v2847
    %v2849 = vtanh.pop %v2835
    %v2850 = vxor.u32 %v2836, 2147483648
    %v2851 = vmul.f32 %v2850, 1.442695
    %v2852 = vpow.pop %v2851
    %v2853 = vadd.f32 %v2852, 1.0
    %v2854 = vrcp.pop %v2853
    %v2855 = vmul.f32 1.0, %v2854
    %v2856 = vmul.f32 %v2848, %v2633
    %v2857 = vmul.f32 %v2842, %v2849
    %v2858 = vadd.f32 %v2856, %v2857
    %v2859 = vtanh.pop %v2858
    %v2860 = vmul.f32 %v2855, %v2859
    %v2861 = vpack.c.bf16 %v2860, %v2860
    %v2862 = vpack.c.bf16 %v2743, %v2743
    %2863 = vmatprep.subr.bf16.mxu0 %v1162
    %2864 = vmatpush1.bf16.msra.mxu0 %v1161
    %2865 = vmatprep.subr.bf16.mxu0 %v1166
    %2866 = vmatpush1.bf16.msra.mxu0 %v1165
    %2867 = vmatprep.subr.bf16.mxu0 %v1170
    %2868 = vmatpush1.bf16.msra.mxu0 %v1169
    %2869 = vmatprep.subr.bf16.mxu0 %v1174
    %2870 = vmatpush1.bf16.msra.mxu0 %v1173
    %2871 = vmatprep.subr.bf16.mxu0 %v1178
    %2872 = vmatpush1.bf16.msra.mxu0 %v1177
    %2873 = vmatprep.subr.bf16.mxu0 %v1182
    %2874 = vmatpush1.bf16.msra.mxu0 %v1181
    %2875 = vmatprep.subr.bf16.mxu0 %v1186
    %2876 = vmatpush1.bf16.msra.mxu0 %v1185
    %2877 = vmatprep.subr.bf16.mxu0 %v1190
    %2878 = vmatpush1.bf16.msra.mxu0 %v1189
    %2879 = vmatprep.subr.bf16.mxu0 %v1194
    %2880 = vmatpush1.bf16.msra.mxu0 %v1193
    %2881 = vmatprep.subr.bf16.mxu0 %v1198
    %2882 = vmatpush1.bf16.msra.mxu0 %v1197
    %2883 = vmatprep.subr.bf16.mxu0 %v1202
    %2884 = vmatpush1.bf16.msra.mxu0 %v1201
    %2885 = vmatprep.subr.bf16.mxu0 %v1206
    %2886 = vmatpush1.bf16.msra.mxu0 %v1205
    %2887 = vmatprep.subr.bf16.mxu0 %v1210
    %2888 = vmatpush1.bf16.msra.mxu0 %v1209
    %2889 = vmatprep.subr.bf16.mxu0 %v1214
    %2890 = vmatpush1.bf16.msra.mxu0 %v1213
    %2891 = vmatprep.subr.bf16.mxu0 %v1218
    %2892 = vmatpush1.bf16.msra.mxu0 %v1217
    %2893 = vmatprep.subr.bf16.mxu0 %v1222
    %2894 = vmatpush1.bf16.msra.mxu0 %v1221
    %2895 = vmatprep.mubr.bf16.mxu0 %v2862
    %2896 = vmatmul.mubr.bf16.gmra.mrb[0].mxu0 %v2861
    %v2897 = vpop.f32.mrb[0].mxu0
    %v2898 = vadd.f32 %v671, %v2897
    %v2899 = vpop.f32.mrb[0].mxu0
    %v2900 = vadd.f32 %v675, %v2899
    %v2901 = vpop.f32.mrb[0].mxu0
    %v2902 = vpop.f32.mrb[0].mxu0
    %2903 = vdwg.mxu0
    %2904 = vmatprep.subr.bf16.mxu0 %v1164
    %2905 = vmatpush1.bf16.msra.mxu0 %v1163
    %2906 = vmatprep.subr.bf16.mxu0 %v1168
    %2907 = vmatpush1.bf16.msra.mxu0 %v1167
    %2908 = vmatprep.subr.bf16.mxu0 %v1172
    %2909 = vmatpush1.bf16.msra.mxu0 %v1171
    %2910 = vmatprep.subr.bf16.mxu0 %v1176
    %2911 = vmatpush1.bf16.msra.mxu0 %v1175
    %2912 = vmatprep.subr.bf16.mxu0 %v1180
    %2913 = vmatpush1.bf16.msra.mxu0 %v1179
    %2914 = vmatprep.subr.bf16.mxu0 %v1184
    %2915 = vmatpush1.bf16.msra.mxu0 %v1183
    %2916 = vmatprep.subr.bf16.mxu0 %v1188
    %2917 = vmatpush1.bf16.msra.mxu0 %v1187
    %2918 = vmatprep.subr.bf16.mxu0 %v1192
    %2919 = vmatpush1.bf16.msra.mxu0 %v1191
    %2920 = vmatprep.subr.bf16.mxu0 %v1196
    %2921 = vmatpush1.bf16.msra.mxu0 %v1195
    %2922 = vmatprep.subr.bf16.mxu0 %v1200
    %2923 = vmatpush1.bf16.msra.mxu0 %v1199
    %2924 = vmatprep.subr.bf16.mxu0 %v1204
    %2925 = vmatpush1.bf16.msra.mxu0 %v1203
    %2926 = vmatprep.subr.bf16.mxu0 %v1208
    %2927 = vmatpush1.bf16.msra.mxu0 %v1207
    %2928 = vmatprep.subr.bf16.mxu0 %v1212
    %2929 = vmatpush1.bf16.msra.mxu0 %v1211
    %2930 = vmatprep.subr.bf16.mxu0 %v1216
    %2931 = vmatpush1.bf16.msra.mxu0 %v1215
    %2932 = vmatprep.subr.bf16.mxu0 %v1220
    %2933 = vmatpush1.bf16.msra.mxu0 %v1219
    %2934 = vmatprep.subr.bf16.mxu0 %v1224
    %2935 = vmatpush1.bf16.msra.mxu0 %v1223
    %2936 = vmatprep.mubr.bf16.mxu0 %v2862
    %2937 = vmatmul.mubr.bf16.gmra.mrb[0].mxu0 %v2861
    %v2938 = vpop.f32.mrb[0].mxu0
    %v2939 = vadd.f32 %v679, %v2938
    %v2940 = vpop.f32.mrb[0].mxu0
    %v2941 = vadd.f32 %v683, %v2940
    %v2942 = vpop.f32.mrb[0].mxu0
    %v2943 = vpop.f32.mrb[0].mxu0
    %2944 = vdwg.mxu0
    %v2945 = vxor.u32 %v2898, 2147483648
    %v2946 = vmul.f32 %v2945, 1.442695
    %v2947 = vpow.pop %v2946
    %v2948 = vadd.f32 %v2947, 1.0
    %v2949 = vrcp.pop %v2948
    %v2950 = vmul.f32 1.0, %v2949
    %v2951 = vxor.u32 %v2900, 2147483648
    %v2952 = vmul.f32 %v2951, 1.442695
    %v2953 = vpow.pop %v2952
    %v2954 = vadd.f32 %v2953, 1.0
    %v2955 = vrcp.pop %v2954
    %v2956 = vmul.f32 1.0, %v2955
    %v2957 = vtanh.pop %v2939
    %v2958 = vxor.u32 %v2941, 2147483648
    %v2959 = vmul.f32 %v2958, 1.442695
    %v2960 = vpow.pop %v2959
    %v2961 = vadd.f32 %v2960, 1.0
    %v2962 = vrcp.pop %v2961
    %v2963 = vmul.f32 1.0, %v2962
    %v2964 = vmul.f32 %v2956, %v2741
    %v2965 = vmul.f32 %v2950, %v2957
    %v2966 = vadd.f32 %v2964, %v2965
    %v2967 = vtanh.pop %v2966
    %v2968 = vmul.f32 %v2963, %v2967
    %s2969 = scalar_lea.vmem [#allocation7], 56
    %2970 = vst [vmem:[%s2969] sm:$0xff] %v2968
    %2971 = vst [vmem:[#allocation2] sm:$0xff] %v2860
    %2972 = vst [vmem:[#allocation3] sm:$0xff] %v2858
    %2973 = vst [vmem:[#allocation4] sm:$0xff] %v2968
    %2974 = vst [vmem:[#allocation5] sm:$0xff] %v2966
    %v2975 = vld [vmem:[#allocation7] sm:$0xff]
    %v2976 = vld [vmem:[#allocation7 + $0x8] sm:$0xff]
    %v2977 = vld [vmem:[#allocation7 + $0x10] sm:$0xff]
    %v2978 = vld [vmem:[#allocation7 + $0x18] sm:$0xff]
    %v2979 = vld [vmem:[#allocation7 + $0x20] sm:$0xff]
    %v2980 = vld [vmem:[#allocation7 + $0x28] sm:$0xff]
    %v2981 = vld [vmem:[#allocation7 + $0x30] sm:$0xff]
    %v2982 = vld [vmem:[#allocation7 + $0x38] sm:$0xff]
    %v2983 = vpack.c.bf16 %v2976, %v2975
    %v2984 = vpack.c.bf16 %v2978, %v2977
    %v2985 = vpack.c.bf16 %v2980, %v2979
    %v2986 = vpack.c.bf16 %v2982, %v2981
    %v2987 = vld [vmem:[#allocation16] sm:$0xf]
    %v2988 = vld [vmem:[#allocation16 + $0x4] sm:$0xf]
    %v2989 = vld [vmem:[#allocation16 + $0x8] sm:$0xf]
    %v2990 = vld [vmem:[#allocation16 + $0xc] sm:$0xf]
    %v2991 = vld [vmem:[#allocation16 + $0x10] sm:$0xf]
    %v2992 = vld [vmem:[#allocation16 + $0x14] sm:$0xf]
    %v2993 = vld [vmem:[#allocation16 + $0x18] sm:$0xf]
    %v2994 = vld [vmem:[#allocation16 + $0x1c] sm:$0xf]
    %v2995 = vld [vmem:[#allocation16 + $0x20] sm:$0xf]
    %v2996 = vld [vmem:[#allocation16 + $0x24] sm:$0xf]
    %v2997 = vld [vmem:[#allocation16 + $0x28] sm:$0xf]
    %v2998 = vld [vmem:[#allocation16 + $0x2c] sm:$0xf]
    %v2999 = vld [vmem:[#allocation16 + $0x30] sm:$0xf]
    %v3000 = vld [vmem:[#allocation16 + $0x34] sm:$0xf]
    %v3001 = vld [vmem:[#allocation16 + $0x38] sm:$0xf]
    %v3002 = vld [vmem:[#allocation16 + $0x3c] sm:$0xf]
    %v3003 = vld [vmem:[%s7] sm:$0x1]
    %v3005 = vlaneseq
    %v3006 = vshrl.u32 %v3005, 7
    %v3007 = vsub.s32 0, %v3006
    %v3008 = vrot.slane %v3003, %v3007
    %v3026 = vunpack.c.l.b16 %v2987
    %v3027 = vunpack.c.l.b16 %v2988
    %v3028 = vunpack.c.l.b16 %v2989
    %v3029 = vunpack.c.l.b16 %v2990
    %v3030 = vunpack.c.l.b16 %v2991
    %v3031 = vunpack.c.l.b16 %v2992
    %v3032 = vunpack.c.l.b16 %v2993
    %v3033 = vunpack.c.l.b16 %v2994
    %v3034 = vunpack.c.l.b16 %v2995
    %v3035 = vunpack.c.l.b16 %v2996
    %v3036 = vunpack.c.l.b16 %v2997
    %v3037 = vunpack.c.l.b16 %v2998
    %v3038 = vunpack.c.l.b16 %v2999
    %v3039 = vunpack.c.l.b16 %v3000
    %v3040 = vunpack.c.l.b16 %v3001
    %v3041 = vunpack.c.l.b16 %v3002
    %v3042 = vpack.c.b16 %v3027, %v3026
    %v3043 = vpack.c.b16 %v3029, %v3028
    %v3044 = vpack.c.b16 %v3031, %v3030
    %v3045 = vpack.c.b16 %v3033, %v3032
    %v3046 = vpack.c.b16 %v3035, %v3034
    %v3047 = vpack.c.b16 %v3037, %v3036
    %v3048 = vpack.c.b16 %v3039, %v3038
    %v3049 = vpack.c.b16 %v3041, %v3040
    %3058 = vmatprep.subr.bf16.mxu0 0
    %3059 = vmatpush1.bf16.msra.mxu0 %v3042
    %3060 = vmatprep.subr.bf16.mxu0 0
    %3061 = vmatpush1.bf16.msra.mxu0 %v3043
    %3062 = vmatprep.subr.bf16.mxu0 0
    %3063 = vmatpush1.bf16.msra.mxu0 %v3044
    %3064 = vmatprep.subr.bf16.mxu0 0
    %3065 = vmatpush1.bf16.msra.mxu0 %v3045
    %3066 = vmatprep.subr.bf16.mxu0 0
    %3067 = vmatpush1.bf16.msra.mxu0 %v3046
    %3068 = vmatprep.subr.bf16.mxu0 0
    %3069 = vmatpush1.bf16.msra.mxu0 %v3047
    %3070 = vmatprep.subr.bf16.mxu0 0
    %3071 = vmatpush1.bf16.msra.mxu0 %v3048
    %3072 = vmatprep.subr.bf16.mxu0 0
    %3073 = vmatpush1.bf16.msra.mxu0 %v3049
    %3074 = vmatprep.subr.bf16.mxu0 0
    %3075 = vmatpush1.bf16.msra.mxu0 0
    %3076 = vmatprep.subr.bf16.mxu0 0
    %3077 = vmatpush1.bf16.msra.mxu0 0
    %3078 = vmatprep.subr.bf16.mxu0 0
    %3079 = vmatpush1.bf16.msra.mxu0 0
    %3080 = vmatprep.subr.bf16.mxu0 0
    %3081 = vmatpush1.bf16.msra.mxu0 0
    %3082 = vmatprep.subr.bf16.mxu0 0
    %3083 = vmatpush1.bf16.msra.mxu0 0
    %3084 = vmatprep.subr.bf16.mxu0 0
    %3085 = vmatpush1.bf16.msra.mxu0 0
    %3086 = vmatprep.subr.bf16.mxu0 0
    %3087 = vmatpush1.bf16.msra.mxu0 0
    %3088 = vmatprep.subr.bf16.mxu0 0
    %3089 = vmatpush1.bf16.msra.mxu0 0
    %3090 = vmatprep.mubr.bf16.mxu0 0
    %3091 = vmatmul.mubr.bf16.gmra.mrb[0].mxu0 %v2983
    %v3092 = vpop.f32.mrb[0].mxu0
    %v3093 = vadd.f32 %v3008, %v3092
    %v3094 = vpop.f32.mrb[0].mxu0
    %v3095 = vpop.f32.mrb[0].mxu0
    %v3096 = vadd.f32 %v3008, %v3095
    %v3097 = vpop.f32.mrb[0].mxu0
    %3098 = vmatprep.mubr.bf16.mxu0 0
    %3099 = vmatmul.mubr.bf16.gmra.mrb[0].mxu0 %v2984
    %v3100 = vpop.f32.mrb[0].mxu0
    %v3101 = vadd.f32 %v3008, %v3100
    %v3102 = vpop.f32.mrb[0].mxu0
    %v3103 = vpop.f32.mrb[0].mxu0
    %v3104 = vadd.f32 %v3008, %v3103
    %v3105 = vpop.f32.mrb[0].mxu0
    %3106 = vmatprep.mubr.bf16.mxu0 0
    %3107 = vmatmul.mubr.bf16.gmra.mrb[0].mxu0 %v2985
    %v3108 = vpop.f32.mrb[0].mxu0
    %v3109 = vadd.f32 %v3008, %v3108
    %v3110 = vpop.f32.mrb[0].mxu0
    %v3111 = vpop.f32.mrb[0].mxu0
    %v3112 = vadd.f32 %v3008, %v3111
    %v3113 = vpop.f32.mrb[0].mxu0
    %3114 = vmatprep.mubr.bf16.mxu0 0
    %3115 = vmatmul.mubr.bf16.gmra.mrb[0].mxu0 %v2986
    %v3116 = vpop.f32.mrb[0].mxu0
    %v3117 = vadd.f32 %v3008, %v3116
    %v3118 = vpop.f32.mrb[0].mxu0
    %v3119 = vpop.f32.mrb[0].mxu0
    %v3120 = vadd.f32 %v3008, %v3119
    %v3121 = vpop.f32.mrb[0].mxu0
    %3122 = vdwg.mxu0
    %v3123 = vmax.f32 %v3093, 0.0
    %v3124 = vmax.f32 %v3096, 0.0
    %v3125 = vmax.f32 %v3101, 0.0
    %v3126 = vmax.f32 %v3104, 0.0
    %v3127 = vmax.f32 %v3109, 0.0
    %v3128 = vmax.f32 %v3112, 0.0
    %v3129 = vmax.f32 %v3117, 0.0
    %v3130 = vmax.f32 %v3120, 0.0
    %v3131 = vpack.c.bf16 %v3124, %v3123
    %v3132 = vpack.c.bf16 %v3126, %v3125
    %v3133 = vpack.c.bf16 %v3128, %v3127
    %v3134 = vpack.c.bf16 %v3130, %v3129
    %v3135 = vld [vmem:[#allocation17] sm:$0xf]
    %v3136 = vld [vmem:[#allocation17 + $0x4] sm:$0xf]
    %v3137 = vld [vmem:[#allocation17 + $0x8] sm:$0xf]
    %v3138 = vld [vmem:[#allocation17 + $0xc] sm:$0xf]
    %v3139 = vld [vmem:[#allocation17 + $0x10] sm:$0xf]
    %v3140 = vld [vmem:[#allocation17 + $0x14] sm:$0xf]
    %v3141 = vld [vmem:[#allocation17 + $0x18] sm:$0xf]
    %v3142 = vld [vmem:[#allocation17 + $0x1c] sm:$0xf]
    %v3143 = vld [vmem:[#allocation17 + $0x20] sm:$0xf]
    %v3144 = vld [vmem:[#allocation17 + $0x24] sm:$0xf]
    %v3145 = vld [vmem:[#allocation17 + $0x28] sm:$0xf]
    %v3146 = vld [vmem:[#allocation17 + $0x2c] sm:$0xf]
    %v3147 = vld [vmem:[#allocation17 + $0x30] sm:$0xf]
    %v3148 = vld [vmem:[#allocation17 + $0x34] sm:$0xf]
    %v3149 = vld [vmem:[#allocation17 + $0x38] sm:$0xf]
    %v3150 = vld [vmem:[#allocation17 + $0x3c] sm:$0xf]
    %v3151 = vld [vmem:[%s9] sm:$0x1]
    %v3153 = vlaneseq
    %v3154 = vshrl.u32 %v3153, 7
    %v3155 = vsub.s32 0, %v3154
    %v3156 = vrot.slane %v3151, %v3155
    %v3174 = vunpack.c.l.b16 %v3135
    %v3175 = vunpack.c.l.b16 %v3136
    %v3176 = vunpack.c.l.b16 %v3137
    %v3177 = vunpack.c.l.b16 %v3138
    %v3178 = vunpack.c.l.b16 %v3139
    %v3179 = vunpack.c.l.b16 %v3140
    %v3180 = vunpack.c.l.b16 %v3141
    %v3181 = vunpack.c.l.b16 %v3142
    %v3182 = vunpack.c.l.b16 %v3143
    %v3183 = vunpack.c.l.b16 %v3144
    %v3184 = vunpack.c.l.b16 %v3145
    %v3185 = vunpack.c.l.b16 %v3146
    %v3186 = vunpack.c.l.b16 %v3147
    %v3187 = vunpack.c.l.b16 %v3148
    %v3188 = vunpack.c.l.b16 %v3149
    %v3189 = vunpack.c.l.b16 %v3150
    %v3190 = vpack.c.b16 %v3175, %v3174
    %v3191 = vpack.c.b16 %v3177, %v3176
    %v3192 = vpack.c.b16 %v3179, %v3178
    %v3193 = vpack.c.b16 %v3181, %v3180
    %v3194 = vpack.c.b16 %v3183, %v3182
    %v3195 = vpack.c.b16 %v3185, %v3184
    %v3196 = vpack.c.b16 %v3187, %v3186
    %v3197 = vpack.c.b16 %v3189, %v3188
    %3206 = vmatprep.subr.bf16.mxu0 0
    %3207 = vmatpush1.bf16.msra.mxu0 %v3190
    %3208 = vmatprep.subr.bf16.mxu0 0
    %3209 = vmatpush1.bf16.msra.mxu0 %v3191
    %3210 = vmatprep.subr.bf16.mxu0 0
    %3211 = vmatpush1.bf16.msra.mxu0 %v3192
    %3212 = vmatprep.subr.bf16.mxu0 0
    %3213 = vmatpush1.bf16.msra.mxu0 %v3193
    %3214 = vmatprep.subr.bf16.mxu0 0
    %3215 = vmatpush1.bf16.msra.mxu0 %v3194
    %3216 = vmatprep.subr.bf16.mxu0 0
    %3217 = vmatpush1.bf16.msra.mxu0 %v3195
    %3218 = vmatprep.subr.bf16.mxu0 0
    %3219 = vmatpush1.bf16.msra.mxu0 %v3196
    %3220 = vmatprep.subr.bf16.mxu0 0
    %3221 = vmatpush1.bf16.msra.mxu0 %v3197
    %3222 = vmatprep.subr.bf16.mxu0 0
    %3223 = vmatpush1.bf16.msra.mxu0 0
    %3224 = vmatprep.subr.bf16.mxu0 0
    %3225 = vmatpush1.bf16.msra.mxu0 0
    %3226 = vmatprep.subr.bf16.mxu0 0
    %3227 = vmatpush1.bf16.msra.mxu0 0
    %3228 = vmatprep.subr.bf16.mxu0 0
    %3229 = vmatpush1.bf16.msra.mxu0 0
    %3230 = vmatprep.subr.bf16.mxu0 0
    %3231 = vmatpush1.bf16.msra.mxu0 0
    %3232 = vmatprep.subr.bf16.mxu0 0
    %3233 = vmatpush1.bf16.msra.mxu0 0
    %3234 = vmatprep.subr.bf16.mxu0 0
    %3235 = vmatpush1.bf16.msra.mxu0 0
    %3236 = vmatprep.subr.bf16.mxu0 0
    %3237 = vmatpush1.bf16.msra.mxu0 0
    %3238 = vmatprep.mubr.bf16.mxu0 0
    %3239 = vmatmul.mubr.bf16.gmra.mrb[0].mxu0 %v3131
    %v3240 = vpop.f32.mrb[0].mxu0
    %v3241 = vadd.f32 %v3156, %v3240
    %v3242 = vpop.f32.mrb[0].mxu0
    %v3243 = vpop.f32.mrb[0].mxu0
    %v3244 = vadd.f32 %v3156, %v3243
    %v3245 = vpop.f32.mrb[0].mxu0
    %3246 = vmatprep.mubr.bf16.mxu0 0
    %3247 = vmatmul.mubr.bf16.gmra.mrb[0].mxu0 %v3132
    %v3248 = vpop.f32.mrb[0].mxu0
    %v3249 = vadd.f32 %v3156, %v3248
    %v3250 = vpop.f32.mrb[0].mxu0
    %v3251 = vpop.f32.mrb[0].mxu0
    %v3252 = vadd.f32 %v3156, %v3251
    %v3253 = vpop.f32.mrb[0].mxu0
    %3254 = vmatprep.mubr.bf16.mxu0 0
    %3255 = vmatmul.mubr.bf16.gmra.mrb[0].mxu0 %v3133
    %v3256 = vpop.f32.mrb[0].mxu0
    %v3257 = vadd.f32 %v3156, %v3256
    %v3258 = vpop.f32.mrb[0].mxu0
    %v3259 = vpop.f32.mrb[0].mxu0
    %v3260 = vadd.f32 %v3156, %v3259
    %v3261 = vpop.f32.mrb[0].mxu0
    %3262 = vmatprep.mubr.bf16.mxu0 0
    %3263 = vmatmul.mubr.bf16.gmra.mrb[0].mxu0 %v3134
    %v3264 = vpop.f32.mrb[0].mxu0
    %v3265 = vadd.f32 %v3156, %v3264
    %v3266 = vpop.f32.mrb[0].mxu0
    %v3267 = vpop.f32.mrb[0].mxu0
    %v3268 = vadd.f32 %v3156, %v3267
    %v3269 = vpop.f32.mrb[0].mxu0
    %3270 = vdwg.mxu0
    %v3271 = vmax.f32 %v3241, 0.0
    %v3272 = vmax.f32 %v3244, 0.0
    %v3273 = vmax.f32 %v3249, 0.0
    %v3274 = vmax.f32 %v3252, 0.0
    %v3275 = vmax.f32 %v3257, 0.0
    %v3276 = vmax.f32 %v3260, 0.0
    %v3277 = vmax.f32 %v3265, 0.0
    %v3278 = vmax.f32 %v3268, 0.0
    %v3279 = vpack.c.bf16 %v3272, %v3271
    %v3280 = vpack.c.bf16 %v3274, %v3273
    %v3281 = vpack.c.bf16 %v3276, %v3275
    %v3282 = vpack.c.bf16 %v3278, %v3277
    %v3283 = vld [vmem:[#allocation19] sm:$0xf]
    %v3284 = vld [vmem:[#allocation19 + $0x4] sm:$0xf]
    %v3285 = vld [vmem:[#allocation19 + $0x8] sm:$0xf]
    %v3286 = vld [vmem:[#allocation19 + $0xc] sm:$0xf]
    %v3287 = vld [vmem:[#allocation19 + $0x10] sm:$0xf]
    %v3288 = vld [vmem:[#allocation19 + $0x14] sm:$0xf]
    %v3289 = vld [vmem:[#allocation19 + $0x18] sm:$0xf]
    %v3290 = vld [vmem:[#allocation19 + $0x1c] sm:$0xf]
    %v3291 = vld [vmem:[#allocation19 + $0x20] sm:$0xf]
    %v3292 = vld [vmem:[#allocation19 + $0x24] sm:$0xf]
    %v3293 = vld [vmem:[#allocation19 + $0x28] sm:$0xf]
    %v3294 = vld [vmem:[#allocation19 + $0x2c] sm:$0xf]
    %v3295 = vld [vmem:[#allocation19 + $0x30] sm:$0xf]
    %v3296 = vld [vmem:[#allocation19 + $0x34] sm:$0xf]
    %v3297 = vld [vmem:[#allocation19 + $0x38] sm:$0xf]
    %v3298 = vld [vmem:[#allocation19 + $0x3c] sm:$0xf]
    %v3299 = vld [vmem:[%s11] sm:$0x1]
    %v3301 = vlaneseq
    %v3302 = vshrl.u32 %v3301, 7
    %v3303 = vsub.s32 0, %v3302
    %v3304 = vrot.slane %v3299, %v3303
    %v3322 = vunpack.c.l.b16 %v3283
    %v3323 = vunpack.c.l.b16 %v3284
    %v3324 = vunpack.c.l.b16 %v3285
    %v3325 = vunpack.c.l.b16 %v3286
    %v3326 = vunpack.c.l.b16 %v3287
    %v3327 = vunpack.c.l.b16 %v3288
    %v3328 = vunpack.c.l.b16 %v3289
    %v3329 = vunpack.c.l.b16 %v3290
    %v3330 = vunpack.c.l.b16 %v3291
    %v3331 = vunpack.c.l.b16 %v3292
    %v3332 = vunpack.c.l.b16 %v3293
    %v3333 = vunpack.c.l.b16 %v3294
    %v3334 = vunpack.c.l.b16 %v3295
    %v3335 = vunpack.c.l.b16 %v3296
    %v3336 = vunpack.c.l.b16 %v3297
    %v3337 = vunpack.c.l.b16 %v3298
    %v3338 = vpack.c.b16 %v3323, %v3322
    %v3339 = vpack.c.b16 %v3325, %v3324
    %v3340 = vpack.c.b16 %v3327, %v3326
    %v3341 = vpack.c.b16 %v3329, %v3328
    %v3342 = vpack.c.b16 %v3331, %v3330
    %v3343 = vpack.c.b16 %v3333, %v3332
    %v3344 = vpack.c.b16 %v3335, %v3334
    %v3345 = vpack.c.b16 %v3337, %v3336
    %3354 = vmatprep.subr.bf16.mxu0 0
    %3355 = vmatpush1.bf16.msra.mxu0 %v3338
    %3356 = vmatprep.subr.bf16.mxu0 0
    %3357 = vmatpush1.bf16.msra.mxu0 %v3339
    %3358 = vmatprep.subr.bf16.mxu0 0
    %3359 = vmatpush1.bf16.msra.mxu0 %v3340
    %3360 = vmatprep.subr.bf16.mxu0 0
    %3361 = vmatpush1.bf16.msra.mxu0 %v3341
    %3362 = vmatprep.subr.bf16.mxu0 0
    %3363 = vmatpush1.bf16.msra.mxu0 %v3342
    %3364 = vmatprep.subr.bf16.mxu0 0
    %3365 = vmatpush1.bf16.msra.mxu0 %v3343
    %3366 = vmatprep.subr.bf16.mxu0 0
    %3367 = vmatpush1.bf16.msra.mxu0 %v3344
    %3368 = vmatprep.subr.bf16.mxu0 0
    %3369 = vmatpush1.bf16.msra.mxu0 %v3345
    %3370 = vmatprep.subr.bf16.mxu0 0
    %3371 = vmatpush1.bf16.msra.mxu0 0
    %3372 = vmatprep.subr.bf16.mxu0 0
    %3373 = vmatpush1.bf16.msra.mxu0 0
    %3374 = vmatprep.subr.bf16.mxu0 0
    %3375 = vmatpush1.bf16.msra.mxu0 0
    %3376 = vmatprep.subr.bf16.mxu0 0
    %3377 = vmatpush1.bf16.msra.mxu0 0
    %3378 = vmatprep.subr.bf16.mxu0 0
    %3379 = vmatpush1.bf16.msra.mxu0 0
    %3380 = vmatprep.subr.bf16.mxu0 0
    %3381 = vmatpush1.bf16.msra.mxu0 0
    %3382 = vmatprep.subr.bf16.mxu0 0
    %3383 = vmatpush1.bf16.msra.mxu0 0
    %3384 = vmatprep.subr.bf16.mxu0 0
    %3385 = vmatpush1.bf16.msra.mxu0 0
    %3386 = vmatprep.mubr.bf16.mxu0 0
    %3387 = vmatmul.mubr.bf16.gmra.mrb[0].mxu0 %v3279
    %v3388 = vpop.f32.mrb[0].mxu0
    %v3389 = vadd.f32 %v3304, %v3388
    %v3390 = vpop.f32.mrb[0].mxu0
    %v3391 = vpop.f32.mrb[0].mxu0
    %v3392 = vadd.f32 %v3304, %v3391
    %v3393 = vpop.f32.mrb[0].mxu0
    %3394 = vmatprep.mubr.bf16.mxu0 0
    %3395 = vmatmul.mubr.bf16.gmra.mrb[0].mxu0 %v3280
    %v3396 = vpop.f32.mrb[0].mxu0
    %v3397 = vadd.f32 %v3304, %v3396
    %v3398 = vpop.f32.mrb[0].mxu0
    %v3399 = vpop.f32.mrb[0].mxu0
    %v3400 = vadd.f32 %v3304, %v3399
    %v3401 = vpop.f32.mrb[0].mxu0
    %3402 = vmatprep.mubr.bf16.mxu0 0
    %3403 = vmatmul.mubr.bf16.gmra.mrb[0].mxu0 %v3281
    %v3404 = vpop.f32.mrb[0].mxu0
    %v3405 = vadd.f32 %v3304, %v3404
    %v3406 = vpop.f32.mrb[0].mxu0
    %v3407 = vpop.f32.mrb[0].mxu0
    %v3408 = vadd.f32 %v3304, %v3407
    %v3409 = vpop.f32.mrb[0].mxu0
    %3410 = vmatprep.mubr.bf16.mxu0 0
    %3411 = vmatmul.mubr.bf16.gmra.mrb[0].mxu0 %v3282
    %v3412 = vpop.f32.mrb[0].mxu0
    %v3413 = vadd.f32 %v3304, %v3412
    %v3414 = vpop.f32.mrb[0].mxu0
    %v3415 = vpop.f32.mrb[0].mxu0
    %v3416 = vadd.f32 %v3304, %v3415
    %v3417 = vpop.f32.mrb[0].mxu0
    %3418 = vdwg.mxu0
    %3419 = vst [vmem:[#allocation20] sm:$0xff] %v3389
    %3420 = vst [vmem:[#allocation20 + $0x8] sm:$0xff] %v3392
    %3421 = vst [vmem:[#allocation20 + $0x10] sm:$0xff] %v3397
    %3422 = vst [vmem:[#allocation20 + $0x18] sm:$0xff] %v3400
    %3423 = vst [vmem:[#allocation20 + $0x20] sm:$0xff] %v3405
    %3424 = vst [vmem:[#allocation20 + $0x28] sm:$0xff] %v3408
    %3425 = vst [vmem:[#allocation20 + $0x30] sm:$0xff] %v3413
    %3426 = vst [vmem:[#allocation20 + $0x38] sm:$0xff] %v3416
    // Predicated region
    $region82: #{tpu_custom_call.1} parent=1 // pred_check
      _
    $region83: #{tpu_custom_call.1} parent=1 // pred_check_branch
      %3428 = sbr.rel (0) target = $region85
    $region84: #{tpu_custom_call.1} parent=1 // pred_region
      %s3430 = ssub.s32 1024, 1024
      %3431 = vsyncadd [#allocation10], %s3430
      %s3432 = sshll.u32 [#allocation20], 4
      %s3433 = int_to_ptr.vmem [resolvable:$true] %s3432
      %3438 = dma.vmem_to_hbm [thread:$0]  %s3433, 1024, %s12, [#allocation10], 128, 128, 8
    $region85: #{tpu_custom_call.1} parent=1 // pred_fallthru
      _
    // Predicated region
    $region86: #{tpu_custom_call.1} parent=1 // pred_check
      _
    $region87: #{tpu_custom_call.1} parent=1 // pred_check_branch
      %3440 = sbr.rel (0) target = $region89
    $region88: #{tpu_custom_call.1} parent=1 // pred_region
      %3441 = dma.done [#allocation10], 1024
    $region89: #{tpu_custom_call.1} parent=1 // pred_fallthru
      _
    %3442 = vsyncpa [#allocation9], 1
    %3443 = vsyncpa [#allocation12], 1
    %3444 = vsyncpa [#allocation15], 1
    %3445 = vsyncpa [#allocation18], 1
    %3446 = vsyncpa [#allocation10], 1

</llo_original>
